<compile_context>
chip_gen: v7x
topology: tpu7x:2x2x1
jax: 0.10.0
libtpu: 0.0.40
codegen_flags: <defaults>
</compile_context>

<pallas_src>
import math

import jax
import jax.numpy as jnp
from jax.experimental import pallas as pl
from jax.experimental.pallas import tpu as pltpu


def _pick_batch_tile(B, N):
    """Largest divisor of B that keeps >=2 grid steps (v7x megacore) and a
    reasonable row count per matmul. Only tile batch when N is sublane-aligned
    so the in-kernel (Bt,N,C)<->(Bt*N,C) reshapes are layout-trivial."""
    if N % 8 != 0:
        return 1
    best = 1
    for bt in range(1, B + 1):
        if B % bt:
            continue
        if B >= 2 and (B // bt) < 2:
            continue
        if bt * N <= 1024:
            best = bt
    return best


def encoder1d_block(x, params, *, heads, matmul_dtype=jnp.bfloat16, batch_tile=None):
    """x: [B, N, C] float32. params: dict of weights (x @ W + b layout).
    Returns [B, N, C]."""
    B, N, C = x.shape
    H = heads
    assert C % H == 0
    hd = C // H
    mlp_dim = params["w1"].shape[1]
    scale = hd ** (-0.5)
    eps = 1e-5          # torch.nn.LayerNorm default
    mm = matmul_dtype

    Bt = _pick_batch_tile(B, N) if batch_tile is None else batch_tile
    assert B % Bt == 0
    M = Bt * N

    # ---------- wrapper-side weight prep (plain XLA, free outside the kernel) ----------
    wqkv = params["wqkv"]          # (C, 3C)
    bqkv = params["bqkv"]          # (1, 3C)

    def per_head_w(w):             # (C, C) -> (H, C, hd): slice heads on a leading dim
        return jnp.transpose(w.reshape(C, H, hd), (1, 0, 2))

    wq = per_head_w(wqkv[:, 0:C]).astype(mm)
    wk = per_head_w(wqkv[:, C:2 * C]).astype(mm)
    wv = per_head_w(wqkv[:, 2 * C:3 * C]).astype(mm)
    bq = bqkv[0, 0:C].reshape(H, 1, hd).astype(jnp.float32)
    bk = bqkv[0, C:2 * C].reshape(H, 1, hd).astype(jnp.float32)
    bv = bqkv[0, 2 * C:3 * C].reshape(H, 1, hd).astype(jnp.float32)
    wo = params["wo"].reshape(H, hd, C).astype(mm)      # head-major rows -> (H, hd, C)
    bo = params["bo"].astype(jnp.float32)               # (1, C)
    w1 = params["w1"].astype(mm)                        # (C, mlp)
    b1 = params["b1"].astype(jnp.float32)               # (1, mlp)
    w2 = params["w2"].astype(mm)                        # (mlp, C)
    b2 = params["b2"].astype(jnp.float32)               # (1, C)
    ln1g = params["ln1_g"].astype(jnp.float32)
    ln1b = params["ln1_b"].astype(jnp.float32)
    ln2g = params["ln2_g"].astype(jnp.float32)
    ln2b = params["ln2_b"].astype(jnp.float32)

    def kernel(x_ref, ln1g_ref, ln1b_ref,
               wq_ref, wk_ref, wv_ref, bq_ref, bk_ref, bv_ref,
               wo_ref, bo_ref, ln2g_ref, ln2b_ref,
               w1_ref, b1_ref, w2_ref, b2_ref, o_ref):
        xb = x_ref[...].reshape(M, C).astype(jnp.float32)        # (M, C) = (Bt*N, C)

        def layernorm(v, g, b):
            mu = jnp.mean(v, axis=-1, keepdims=True)
            var = jnp.mean((v - mu) ** 2, axis=-1, keepdims=True)
            return (v - mu) * jax.lax.rsqrt(var + eps) * g + b

        # -------------------- attention branch --------------------
        xn = layernorm(xb, ln1g_ref[...], ln1b_ref[...])
        xn_mm = xn.astype(mm)                                     # bf16 operands, f32 accum

        acc = jnp.zeros((M, C), jnp.float32)
        for h in range(H):        # static unroll; only free leading-dim indexing of weights
            q = jnp.dot(xn_mm, wq_ref[h], preferred_element_type=jnp.float32) + bq_ref[h]
            k = jnp.dot(xn_mm, wk_ref[h], preferred_element_type=jnp.float32) + bk_ref[h]
            v = jnp.dot(xn_mm, wv_ref[h], preferred_element_type=jnp.float32) + bv_ref[h]

            q3 = (q * scale).astype(mm).reshape(Bt, N, hd)        # scale the small tensor
            k3 = k.astype(mm).reshape(Bt, N, hd)
            v3 = v.astype(mm).reshape(Bt, N, hd)

            s = jnp.einsum("bqd,bkd->bqk", q3, k3,
                           preferred_element_type=jnp.float32)    # (Bt, N, N)
            s = s - jnp.max(s, axis=-1, keepdims=True)
            p = jnp.exp(s)
            denom = jnp.sum(p, axis=-1, keepdims=True)            # (Bt, N, 1)
            o_h = jnp.einsum("bqk,bkd->bqd", p.astype(mm), v3,
                             preferred_element_type=jnp.float32)  # (Bt, N, hd)
            # normalize AFTER p@v (small tensor); approx reciprocal -> EUP slot
            o_h = o_h * pl.reciprocal(denom, approx=True)
            # fold the head concat into the output projection (accumulate per head)
            acc = acc + jnp.dot(o_h.reshape(M, hd).astype(mm), wo_ref[h],
                                preferred_element_type=jnp.float32)

        x1 = xb + acc + bo_ref[...]                               # residual 1, bias added once

        # -------------------- MLP branch --------------------
        yn = layernorm(x1, ln2g_ref[...], ln2b_ref[...]).astype(mm)
        h1 = jnp.dot(yn, w1_ref[...], preferred_element_type=jnp.float32) + b1_ref[...]
        cdf = 0.5 * (1.0 + jnp.tanh(math.sqrt(2.0 / math.pi)
                                    * (h1 + 0.044715 * h1 * h1 * h1)))
        g1 = (h1 * cdf).astype(mm)                                # GELU (tanh approx), f32 math
        y = jnp.dot(g1, w2_ref[...], preferred_element_type=jnp.float32) + b2_ref[...]

        o_ref[...] = (x1 + y).reshape(Bt, N, C).astype(o_ref.dtype)   # single store per block

    operands = (x, ln1g, ln1b, wq, wk, wv, bq, bk, bv, wo, bo,
                ln2g, ln2b, w1, b1, w2, b2)

    def const_spec(a):
        return pl.BlockSpec(a.shape, lambda b, _nd=a.ndim: (0,) * _nd)

    in_specs = [pl.BlockSpec((Bt, N, C), lambda b: (b, 0, 0))] + \
               [const_spec(a) for a in operands[1:]]
    out_specs = pl.BlockSpec((Bt, N, C), lambda b: (b, 0, 0))

    # Advisory cost estimate + a conservative explicit scoped-VMEM budget.
    flops = 2 * B * N * (4 * C * C + 2 * N * C + 2 * C * mlp_dim)
    transcendentals = B * H * N * N + B * N * mlp_dim             # exp + tanh
    bytes_accessed = int(2 * x.size * x.dtype.itemsize
                         + sum(int(a.size) * a.dtype.itemsize for a in operands[1:]))
    resident = bytes_accessed + 2 * M * C * 4
    vmem_limit = int(min(max(4 * resident, 32 * 1024 * 1024), 60 * 1024 * 1024))
    # TODO(synk): for production ViT sizes on v7x (64 MiB VMEM), tile w1/w2 over
    # mlp_dim (extra "arbitrary" grid axis + accumulator) or single-buffer the
    # constant-index weight specs instead of keeping all weights fully resident;
    # also pad C to a multiple of 128 for lane-dense stores at toy widths.

    grid_spec = pltpu.PrefetchScalarGridSpec(
        num_scalar_prefetch=0,
        grid=(B // Bt,),
        in_specs=in_specs,
        out_specs=out_specs,
    )

    return pl.pallas_call(
        kernel,
        out_shape=jax.ShapeDtypeStruct((B, N, C), x.dtype),
        grid_spec=grid_spec,
        compiler_params=pltpu.CompilerParams(
            dimension_semantics=("parallel",),
            vmem_limit_bytes=vmem_limit),
        cost_estimate=pl.CostEstimate(flops=flops,
                                      transcendentals=transcendentals,
                                      bytes_accessed=bytes_accessed),
    )(*operands)


def reference_block(x, p, *, heads):
    """Pure-JAX reference mirroring the PyTorch forward (eval mode)."""
    B, N, C = x.shape
    hd = C // heads
    eps = 1e-5

    def ln(v, g, b):
        mu = jnp.mean(v, axis=-1, keepdims=True)
        var = jnp.mean((v - mu) ** 2, axis=-1, keepdims=True)
        return (v - mu) / jnp.sqrt(var + eps) * g[0] + b[0]

    xn = ln(x, p["ln1_g"], p["ln1_b"])
    qkv = xn @ p["wqkv"] + p["bqkv"][0]
    qkv = qkv.reshape(B, N, 3, heads, hd).transpose(2, 0, 3, 1, 4)
    q, k, v = qkv[0], qkv[1], qkv[2]
    attn = (q @ jnp.swapaxes(k, -2, -1)) * (hd ** -0.5)
    attn = jax.nn.softmax(attn, axis=-1)
    att = (attn @ v).transpose(0, 2, 1, 3).reshape(B, N, C)
    att = att @ p["wo"] + p["bo"][0]
    x1 = x + att
    yn = ln(x1, p["ln2_g"], p["ln2_b"])
    h1 = yn @ p["w1"] + p["b1"][0]
    cdf = 0.5 * (1.0 + jnp.tanh(math.sqrt(2.0 / math.pi) * (h1 + 0.044715 * h1 ** 3)))
    y = (h1 * cdf) @ p["w2"] + p["b2"][0]
    return x1 + y


if __name__ == "__main__":
    B, N, C = 4, 8, 32
    heads = 4
    mlp_dim = 64

    key = jax.random.PRNGKey(0)
    keys = jax.random.split(key, 10)

    s = 0.05
    params = {
        "ln1_g": jnp.ones((1, C), jnp.float32),
        "ln1_b": jnp.zeros((1, C), jnp.float32),
        "wqkv": s * jax.random.normal(keys[0], (C, 3 * C), jnp.float32),
        "bqkv": s * jax.random.normal(keys[1], (1, 3 * C), jnp.float32),
        "wo":   s * jax.random.normal(keys[2], (C, C), jnp.float32),
        "bo":   s * jax.random.normal(keys[3], (1, C), jnp.float32),
        "ln2_g": jnp.ones((1, C), jnp.float32),
        "ln2_b": jnp.zeros((1, C), jnp.float32),
        "w1":   s * jax.random.normal(keys[4], (C, mlp_dim), jnp.float32),
        "b1":   s * jax.random.normal(keys[5], (1, mlp_dim), jnp.float32),
        "w2":   s * jax.random.normal(keys[6], (mlp_dim, C), jnp.float32),
        "b2":   s * jax.random.normal(keys[7], (1, C), jnp.float32),
    }

    x = jax.random.normal(keys[8], (B, N, C), jnp.float32)

    ref = reference_block(x, params, heads=heads)

    # Strict numerical check with f32 matmul operands.
    out_f32 = jax.block_until_ready(
        encoder1d_block(x, params, heads=heads, matmul_dtype=jnp.float32))
    assert out_f32.shape == (B, N, C)
    err32 = float(jnp.max(jnp.abs(out_f32 - ref)))
    assert jnp.allclose(out_f32, ref, atol=1e-3, rtol=1e-3), err32

    # Performance path: bf16 matmul operands, f32 accumulation.
    out_bf16 = jax.block_until_ready(
        encoder1d_block(x, params, heads=heads, matmul_dtype=jnp.bfloat16))
    errbf = float(jnp.max(jnp.abs(out_bf16 - ref)))
    assert jnp.allclose(out_bf16, ref, atol=3e-2, rtol=3e-2), errbf

    print("KERNEL_OK")
</pallas_src>

<mosaic_0001>
module attributes {stable_mosaic.version = 11 : i64} {
  func.func @kernel(%arg0: i32, %arg1: memref<2x8x32xf32, #tpu.memory_space<vmem>>, %arg2: memref<1x32xf32, #tpu.memory_space<vmem>>, %arg3: memref<1x32xf32, #tpu.memory_space<vmem>>, %arg4: memref<4x32x8xf32, #tpu.memory_space<vmem>>, %arg5: memref<4x32x8xf32, #tpu.memory_space<vmem>>, %arg6: memref<4x32x8xf32, #tpu.memory_space<vmem>>, %arg7: memref<4x1x8xf32, #tpu.memory_space<vmem>>, %arg8: memref<4x1x8xf32, #tpu.memory_space<vmem>>, %arg9: memref<4x1x8xf32, #tpu.memory_space<vmem>>, %arg10: memref<4x8x32xf32, #tpu.memory_space<vmem>>, %arg11: memref<1x32xf32, #tpu.memory_space<vmem>>, %arg12: memref<1x32xf32, #tpu.memory_space<vmem>>, %arg13: memref<1x32xf32, #tpu.memory_space<vmem>>, %arg14: memref<32x64xf32, #tpu.memory_space<vmem>>, %arg15: memref<1x64xf32, #tpu.memory_space<vmem>>, %arg16: memref<64x32xf32, #tpu.memory_space<vmem>>, %arg17: memref<1x32xf32, #tpu.memory_space<vmem>>, %arg18: memref<2x8x32xf32, #tpu.memory_space<vmem>>) attributes {dimension_semantics = [#tpu.dimension_semantics<parallel>], iteration_bounds = array<i64: 2>, scalar_prefetch = 0 : i64, scratch_operands = 0 : i64, tpu.core_type = #tpu.core_type<tc>, window_params = [{transform_indices = @transform_0, window_bounds = array<i64: 2, 8, 32>}, {pipeline_mode = #tpu.pipeline_mode<synchronous>, transform_indices = @transform_1, window_bounds = array<i64: 1, 32>}, {pipeline_mode = #tpu.pipeline_mode<synchronous>, transform_indices = @transform_2, window_bounds = array<i64: 1, 32>}, {pipeline_mode = #tpu.pipeline_mode<synchronous>, transform_indices = @transform_3, window_bounds = array<i64: 4, 32, 8>}, {pipeline_mode = #tpu.pipeline_mode<synchronous>, transform_indices = @transform_4, window_bounds = array<i64: 4, 32, 8>}, {pipeline_mode = #tpu.pipeline_mode<synchronous>, transform_indices = @transform_5, window_bounds = array<i64: 4, 32, 8>}, {pipeline_mode = #tpu.pipeline_mode<synchronous>, transform_indices = @transform_6, window_bounds = array<i64: 4, 1, 8>}, {pipeline_mode = #tpu.pipeline_mode<synchronous>, transform_indices = @transform_7, window_bounds = array<i64: 4, 1, 8>}, {pipeline_mode = #tpu.pipeline_mode<synchronous>, transform_indices = @transform_8, window_bounds = array<i64: 4, 1, 8>}, {pipeline_mode = #tpu.pipeline_mode<synchronous>, transform_indices = @transform_9, window_bounds = array<i64: 4, 8, 32>}, {pipeline_mode = #tpu.pipeline_mode<synchronous>, transform_indices = @transform_10, window_bounds = array<i64: 1, 32>}, {pipeline_mode = #tpu.pipeline_mode<synchronous>, transform_indices = @transform_11, window_bounds = array<i64: 1, 32>}, {pipeline_mode = #tpu.pipeline_mode<synchronous>, transform_indices = @transform_12, window_bounds = array<i64: 1, 32>}, {pipeline_mode = #tpu.pipeline_mode<synchronous>, transform_indices = @transform_13, window_bounds = array<i64: 32, 64>}, {pipeline_mode = #tpu.pipeline_mode<synchronous>, transform_indices = @transform_14, window_bounds = array<i64: 1, 64>}, {pipeline_mode = #tpu.pipeline_mode<synchronous>, transform_indices = @transform_15, window_bounds = array<i64: 64, 32>}, {pipeline_mode = #tpu.pipeline_mode<synchronous>, transform_indices = @transform_16, window_bounds = array<i64: 1, 32>}, {transform_indices = @transform_17, window_bounds = array<i64: 2, 8, 32>}]} {
    %c0 = arith.constant 0 : index
    %c0_0 = arith.constant 0 : index
    %c0_1 = arith.constant 0 : index
    %0 = vector.load %arg1[%c0, %c0_0, %c0_1] : memref<2x8x32xf32, #tpu.memory_space<vmem>>, vector<2x8x32xf32>
    %1 = vector.shape_cast %0 : vector<2x8x32xf32> to vector<16x32xf32>
    %c0_2 = arith.constant 0 : index
    %c0_3 = arith.constant 0 : index
    %2 = vector.load %arg2[%c0_2, %c0_3] : memref<1x32xf32, #tpu.memory_space<vmem>>, vector<1x32xf32>
    %c0_4 = arith.constant 0 : index
    %c0_5 = arith.constant 0 : index
    %3 = vector.load %arg3[%c0_4, %c0_5] : memref<1x32xf32, #tpu.memory_space<vmem>>, vector<1x32xf32>
    %cst = arith.constant dense<0.000000e+00> : vector<16xf32>
    %4 = vector.multi_reduction <add>, %1, %cst [1] : vector<16x32xf32> to vector<16xf32>
    %5 = vector.shape_cast %4 : vector<16xf32> to vector<16x1xf32>
    %cst_6 = arith.constant 3.200000e+01 : f32
    %6 = vector.broadcast %cst_6 : f32 to vector<16x1xf32>
    %7 = arith.divf %5, %6 : vector<16x1xf32>
    %8 = vector.broadcast %7 : vector<16x1xf32> to vector<16x32xf32>
    %9 = arith.subf %1, %8 : vector<16x32xf32>
    %10 = arith.mulf %9, %9 : vector<16x32xf32>
    %cst_7 = arith.constant dense<0.000000e+00> : vector<16xf32>
    %11 = vector.multi_reduction <add>, %10, %cst_7 [1] : vector<16x32xf32> to vector<16xf32>
    %12 = vector.shape_cast %11 : vector<16xf32> to vector<16x1xf32>
    %cst_8 = arith.constant 3.200000e+01 : f32
    %13 = vector.broadcast %cst_8 : f32 to vector<16x1xf32>
    %14 = arith.divf %12, %13 : vector<16x1xf32>
    %15 = vector.broadcast %7 : vector<16x1xf32> to vector<16x32xf32>
    %16 = arith.subf %1, %15 : vector<16x32xf32>
    %cst_9 = arith.constant 9.99999974E-6 : f32
    %17 = vector.broadcast %cst_9 : f32 to vector<16x1xf32>
    %18 = arith.addf %14, %17 : vector<16x1xf32>
    %19 = math.rsqrt %18 : vector<16x1xf32>
    %20 = vector.broadcast %19 : vector<16x1xf32> to vector<16x32xf32>
    %21 = arith.mulf %16, %20 : vector<16x32xf32>
    %22 = vector.broadcast %2 : vector<1x32xf32> to vector<16x32xf32>
    %23 = arith.mulf %21, %22 : vector<16x32xf32>
    %24 = vector.broadcast %3 : vector<1x32xf32> to vector<16x32xf32>
    %25 = arith.addf %23, %24 : vector<16x32xf32>
    %cst_10 = arith.constant 0.000000e+00 : f32
    %26 = vector.broadcast %cst_10 : f32 to vector<16x32xf32>
    %c0_11 = arith.constant 0 : index
    %c0_12 = arith.constant 0 : index
    %c0_13 = arith.constant 0 : index
    %27 = vector.load %arg4[%c0_11, %c0_12, %c0_13] : memref<4x32x8xf32, #tpu.memory_space<vmem>>, vector<1x32x8xf32>
    %28 = vector.shape_cast %27 : vector<1x32x8xf32> to vector<32x8xf32>
    %cst_14 = arith.constant dense<0.000000e+00> : vector<16x8xf32>
    %29 = tpu.matmul %25, %28, %cst_14 {dimension_numbers = #tpu.dot_dimension_numbers<[1], [0], [0], [1], [0, 0, 1, 1], [], []>} : vector<16x32xf32>, vector<32x8xf32>, vector<16x8xf32> -> vector<16x8xf32>
    %c0_15 = arith.constant 0 : index
    %c0_16 = arith.constant 0 : index
    %c0_17 = arith.constant 0 : index
    %30 = vector.load %arg7[%c0_15, %c0_16, %c0_17] : memref<4x1x8xf32, #tpu.memory_space<vmem>>, vector<1x1x8xf32>
    %31 = vector.shape_cast %30 : vector<1x1x8xf32> to vector<1x8xf32>
    %32 = vector.broadcast %31 : vector<1x8xf32> to vector<16x8xf32>
    %33 = arith.addf %29, %32 : vector<16x8xf32>
    %c0_18 = arith.constant 0 : index
    %c0_19 = arith.constant 0 : index
    %c0_20 = arith.constant 0 : index
    %34 = vector.load %arg5[%c0_18, %c0_19, %c0_20] : memref<4x32x8xf32, #tpu.memory_space<vmem>>, vector<1x32x8xf32>
    %35 = vector.shape_cast %34 : vector<1x32x8xf32> to vector<32x8xf32>
    %cst_21 = arith.constant dense<0.000000e+00> : vector<16x8xf32>
    %36 = tpu.matmul %25, %35, %cst_21 {dimension_numbers = #tpu.dot_dimension_numbers<[1], [0], [0], [1], [0, 0, 1, 1], [], []>} : vector<16x32xf32>, vector<32x8xf32>, vector<16x8xf32> -> vector<16x8xf32>
    %c0_22 = arith.constant 0 : index
    %c0_23 = arith.constant 0 : index
    %c0_24 = arith.constant 0 : index
    %37 = vector.load %arg8[%c0_22, %c0_23, %c0_24] : memref<4x1x8xf32, #tpu.memory_space<vmem>>, vector<1x1x8xf32>
    %38 = vector.shape_cast %37 : vector<1x1x8xf32> to vector<1x8xf32>
    %39 = vector.broadcast %38 : vector<1x8xf32> to vector<16x8xf32>
    %40 = arith.addf %36, %39 : vector<16x8xf32>
    %c0_25 = arith.constant 0 : index
    %c0_26 = arith.constant 0 : index
    %c0_27 = arith.constant 0 : index
    %41 = vector.load %arg6[%c0_25, %c0_26, %c0_27] : memref<4x32x8xf32, #tpu.memory_space<vmem>>, vector<1x32x8xf32>
    %42 = vector.shape_cast %41 : vector<1x32x8xf32> to vector<32x8xf32>
    %cst_28 = arith.constant dense<0.000000e+00> : vector<16x8xf32>
    %43 = tpu.matmul %25, %42, %cst_28 {dimension_numbers = #tpu.dot_dimension_numbers<[1], [0], [0], [1], [0, 0, 1, 1], [], []>} : vector<16x32xf32>, vector<32x8xf32>, vector<16x8xf32> -> vector<16x8xf32>
    %c0_29 = arith.constant 0 : index
    %c0_30 = arith.constant 0 : index
    %c0_31 = arith.constant 0 : index
    %44 = vector.load %arg9[%c0_29, %c0_30, %c0_31] : memref<4x1x8xf32, #tpu.memory_space<vmem>>, vector<1x1x8xf32>
    %45 = vector.shape_cast %44 : vector<1x1x8xf32> to vector<1x8xf32>
    %46 = vector.broadcast %45 : vector<1x8xf32> to vector<16x8xf32>
    %47 = arith.addf %43, %46 : vector<16x8xf32>
    %cst_32 = arith.constant 0.353553385 : f32
    %48 = vector.broadcast %cst_32 : f32 to vector<16x8xf32>
    %49 = arith.mulf %33, %48 : vector<16x8xf32>
    %50 = vector.shape_cast %49 : vector<16x8xf32> to vector<2x8x8xf32>
    %51 = vector.shape_cast %40 : vector<16x8xf32> to vector<2x8x8xf32>
    %52 = vector.shape_cast %47 : vector<16x8xf32> to vector<2x8x8xf32>
    "tpu.trace_start"() <{level = 10 : i32, message = "bqd,bkd->bqk"}> : () -> ()
    %cst_33 = arith.constant dense<0.000000e+00> : vector<2x8x8xf32>
    %53 = tpu.matmul %50, %51, %cst_33 {dimension_numbers = #tpu.dot_dimension_numbers<[2], [2], [1], [1], [0, 0, 0, 1, 1, 1], [0], [0]>} : vector<2x8x8xf32>, vector<2x8x8xf32>, vector<2x8x8xf32> -> vector<2x8x8xf32>
    "tpu.trace_stop"() : () -> ()
    %cst_34 = arith.constant dense<0xFF800000> : vector<2x8xf32>
    %54 = vector.multi_reduction <maximumf>, %53, %cst_34 [2] : vector<2x8x8xf32> to vector<2x8xf32>
    %55 = vector.shape_cast %54 : vector<2x8xf32> to vector<2x8x1xf32>
    %56 = vector.broadcast %55 : vector<2x8x1xf32> to vector<2x8x8xf32>
    %57 = arith.subf %53, %56 : vector<2x8x8xf32>
    %58 = math.exp %57 : vector<2x8x8xf32>
    %cst_35 = arith.constant dense<0.000000e+00> : vector<2x8xf32>
    %59 = vector.multi_reduction <add>, %58, %cst_35 [2] : vector<2x8x8xf32> to vector<2x8xf32>
    %60 = vector.shape_cast %59 : vector<2x8xf32> to vector<2x8x1xf32>
    "tpu.trace_start"() <{level = 10 : i32, message = "bqk,bkd->bqd"}> : () -> ()
    %cst_36 = arith.constant dense<0.000000e+00> : vector<2x8x8xf32>
    %61 = tpu.matmul %58, %52, %cst_36 {dimension_numbers = #tpu.dot_dimension_numbers<[2], [1], [1], [2], [0, 0, 0, 1, 1, 2], [0], [0]>} : vector<2x8x8xf32>, vector<2x8x8xf32>, vector<2x8x8xf32> -> vector<2x8x8xf32>
    "tpu.trace_stop"() : () -> ()
    %62 = tpu.reciprocal %60 {approx = true} : vector<2x8x1xf32> -> vector<2x8x1xf32>
    %63 = vector.broadcast %62 : vector<2x8x1xf32> to vector<2x8x8xf32>
    %64 = arith.mulf %61, %63 : vector<2x8x8xf32>
    %65 = vector.shape_cast %64 : vector<2x8x8xf32> to vector<16x8xf32>
    %c0_37 = arith.constant 0 : index
    %c0_38 = arith.constant 0 : index
    %c0_39 = arith.constant 0 : index
    %66 = vector.load %arg10[%c0_37, %c0_38, %c0_39] : memref<4x8x32xf32, #tpu.memory_space<vmem>>, vector<1x8x32xf32>
    %67 = vector.shape_cast %66 : vector<1x8x32xf32> to vector<8x32xf32>
    %cst_40 = arith.constant dense<0.000000e+00> : vector<16x32xf32>
    %68 = tpu.matmul %65, %67, %cst_40 {dimension_numbers = #tpu.dot_dimension_numbers<[1], [0], [0], [1], [0, 0, 1, 1], [], []>} : vector<16x8xf32>, vector<8x32xf32>, vector<16x32xf32> -> vector<16x32xf32>
    %69 = arith.addf %26, %68 : vector<16x32xf32>
    %c1 = arith.constant 1 : index
    %c0_41 = arith.constant 0 : index
    %c0_42 = arith.constant 0 : index
    %70 = vector.load %arg4[%c1, %c0_41, %c0_42] : memref<4x32x8xf32, #tpu.memory_space<vmem>>, vector<1x32x8xf32>
    %71 = vector.shape_cast %70 : vector<1x32x8xf32> to vector<32x8xf32>
    %cst_43 = arith.constant dense<0.000000e+00> : vector<16x8xf32>
    %72 = tpu.matmul %25, %71, %cst_43 {dimension_numbers = #tpu.dot_dimension_numbers<[1], [0], [0], [1], [0, 0, 1, 1], [], []>} : vector<16x32xf32>, vector<32x8xf32>, vector<16x8xf32> -> vector<16x8xf32>
    %c1_44 = arith.constant 1 : index
    %c0_45 = arith.constant 0 : index
    %c0_46 = arith.constant 0 : index
    %73 = vector.load %arg7[%c1_44, %c0_45, %c0_46] : memref<4x1x8xf32, #tpu.memory_space<vmem>>, vector<1x1x8xf32>
    %74 = vector.shape_cast %73 : vector<1x1x8xf32> to vector<1x8xf32>
    %75 = vector.broadcast %74 : vector<1x8xf32> to vector<16x8xf32>
    %76 = arith.addf %72, %75 : vector<16x8xf32>
    %c1_47 = arith.constant 1 : index
    %c0_48 = arith.constant 0 : index
    %c0_49 = arith.constant 0 : index
    %77 = vector.load %arg5[%c1_47, %c0_48, %c0_49] : memref<4x32x8xf32, #tpu.memory_space<vmem>>, vector<1x32x8xf32>
    %78 = vector.shape_cast %77 : vector<1x32x8xf32> to vector<32x8xf32>
    %cst_50 = arith.constant dense<0.000000e+00> : vector<16x8xf32>
    %79 = tpu.matmul %25, %78, %cst_50 {dimension_numbers = #tpu.dot_dimension_numbers<[1], [0], [0], [1], [0, 0, 1, 1], [], []>} : vector<16x32xf32>, vector<32x8xf32>, vector<16x8xf32> -> vector<16x8xf32>
    %c1_51 = arith.constant 1 : index
    %c0_52 = arith.constant 0 : index
    %c0_53 = arith.constant 0 : index
    %80 = vector.load %arg8[%c1_51, %c0_52, %c0_53] : memref<4x1x8xf32, #tpu.memory_space<vmem>>, vector<1x1x8xf32>
    %81 = vector.shape_cast %80 : vector<1x1x8xf32> to vector<1x8xf32>
    %82 = vector.broadcast %81 : vector<1x8xf32> to vector<16x8xf32>
    %83 = arith.addf %79, %82 : vector<16x8xf32>
    %c1_54 = arith.constant 1 : index
    %c0_55 = arith.constant 0 : index
    %c0_56 = arith.constant 0 : index
    %84 = vector.load %arg6[%c1_54, %c0_55, %c0_56] : memref<4x32x8xf32, #tpu.memory_space<vmem>>, vector<1x32x8xf32>
    %85 = vector.shape_cast %84 : vector<1x32x8xf32> to vector<32x8xf32>
    %cst_57 = arith.constant dense<0.000000e+00> : vector<16x8xf32>
    %86 = tpu.matmul %25, %85, %cst_57 {dimension_numbers = #tpu.dot_dimension_numbers<[1], [0], [0], [1], [0, 0, 1, 1], [], []>} : vector<16x32xf32>, vector<32x8xf32>, vector<16x8xf32> -> vector<16x8xf32>
    %c1_58 = arith.constant 1 : index
    %c0_59 = arith.constant 0 : index
    %c0_60 = arith.constant 0 : index
    %87 = vector.load %arg9[%c1_58, %c0_59, %c0_60] : memref<4x1x8xf32, #tpu.memory_space<vmem>>, vector<1x1x8xf32>
    %88 = vector.shape_cast %87 : vector<1x1x8xf32> to vector<1x8xf32>
    %89 = vector.broadcast %88 : vector<1x8xf32> to vector<16x8xf32>
    %90 = arith.addf %86, %89 : vector<16x8xf32>
    %cst_61 = arith.constant 0.353553385 : f32
    %91 = vector.broadcast %cst_61 : f32 to vector<16x8xf32>
    %92 = arith.mulf %76, %91 : vector<16x8xf32>
    %93 = vector.shape_cast %92 : vector<16x8xf32> to vector<2x8x8xf32>
    %94 = vector.shape_cast %83 : vector<16x8xf32> to vector<2x8x8xf32>
    %95 = vector.shape_cast %90 : vector<16x8xf32> to vector<2x8x8xf32>
    "tpu.trace_start"() <{level = 10 : i32, message = "bqd,bkd->bqk"}> : () -> ()
    %cst_62 = arith.constant dense<0.000000e+00> : vector<2x8x8xf32>
    %96 = tpu.matmul %93, %94, %cst_62 {dimension_numbers = #tpu.dot_dimension_numbers<[2], [2], [1], [1], [0, 0, 0, 1, 1, 1], [0], [0]>} : vector<2x8x8xf32>, vector<2x8x8xf32>, vector<2x8x8xf32> -> vector<2x8x8xf32>
    "tpu.trace_stop"() : () -> ()
    %cst_63 = arith.constant dense<0xFF800000> : vector<2x8xf32>
    %97 = vector.multi_reduction <maximumf>, %96, %cst_63 [2] : vector<2x8x8xf32> to vector<2x8xf32>
    %98 = vector.shape_cast %97 : vector<2x8xf32> to vector<2x8x1xf32>
    %99 = vector.broadcast %98 : vector<2x8x1xf32> to vector<2x8x8xf32>
    %100 = arith.subf %96, %99 : vector<2x8x8xf32>
    %101 = math.exp %100 : vector<2x8x8xf32>
    %cst_64 = arith.constant dense<0.000000e+00> : vector<2x8xf32>
    %102 = vector.multi_reduction <add>, %101, %cst_64 [2] : vector<2x8x8xf32> to vector<2x8xf32>
    %103 = vector.shape_cast %102 : vector<2x8xf32> to vector<2x8x1xf32>
    "tpu.trace_start"() <{level = 10 : i32, message = "bqk,bkd->bqd"}> : () -> ()
    %cst_65 = arith.constant dense<0.000000e+00> : vector<2x8x8xf32>
    %104 = tpu.matmul %101, %95, %cst_65 {dimension_numbers = #tpu.dot_dimension_numbers<[2], [1], [1], [2], [0, 0, 0, 1, 1, 2], [0], [0]>} : vector<2x8x8xf32>, vector<2x8x8xf32>, vector<2x8x8xf32> -> vector<2x8x8xf32>
    "tpu.trace_stop"() : () -> ()
    %105 = tpu.reciprocal %103 {approx = true} : vector<2x8x1xf32> -> vector<2x8x1xf32>
    %106 = vector.broadcast %105 : vector<2x8x1xf32> to vector<2x8x8xf32>
    %107 = arith.mulf %104, %106 : vector<2x8x8xf32>
    %108 = vector.shape_cast %107 : vector<2x8x8xf32> to vector<16x8xf32>
    %c1_66 = arith.constant 1 : index
    %c0_67 = arith.constant 0 : index
    %c0_68 = arith.constant 0 : index
    %109 = vector.load %arg10[%c1_66, %c0_67, %c0_68] : memref<4x8x32xf32, #tpu.memory_space<vmem>>, vector<1x8x32xf32>
    %110 = vector.shape_cast %109 : vector<1x8x32xf32> to vector<8x32xf32>
    %cst_69 = arith.constant dense<0.000000e+00> : vector<16x32xf32>
    %111 = tpu.matmul %108, %110, %cst_69 {dimension_numbers = #tpu.dot_dimension_numbers<[1], [0], [0], [1], [0, 0, 1, 1], [], []>} : vector<16x8xf32>, vector<8x32xf32>, vector<16x32xf32> -> vector<16x32xf32>
    %112 = arith.addf %69, %111 : vector<16x32xf32>
    %c2 = arith.constant 2 : index
    %c0_70 = arith.constant 0 : index
    %c0_71 = arith.constant 0 : index
    %113 = vector.load %arg4[%c2, %c0_70, %c0_71] : memref<4x32x8xf32, #tpu.memory_space<vmem>>, vector<1x32x8xf32>
    %114 = vector.shape_cast %113 : vector<1x32x8xf32> to vector<32x8xf32>
    %cst_72 = arith.constant dense<0.000000e+00> : vector<16x8xf32>
    %115 = tpu.matmul %25, %114, %cst_72 {dimension_numbers = #tpu.dot_dimension_numbers<[1], [0], [0], [1], [0, 0, 1, 1], [], []>} : vector<16x32xf32>, vector<32x8xf32>, vector<16x8xf32> -> vector<16x8xf32>
    %c2_73 = arith.constant 2 : index
    %c0_74 = arith.constant 0 : index
    %c0_75 = arith.constant 0 : index
    %116 = vector.load %arg7[%c2_73, %c0_74, %c0_75] : memref<4x1x8xf32, #tpu.memory_space<vmem>>, vector<1x1x8xf32>
    %117 = vector.shape_cast %116 : vector<1x1x8xf32> to vector<1x8xf32>
    %118 = vector.broadcast %117 : vector<1x8xf32> to vector<16x8xf32>
    %119 = arith.addf %115, %118 : vector<16x8xf32>
    %c2_76 = arith.constant 2 : index
    %c0_77 = arith.constant 0 : index
    %c0_78 = arith.constant 0 : index
    %120 = vector.load %arg5[%c2_76, %c0_77, %c0_78] : memref<4x32x8xf32, #tpu.memory_space<vmem>>, vector<1x32x8xf32>
    %121 = vector.shape_cast %120 : vector<1x32x8xf32> to vector<32x8xf32>
    %cst_79 = arith.constant dense<0.000000e+00> : vector<16x8xf32>
    %122 = tpu.matmul %25, %121, %cst_79 {dimension_numbers = #tpu.dot_dimension_numbers<[1], [0], [0], [1], [0, 0, 1, 1], [], []>} : vector<16x32xf32>, vector<32x8xf32>, vector<16x8xf32> -> vector<16x8xf32>
    %c2_80 = arith.constant 2 : index
    %c0_81 = arith.constant 0 : index
    %c0_82 = arith.constant 0 : index
    %123 = vector.load %arg8[%c2_80, %c0_81, %c0_82] : memref<4x1x8xf32, #tpu.memory_space<vmem>>, vector<1x1x8xf32>
    %124 = vector.shape_cast %123 : vector<1x1x8xf32> to vector<1x8xf32>
    %125 = vector.broadcast %124 : vector<1x8xf32> to vector<16x8xf32>
    %126 = arith.addf %122, %125 : vector<16x8xf32>
    %c2_83 = arith.constant 2 : index
    %c0_84 = arith.constant 0 : index
    %c0_85 = arith.constant 0 : index
    %127 = vector.load %arg6[%c2_83, %c0_84, %c0_85] : memref<4x32x8xf32, #tpu.memory_space<vmem>>, vector<1x32x8xf32>
    %128 = vector.shape_cast %127 : vector<1x32x8xf32> to vector<32x8xf32>
    %cst_86 = arith.constant dense<0.000000e+00> : vector<16x8xf32>
    %129 = tpu.matmul %25, %128, %cst_86 {dimension_numbers = #tpu.dot_dimension_numbers<[1], [0], [0], [1], [0, 0, 1, 1], [], []>} : vector<16x32xf32>, vector<32x8xf32>, vector<16x8xf32> -> vector<16x8xf32>
    %c2_87 = arith.constant 2 : index
    %c0_88 = arith.constant 0 : index
    %c0_89 = arith.constant 0 : index
    %130 = vector.load %arg9[%c2_87, %c0_88, %c0_89] : memref<4x1x8xf32, #tpu.memory_space<vmem>>, vector<1x1x8xf32>
    %131 = vector.shape_cast %130 : vector<1x1x8xf32> to vector<1x8xf32>
    %132 = vector.broadcast %131 : vector<1x8xf32> to vector<16x8xf32>
    %133 = arith.addf %129, %132 : vector<16x8xf32>
    %cst_90 = arith.constant 0.353553385 : f32
    %134 = vector.broadcast %cst_90 : f32 to vector<16x8xf32>
    %135 = arith.mulf %119, %134 : vector<16x8xf32>
    %136 = vector.shape_cast %135 : vector<16x8xf32> to vector<2x8x8xf32>
    %137 = vector.shape_cast %126 : vector<16x8xf32> to vector<2x8x8xf32>
    %138 = vector.shape_cast %133 : vector<16x8xf32> to vector<2x8x8xf32>
    "tpu.trace_start"() <{level = 10 : i32, message = "bqd,bkd->bqk"}> : () -> ()
    %cst_91 = arith.constant dense<0.000000e+00> : vector<2x8x8xf32>
    %139 = tpu.matmul %136, %137, %cst_91 {dimension_numbers = #tpu.dot_dimension_numbers<[2], [2], [1], [1], [0, 0, 0, 1, 1, 1], [0], [0]>} : vector<2x8x8xf32>, vector<2x8x8xf32>, vector<2x8x8xf32> -> vector<2x8x8xf32>
    "tpu.trace_stop"() : () -> ()
    %cst_92 = arith.constant dense<0xFF800000> : vector<2x8xf32>
    %140 = vector.multi_reduction <maximumf>, %139, %cst_92 [2] : vector<2x8x8xf32> to vector<2x8xf32>
    %141 = vector.shape_cast %140 : vector<2x8xf32> to vector<2x8x1xf32>
    %142 = vector.broadcast %141 : vector<2x8x1xf32> to vector<2x8x8xf32>
    %143 = arith.subf %139, %142 : vector<2x8x8xf32>
    %144 = math.exp %143 : vector<2x8x8xf32>
    %cst_93 = arith.constant dense<0.000000e+00> : vector<2x8xf32>
    %145 = vector.multi_reduction <add>, %144, %cst_93 [2] : vector<2x8x8xf32> to vector<2x8xf32>
    %146 = vector.shape_cast %145 : vector<2x8xf32> to vector<2x8x1xf32>
    "tpu.trace_start"() <{level = 10 : i32, message = "bqk,bkd->bqd"}> : () -> ()
    %cst_94 = arith.constant dense<0.000000e+00> : vector<2x8x8xf32>
    %147 = tpu.matmul %144, %138, %cst_94 {dimension_numbers = #tpu.dot_dimension_numbers<[2], [1], [1], [2], [0, 0, 0, 1, 1, 2], [0], [0]>} : vector<2x8x8xf32>, vector<2x8x8xf32>, vector<2x8x8xf32> -> vector<2x8x8xf32>
    "tpu.trace_stop"() : () -> ()
    %148 = tpu.reciprocal %146 {approx = true} : vector<2x8x1xf32> -> vector<2x8x1xf32>
    %149 = vector.broadcast %148 : vector<2x8x1xf32> to vector<2x8x8xf32>
    %150 = arith.mulf %147, %149 : vector<2x8x8xf32>
    %151 = vector.shape_cast %150 : vector<2x8x8xf32> to vector<16x8xf32>
    %c2_95 = arith.constant 2 : index
    %c0_96 = arith.constant 0 : index
    %c0_97 = arith.constant 0 : index
    %152 = vector.load %arg10[%c2_95, %c0_96, %c0_97] : memref<4x8x32xf32, #tpu.memory_space<vmem>>, vector<1x8x32xf32>
    %153 = vector.shape_cast %152 : vector<1x8x32xf32> to vector<8x32xf32>
    %cst_98 = arith.constant dense<0.000000e+00> : vector<16x32xf32>
    %154 = tpu.matmul %151, %153, %cst_98 {dimension_numbers = #tpu.dot_dimension_numbers<[1], [0], [0], [1], [0, 0, 1, 1], [], []>} : vector<16x8xf32>, vector<8x32xf32>, vector<16x32xf32> -> vector<16x32xf32>
    %155 = arith.addf %112, %154 : vector<16x32xf32>
    %c3 = arith.constant 3 : index
    %c0_99 = arith.constant 0 : index
    %c0_100 = arith.constant 0 : index
    %156 = vector.load %arg4[%c3, %c0_99, %c0_100] : memref<4x32x8xf32, #tpu.memory_space<vmem>>, vector<1x32x8xf32>
    %157 = vector.shape_cast %156 : vector<1x32x8xf32> to vector<32x8xf32>
    %cst_101 = arith.constant dense<0.000000e+00> : vector<16x8xf32>
    %158 = tpu.matmul %25, %157, %cst_101 {dimension_numbers = #tpu.dot_dimension_numbers<[1], [0], [0], [1], [0, 0, 1, 1], [], []>} : vector<16x32xf32>, vector<32x8xf32>, vector<16x8xf32> -> vector<16x8xf32>
    %c3_102 = arith.constant 3 : index
    %c0_103 = arith.constant 0 : index
    %c0_104 = arith.constant 0 : index
    %159 = vector.load %arg7[%c3_102, %c0_103, %c0_104] : memref<4x1x8xf32, #tpu.memory_space<vmem>>, vector<1x1x8xf32>
    %160 = vector.shape_cast %159 : vector<1x1x8xf32> to vector<1x8xf32>
    %161 = vector.broadcast %160 : vector<1x8xf32> to vector<16x8xf32>
    %162 = arith.addf %158, %161 : vector<16x8xf32>
    %c3_105 = arith.constant 3 : index
    %c0_106 = arith.constant 0 : index
    %c0_107 = arith.constant 0 : index
    %163 = vector.load %arg5[%c3_105, %c0_106, %c0_107] : memref<4x32x8xf32, #tpu.memory_space<vmem>>, vector<1x32x8xf32>
    %164 = vector.shape_cast %163 : vector<1x32x8xf32> to vector<32x8xf32>
    %cst_108 = arith.constant dense<0.000000e+00> : vector<16x8xf32>
    %165 = tpu.matmul %25, %164, %cst_108 {dimension_numbers = #tpu.dot_dimension_numbers<[1], [0], [0], [1], [0, 0, 1, 1], [], []>} : vector<16x32xf32>, vector<32x8xf32>, vector<16x8xf32> -> vector<16x8xf32>
    %c3_109 = arith.constant 3 : index
    %c0_110 = arith.constant 0 : index
    %c0_111 = arith.constant 0 : index
    %166 = vector.load %arg8[%c3_109, %c0_110, %c0_111] : memref<4x1x8xf32, #tpu.memory_space<vmem>>, vector<1x1x8xf32>
    %167 = vector.shape_cast %166 : vector<1x1x8xf32> to vector<1x8xf32>
    %168 = vector.broadcast %167 : vector<1x8xf32> to vector<16x8xf32>
    %169 = arith.addf %165, %168 : vector<16x8xf32>
    %c3_112 = arith.constant 3 : index
    %c0_113 = arith.constant 0 : index
    %c0_114 = arith.constant 0 : index
    %170 = vector.load %arg6[%c3_112, %c0_113, %c0_114] : memref<4x32x8xf32, #tpu.memory_space<vmem>>, vector<1x32x8xf32>
    %171 = vector.shape_cast %170 : vector<1x32x8xf32> to vector<32x8xf32>
    %cst_115 = arith.constant dense<0.000000e+00> : vector<16x8xf32>
    %172 = tpu.matmul %25, %171, %cst_115 {dimension_numbers = #tpu.dot_dimension_numbers<[1], [0], [0], [1], [0, 0, 1, 1], [], []>} : vector<16x32xf32>, vector<32x8xf32>, vector<16x8xf32> -> vector<16x8xf32>
    %c3_116 = arith.constant 3 : index
    %c0_117 = arith.constant 0 : index
    %c0_118 = arith.constant 0 : index
    %173 = vector.load %arg9[%c3_116, %c0_117, %c0_118] : memref<4x1x8xf32, #tpu.memory_space<vmem>>, vector<1x1x8xf32>
    %174 = vector.shape_cast %173 : vector<1x1x8xf32> to vector<1x8xf32>
    %175 = vector.broadcast %174 : vector<1x8xf32> to vector<16x8xf32>
    %176 = arith.addf %172, %175 : vector<16x8xf32>
    %cst_119 = arith.constant 0.353553385 : f32
    %177 = vector.broadcast %cst_119 : f32 to vector<16x8xf32>
    %178 = arith.mulf %162, %177 : vector<16x8xf32>
    %179 = vector.shape_cast %178 : vector<16x8xf32> to vector<2x8x8xf32>
    %180 = vector.shape_cast %169 : vector<16x8xf32> to vector<2x8x8xf32>
    %181 = vector.shape_cast %176 : vector<16x8xf32> to vector<2x8x8xf32>
    "tpu.trace_start"() <{level = 10 : i32, message = "bqd,bkd->bqk"}> : () -> ()
    %cst_120 = arith.constant dense<0.000000e+00> : vector<2x8x8xf32>
    %182 = tpu.matmul %179, %180, %cst_120 {dimension_numbers = #tpu.dot_dimension_numbers<[2], [2], [1], [1], [0, 0, 0, 1, 1, 1], [0], [0]>} : vector<2x8x8xf32>, vector<2x8x8xf32>, vector<2x8x8xf32> -> vector<2x8x8xf32>
    "tpu.trace_stop"() : () -> ()
    %cst_121 = arith.constant dense<0xFF800000> : vector<2x8xf32>
    %183 = vector.multi_reduction <maximumf>, %182, %cst_121 [2] : vector<2x8x8xf32> to vector<2x8xf32>
    %184 = vector.shape_cast %183 : vector<2x8xf32> to vector<2x8x1xf32>
    %185 = vector.broadcast %184 : vector<2x8x1xf32> to vector<2x8x8xf32>
    %186 = arith.subf %182, %185 : vector<2x8x8xf32>
    %187 = math.exp %186 : vector<2x8x8xf32>
    %cst_122 = arith.constant dense<0.000000e+00> : vector<2x8xf32>
    %188 = vector.multi_reduction <add>, %187, %cst_122 [2] : vector<2x8x8xf32> to vector<2x8xf32>
    %189 = vector.shape_cast %188 : vector<2x8xf32> to vector<2x8x1xf32>
    "tpu.trace_start"() <{level = 10 : i32, message = "bqk,bkd->bqd"}> : () -> ()
    %cst_123 = arith.constant dense<0.000000e+00> : vector<2x8x8xf32>
    %190 = tpu.matmul %187, %181, %cst_123 {dimension_numbers = #tpu.dot_dimension_numbers<[2], [1], [1], [2], [0, 0, 0, 1, 1, 2], [0], [0]>} : vector<2x8x8xf32>, vector<2x8x8xf32>, vector<2x8x8xf32> -> vector<2x8x8xf32>
    "tpu.trace_stop"() : () -> ()
    %191 = tpu.reciprocal %189 {approx = true} : vector<2x8x1xf32> -> vector<2x8x1xf32>
    %192 = vector.broadcast %191 : vector<2x8x1xf32> to vector<2x8x8xf32>
    %193 = arith.mulf %190, %192 : vector<2x8x8xf32>
    %194 = vector.shape_cast %193 : vector<2x8x8xf32> to vector<16x8xf32>
    %c3_124 = arith.constant 3 : index
    %c0_125 = arith.constant 0 : index
    %c0_126 = arith.constant 0 : index
    %195 = vector.load %arg10[%c3_124, %c0_125, %c0_126] : memref<4x8x32xf32, #tpu.memory_space<vmem>>, vector<1x8x32xf32>
    %196 = vector.shape_cast %195 : vector<1x8x32xf32> to vector<8x32xf32>
    %cst_127 = arith.constant dense<0.000000e+00> : vector<16x32xf32>
    %197 = tpu.matmul %194, %196, %cst_127 {dimension_numbers = #tpu.dot_dimension_numbers<[1], [0], [0], [1], [0, 0, 1, 1], [], []>} : vector<16x8xf32>, vector<8x32xf32>, vector<16x32xf32> -> vector<16x32xf32>
    %198 = arith.addf %155, %197 : vector<16x32xf32>
    %199 = arith.addf %1, %198 : vector<16x32xf32>
    %c0_128 = arith.constant 0 : index
    %c0_129 = arith.constant 0 : index
    %200 = vector.load %arg11[%c0_128, %c0_129] : memref<1x32xf32, #tpu.memory_space<vmem>>, vector<1x32xf32>
    %201 = vector.broadcast %200 : vector<1x32xf32> to vector<16x32xf32>
    %202 = arith.addf %199, %201 : vector<16x32xf32>
    %c0_130 = arith.constant 0 : index
    %c0_131 = arith.constant 0 : index
    %203 = vector.load %arg12[%c0_130, %c0_131] : memref<1x32xf32, #tpu.memory_space<vmem>>, vector<1x32xf32>
    %c0_132 = arith.constant 0 : index
    %c0_133 = arith.constant 0 : index
    %204 = vector.load %arg13[%c0_132, %c0_133] : memref<1x32xf32, #tpu.memory_space<vmem>>, vector<1x32xf32>
    %cst_134 = arith.constant dense<0.000000e+00> : vector<16xf32>
    %205 = vector.multi_reduction <add>, %202, %cst_134 [1] : vector<16x32xf32> to vector<16xf32>
    %206 = vector.shape_cast %205 : vector<16xf32> to vector<16x1xf32>
    %cst_135 = arith.constant 3.200000e+01 : f32
    %207 = vector.broadcast %cst_135 : f32 to vector<16x1xf32>
    %208 = arith.divf %206, %207 : vector<16x1xf32>
    %209 = vector.broadcast %208 : vector<16x1xf32> to vector<16x32xf32>
    %210 = arith.subf %202, %209 : vector<16x32xf32>
    %211 = arith.mulf %210, %210 : vector<16x32xf32>
    %cst_136 = arith.constant dense<0.000000e+00> : vector<16xf32>
    %212 = vector.multi_reduction <add>, %211, %cst_136 [1] : vector<16x32xf32> to vector<16xf32>
    %213 = vector.shape_cast %212 : vector<16xf32> to vector<16x1xf32>
    %cst_137 = arith.constant 3.200000e+01 : f32
    %214 = vector.broadcast %cst_137 : f32 to vector<16x1xf32>
    %215 = arith.divf %213, %214 : vector<16x1xf32>
    %216 = vector.broadcast %208 : vector<16x1xf32> to vector<16x32xf32>
    %217 = arith.subf %202, %216 : vector<16x32xf32>
    %cst_138 = arith.constant 9.99999974E-6 : f32
    %218 = vector.broadcast %cst_138 : f32 to vector<16x1xf32>
    %219 = arith.addf %215, %218 : vector<16x1xf32>
    %220 = math.rsqrt %219 : vector<16x1xf32>
    %221 = vector.broadcast %220 : vector<16x1xf32> to vector<16x32xf32>
    %222 = arith.mulf %217, %221 : vector<16x32xf32>
    %223 = vector.broadcast %203 : vector<1x32xf32> to vector<16x32xf32>
    %224 = arith.mulf %222, %223 : vector<16x32xf32>
    %225 = vector.broadcast %204 : vector<1x32xf32> to vector<16x32xf32>
    %226 = arith.addf %224, %225 : vector<16x32xf32>
    %c0_139 = arith.constant 0 : index
    %c0_140 = arith.constant 0 : index
    %227 = vector.load %arg14[%c0_139, %c0_140] : memref<32x64xf32, #tpu.memory_space<vmem>>, vector<32x64xf32>
    %cst_141 = arith.constant dense<0.000000e+00> : vector<16x64xf32>
    %228 = tpu.matmul %226, %227, %cst_141 {dimension_numbers = #tpu.dot_dimension_numbers<[1], [0], [0], [1], [0, 0, 1, 1], [], []>} : vector<16x32xf32>, vector<32x64xf32>, vector<16x64xf32> -> vector<16x64xf32>
    %c0_142 = arith.constant 0 : index
    %c0_143 = arith.constant 0 : index
    %229 = vector.load %arg15[%c0_142, %c0_143] : memref<1x64xf32, #tpu.memory_space<vmem>>, vector<1x64xf32>
    %230 = vector.broadcast %229 : vector<1x64xf32> to vector<16x64xf32>
    %231 = arith.addf %228, %230 : vector<16x64xf32>
    %cst_144 = arith.constant 4.471500e-02 : f32
    %232 = vector.broadcast %cst_144 : f32 to vector<16x64xf32>
    %233 = arith.mulf %232, %231 : vector<16x64xf32>
    %234 = arith.mulf %233, %231 : vector<16x64xf32>
    %235 = arith.mulf %234, %231 : vector<16x64xf32>
    %236 = arith.addf %231, %235 : vector<16x64xf32>
    %cst_145 = arith.constant 0.797884583 : f32
    %237 = vector.broadcast %cst_145 : f32 to vector<16x64xf32>
    %238 = arith.mulf %237, %236 : vector<16x64xf32>
    %239 = math.tanh %238 : vector<16x64xf32>
    %cst_146 = arith.constant 1.000000e+00 : f32
    %240 = vector.broadcast %cst_146 : f32 to vector<16x64xf32>
    %241 = arith.addf %240, %239 : vector<16x64xf32>
    %cst_147 = arith.constant 5.000000e-01 : f32
    %242 = vector.broadcast %cst_147 : f32 to vector<16x64xf32>
    %243 = arith.mulf %242, %241 : vector<16x64xf32>
    %244 = arith.mulf %231, %243 : vector<16x64xf32>
    %c0_148 = arith.constant 0 : index
    %c0_149 = arith.constant 0 : index
    %245 = vector.load %arg16[%c0_148, %c0_149] : memref<64x32xf32, #tpu.memory_space<vmem>>, vector<64x32xf32>
    %cst_150 = arith.constant dense<0.000000e+00> : vector<16x32xf32>
    %246 = tpu.matmul %244, %245, %cst_150 {dimension_numbers = #tpu.dot_dimension_numbers<[1], [0], [0], [1], [0, 0, 1, 1], [], []>} : vector<16x64xf32>, vector<64x32xf32>, vector<16x32xf32> -> vector<16x32xf32>
    %c0_151 = arith.constant 0 : index
    %c0_152 = arith.constant 0 : index
    %247 = vector.load %arg17[%c0_151, %c0_152] : memref<1x32xf32, #tpu.memory_space<vmem>>, vector<1x32xf32>
    %248 = vector.broadcast %247 : vector<1x32xf32> to vector<16x32xf32>
    %249 = arith.addf %246, %248 : vector<16x32xf32>
    %250 = arith.addf %202, %249 : vector<16x32xf32>
    %251 = vector.shape_cast %250 : vector<16x32xf32> to vector<2x8x32xf32>
    %c0_153 = arith.constant 0 : index
    %c0_154 = arith.constant 0 : index
    %c0_155 = arith.constant 0 : index
    %252 = vector.load %arg18[%c0_153, %c0_154, %c0_155] : memref<2x8x32xf32, #tpu.memory_space<vmem>>, vector<2x8x32xf32>
    tpu.vector_store %arg18[%c0_153, %c0_154, %c0_155], %251 {strides = array<i32>} : memref<2x8x32xf32, #tpu.memory_space<vmem>>, vector<2x8x32xf32>,
    return
  }
  func.func @transform_0(%arg0: i32) -> (i32, i32, i32) {
    %c0_i32 = arith.constant 0 : i32
    %c0_i32_0 = arith.constant 0 : i32
    %c0_i32_1 = arith.constant 0 : i32
    return %arg0, %c0_i32, %c0_i32_0 : i32, i32, i32
  }
  func.func @transform_1(%arg0: i32) -> (i32, i32) {
    %c0_i32 = arith.constant 0 : i32
    %c0_i32_0 = arith.constant 0 : i32
    %c0_i32_1 = arith.constant 0 : i32
    return %c0_i32, %c0_i32_0 : i32, i32
  }
  func.func @transform_2(%arg0: i32) -> (i32, i32) {
    %c0_i32 = arith.constant 0 : i32
    %c0_i32_0 = arith.constant 0 : i32
    %c0_i32_1 = arith.constant 0 : i32
    return %c0_i32, %c0_i32_0 : i32, i32
  }
  func.func @transform_3(%arg0: i32) -> (i32, i32, i32) {
    %c0_i32 = arith.constant 0 : i32
    %c0_i32_0 = arith.constant 0 : i32
    %c0_i32_1 = arith.constant 0 : i32
    %c0_i32_2 = arith.constant 0 : i32
    return %c0_i32, %c0_i32_0, %c0_i32_1 : i32, i32, i32
  }
  func.func @transform_4(%arg0: i32) -> (i32, i32, i32) {
    %c0_i32 = arith.constant 0 : i32
    %c0_i32_0 = arith.constant 0 : i32
    %c0_i32_1 = arith.constant 0 : i32
    %c0_i32_2 = arith.constant 0 : i32
    return %c0_i32, %c0_i32_0, %c0_i32_1 : i32, i32, i32
  }
  func.func @transform_5(%arg0: i32) -> (i32, i32, i32) {
    %c0_i32 = arith.constant 0 : i32
    %c0_i32_0 = arith.constant 0 : i32
    %c0_i32_1 = arith.constant 0 : i32
    %c0_i32_2 = arith.constant 0 : i32
    return %c0_i32, %c0_i32_0, %c0_i32_1 : i32, i32, i32
  }
  func.func @transform_6(%arg0: i32) -> (i32, i32, i32) {
    %c0_i32 = arith.constant 0 : i32
    %c0_i32_0 = arith.constant 0 : i32
    %c0_i32_1 = arith.constant 0 : i32
    %c0_i32_2 = arith.constant 0 : i32
    return %c0_i32, %c0_i32_0, %c0_i32_1 : i32, i32, i32
  }
  func.func @transform_7(%arg0: i32) -> (i32, i32, i32) {
    %c0_i32 = arith.constant 0 : i32
    %c0_i32_0 = arith.constant 0 : i32
    %c0_i32_1 = arith.constant 0 : i32
    %c0_i32_2 = arith.constant 0 : i32
    return %c0_i32, %c0_i32_0, %c0_i32_1 : i32, i32, i32
  }
  func.func @transform_8(%arg0: i32) -> (i32, i32, i32) {
    %c0_i32 = arith.constant 0 : i32
    %c0_i32_0 = arith.constant 0 : i32
    %c0_i32_1 = arith.constant 0 : i32
    %c0_i32_2 = arith.constant 0 : i32
    return %c0_i32, %c0_i32_0, %c0_i32_1 : i32, i32, i32
  }
  func.func @transform_9(%arg0: i32) -> (i32, i32, i32) {
    %c0_i32 = arith.constant 0 : i32
    %c0_i32_0 = arith.constant 0 : i32
    %c0_i32_1 = arith.constant 0 : i32
    %c0_i32_2 = arith.constant 0 : i32
    return %c0_i32, %c0_i32_0, %c0_i32_1 : i32, i32, i32
  }
  func.func @transform_10(%arg0: i32) -> (i32, i32) {
    %c0_i32 = arith.constant 0 : i32
    %c0_i32_0 = arith.constant 0 : i32
    %c0_i32_1 = arith.constant 0 : i32
    return %c0_i32, %c0_i32_0 : i32, i32
  }
  func.func @transform_11(%arg0: i32) -> (i32, i32) {
    %c0_i32 = arith.constant 0 : i32
    %c0_i32_0 = arith.constant 0 : i32
    %c0_i32_1 = arith.constant 0 : i32
    return %c0_i32, %c0_i32_0 : i32, i32
  }
  func.func @transform_12(%arg0: i32) -> (i32, i32) {
    %c0_i32 = arith.constant 0 : i32
    %c0_i32_0 = arith.constant 0 : i32
    %c0_i32_1 = arith.constant 0 : i32
    return %c0_i32, %c0_i32_0 : i32, i32
  }
  func.func @transform_13(%arg0: i32) -> (i32, i32) {
    %c0_i32 = arith.constant 0 : i32
    %c0_i32_0 = arith.constant 0 : i32
    %c0_i32_1 = arith.constant 0 : i32
    return %c0_i32, %c0_i32_0 : i32, i32
  }
  func.func @transform_14(%arg0: i32) -> (i32, i32) {
    %c0_i32 = arith.constant 0 : i32
    %c0_i32_0 = arith.constant 0 : i32
    %c0_i32_1 = arith.constant 0 : i32
    return %c0_i32, %c0_i32_0 : i32, i32
  }
  func.func @transform_15(%arg0: i32) -> (i32, i32) {
    %c0_i32 = arith.constant 0 : i32
    %c0_i32_0 = arith.constant 0 : i32
    %c0_i32_1 = arith.constant 0 : i32
    return %c0_i32, %c0_i32_0 : i32, i32
  }
  func.func @transform_16(%arg0: i32) -> (i32, i32) {
    %c0_i32 = arith.constant 0 : i32
    %c0_i32_0 = arith.constant 0 : i32
    %c0_i32_1 = arith.constant 0 : i32
    return %c0_i32, %c0_i32_0 : i32, i32
  }
  func.func @transform_17(%arg0: i32) -> (i32, i32, i32) {
    %c0_i32 = arith.constant 0 : i32
    %c0_i32_0 = arith.constant 0 : i32
    %c0_i32_1 = arith.constant 0 : i32
    return %arg0, %c0_i32, %c0_i32_0 : i32, i32, i32
  }
}

</mosaic_0001>

<llo_original>
// kernel: tpu_custom_call.1
$region0: #{tpu_custom_call.1}
  #allocation0 [shape = 'u32[]', space=smem, size = 0x4, offset = 0x4, fixed_abs, tag = 'smem constant byte address 0x4 - core index']
  #allocation1 [shape = 'u32[144,128]{1,0:T(1,128)}', space=vmem, size = 0x12000, scoped, tag = 'internal scratch']
  %s0 = inlined_call_operand.vmem [shape: f32[4,8,32], index: 0, kind: input, shape index: {}]
  %s1 = inlined_call_operand.vmem [shape: f32[1,32], index: 1, kind: input, shape index: {}]
  %s2 = inlined_call_operand.vmem [shape: f32[1,32], index: 2, kind: input, shape index: {}]
  %s3 = inlined_call_operand.vmem [shape: f32[4,32,8], index: 3, kind: input, shape index: {}]
  %s4 = inlined_call_operand.vmem [shape: f32[4,32,8], index: 4, kind: input, shape index: {}]
  %s5 = inlined_call_operand.vmem [shape: f32[4,32,8], index: 5, kind: input, shape index: {}]
  %s6 = inlined_call_operand.vmem [shape: f32[4,1,8], index: 6, kind: input, shape index: {}]
  %s7 = inlined_call_operand.vmem [shape: f32[4,1,8], index: 7, kind: input, shape index: {}]
  %s8 = inlined_call_operand.vmem [shape: f32[4,1,8], index: 8, kind: input, shape index: {}]
  %s9 = inlined_call_operand.vmem [shape: f32[4,8,32], index: 9, kind: input, shape index: {}]
  %s10 = inlined_call_operand.vmem [shape: f32[1,32], index: 10, kind: input, shape index: {}]
  %s11 = inlined_call_operand.vmem [shape: f32[1,32], index: 11, kind: input, shape index: {}]
  %s12 = inlined_call_operand.vmem [shape: f32[1,32], index: 12, kind: input, shape index: {}]
  %s13 = inlined_call_operand.vmem [shape: f32[32,64], index: 13, kind: input, shape index: {}]
  %s14 = inlined_call_operand.vmem [shape: f32[1,64], index: 14, kind: input, shape index: {}]
  %s15 = inlined_call_operand.vmem [shape: f32[64,32], index: 15, kind: input, shape index: {}]
  %s16 = inlined_call_operand.vmem [shape: f32[1,32], index: 16, kind: input, shape index: {}]
  %s17 = inlined_call_operand.hbm [shape: f32[4,8,32], index: 17, kind: output, shape index: {}]
  %s18 = sld [smem:[#allocation0]]
  $region101: #{tpu_custom_call.1} parent=0
    _
  %s20 = ssub.s32 1, %s18
  %s21 = scalar_select 0, %s20, %s18
  $region1: #{tpu_custom_call.1} parent=0
    #allocation2 [shape = 'u8[16384]{0}', space=vmem, size = 0x4000, scoped, tag = 'output window, operand 0']
    #allocation3 [shape = 's32[2]{0}', space=sflag, size = 0x8, scoped, tag = 'scoped memory for tpu_custom_call.1']
    %22 = vsyncpa [#allocation3], 0
    %s23 = scalar_lea.sflag [#allocation3], 1
    %24 = vsyncpa %s23, 0
    loop: start=0, step=1, limit=4
    $region2: #{tpu_custom_call.1} parent=1 // loop_pre_header
      _
    $region3: #{tpu_custom_call.1} parent=1 // loop_header
      %s26 = sphi 0, %s30
      %p27 = scmp.ge.s32.totalorder %s26, 4
      %s36 = sphi 0, %s38
      %s39 = sphi 0, %s36
      %s40 = sphi 0, %s39
      %s56 = sphi 0, %s40
      %s60 = sphi 0, %s60
      %s62 = sphi 0, %s60
      %s63 = sphi 0, %s62
      %s77 = sphi 0, %s63
      %s81 = sphi 0, %s81
      %s83 = sphi 0, %s81
      %s84 = sphi 0, %s83
      %s98 = sphi 0, %s84
      %s102 = sphi 0, %s102
      %s104 = sphi 0, %s102
      %s105 = sphi 0, %s104
      %s119 = sphi 0, %s105
      %s123 = sphi 0, %s123
      %s125 = sphi 0, %s123
      %s126 = sphi 0, %s125
      %s140 = sphi 0, %s126
      %s144 = sphi 0, %s144
      %s146 = sphi 0, %s144
      %s147 = sphi 0, %s146
      %s161 = sphi 0, %s147
      %s165 = sphi 0, %s165
      %s167 = sphi 0, %s165
      %s168 = sphi 0, %s167
      %s182 = sphi 0, %s168
      %s186 = sphi 0, %s186
      %s188 = sphi 0, %s186
      %s189 = sphi 0, %s188
      %s203 = sphi 0, %s189
      %s207 = sphi 0, %s207
      %s209 = sphi 0, %s207
      %s210 = sphi 0, %s209
      %s224 = sphi 0, %s210
      %s228 = sphi 0, %s228
      %s230 = sphi 0, %s228
      %s231 = sphi 0, %s230
      %s245 = sphi 0, %s231
      %s249 = sphi 0, %s249
      %s251 = sphi 0, %s249
      %s252 = sphi 0, %s251
      %s266 = sphi 0, %s252
      %s270 = sphi 0, %s270
      %s272 = sphi 0, %s270
      %s273 = sphi 0, %s272
      %s287 = sphi 0, %s273
      %s291 = sphi 0, %s291
      %s293 = sphi 0, %s291
      %s294 = sphi 0, %s293
      %s308 = sphi 0, %s294
      %s312 = sphi 0, %s312
      %s314 = sphi 0, %s312
      %s315 = sphi 0, %s314
      %s329 = sphi 0, %s315
      %s333 = sphi 0, %s333
      %s335 = sphi 0, %s333
      %s336 = sphi 0, %s335
      %s350 = sphi 0, %s336
      %s354 = sphi 0, %s354
      %s356 = sphi 0, %s354
      %s357 = sphi 0, %s356
      %s371 = sphi 0, %s357
      %s375 = sphi 0, %s375
      %s377 = sphi 0, %s375
      %s378 = sphi 0, %s377
      %s392 = sphi 0, %s378
      %s398 = sphi 0, %s400
      %s401 = sphi 0, %s398
      %s402 = sphi 0, %s401
      %s418 = sphi 0, %s402
    $region4: #{tpu_custom_call.1} parent=1 // loop_header_branch
      %29 = sbr.rel (%p27) target = $region8
    $region5: #{tpu_custom_call.1} parent=1 // loop_body
      %s31 = ssub.s32 %s26, 1
      %s32 = ssub.s32 %s26, 2
      %s33 = sadd.s32 %s26, 1
      %s34 = ssub.s32 %s26, %s33
      %p35 = scmp.eq.s32.totalorder %s34, 0
      %s37 = sadd.s32 %s36, 1
      %s38 = scalar_select %p35, %s36, %s37
      %p41 = pneg %p35
      %p42 = scmp.eq.s32.totalorder %s26, 1
      %p43 = por %p41, %p42
      %p44 = scmp.ne.s32.totalorder %s36, %s39
      %p45 = scmp.eq.s32.totalorder %s26, 0
      %p46 = por %p44, %p45
      %p47 = scmp.ne.s32.totalorder %s36, %s39
      %p48 = scmp.eq.s32.totalorder %s31, 1
      %p49 = por %p47, %p48
      %p50 = scmp.ne.s32.totalorder %s39, %s40
      %p51 = scmp.eq.s32.totalorder %s31, 0
      %p52 = por %p50, %p51
      %p53 = scmp.ne.s32.totalorder %s39, %s40
      %p54 = scmp.eq.s32.totalorder %s32, 1
      %p55 = por %p53, %p54
      %p57 = scmp.ne.s32.totalorder %s40, %s56
      %p58 = scmp.eq.s32.totalorder %s32, 0
      %p59 = por %p57, %p58
      %s61 = sadd.s32 %s60, 1
      %p64 = scmp.eq.s32.totalorder %s26, 1
      %p65 = scmp.ne.s32.totalorder %s60, %s62
      %p66 = scmp.eq.s32.totalorder %s26, 0
      %p67 = por %p65, %p66
      %p68 = scmp.ne.s32.totalorder %s60, %s62
      %p69 = scmp.eq.s32.totalorder %s31, 1
      %p70 = por %p68, %p69
      %p71 = scmp.ne.s32.totalorder %s62, %s63
      %p72 = scmp.eq.s32.totalorder %s31, 0
      %p73 = por %p71, %p72
      %p74 = scmp.ne.s32.totalorder %s62, %s63
      %p75 = scmp.eq.s32.totalorder %s32, 1
      %p76 = por %p74, %p75
      %p78 = scmp.ne.s32.totalorder %s63, %s77
      %p79 = scmp.eq.s32.totalorder %s32, 0
      %p80 = por %p78, %p79
      %s82 = sadd.s32 %s81, 1
      %p85 = scmp.eq.s32.totalorder %s26, 1
      %p86 = scmp.ne.s32.totalorder %s81, %s83
      %p87 = scmp.eq.s32.totalorder %s26, 0
      %p88 = por %p86, %p87
      %p89 = scmp.ne.s32.totalorder %s81, %s83
      %p90 = scmp.eq.s32.totalorder %s31, 1
      %p91 = por %p89, %p90
      %p92 = scmp.ne.s32.totalorder %s83, %s84
      %p93 = scmp.eq.s32.totalorder %s31, 0
      %p94 = por %p92, %p93
      %p95 = scmp.ne.s32.totalorder %s83, %s84
      %p96 = scmp.eq.s32.totalorder %s32, 1
      %p97 = por %p95, %p96
      %p99 = scmp.ne.s32.totalorder %s84, %s98
      %p100 = scmp.eq.s32.totalorder %s32, 0
      %p101 = por %p99, %p100
      %s103 = sadd.s32 %s102, 1
      %p106 = scmp.eq.s32.totalorder %s26, 1
      %p107 = scmp.ne.s32.totalorder %s102, %s104
      %p108 = scmp.eq.s32.totalorder %s26, 0
      %p109 = por %p107, %p108
      %p110 = scmp.ne.s32.totalorder %s102, %s104
      %p111 = scmp.eq.s32.totalorder %s31, 1
      %p112 = por %p110, %p111
      %p113 = scmp.ne.s32.totalorder %s104, %s105
      %p114 = scmp.eq.s32.totalorder %s31, 0
      %p115 = por %p113, %p114
      %p116 = scmp.ne.s32.totalorder %s104, %s105
      %p117 = scmp.eq.s32.totalorder %s32, 1
      %p118 = por %p116, %p117
      %p120 = scmp.ne.s32.totalorder %s105, %s119
      %p121 = scmp.eq.s32.totalorder %s32, 0
      %p122 = por %p120, %p121
      %s124 = sadd.s32 %s123, 1
      %p127 = scmp.eq.s32.totalorder %s26, 1
      %p128 = scmp.ne.s32.totalorder %s123, %s125
      %p129 = scmp.eq.s32.totalorder %s26, 0
      %p130 = por %p128, %p129
      %p131 = scmp.ne.s32.totalorder %s123, %s125
      %p132 = scmp.eq.s32.totalorder %s31, 1
      %p133 = por %p131, %p132
      %p134 = scmp.ne.s32.totalorder %s125, %s126
      %p135 = scmp.eq.s32.totalorder %s31, 0
      %p136 = por %p134, %p135
      %p137 = scmp.ne.s32.totalorder %s125, %s126
      %p138 = scmp.eq.s32.totalorder %s32, 1
      %p139 = por %p137, %p138
      %p141 = scmp.ne.s32.totalorder %s126, %s140
      %p142 = scmp.eq.s32.totalorder %s32, 0
      %p143 = por %p141, %p142
      %s145 = sadd.s32 %s144, 1
      %p148 = scmp.eq.s32.totalorder %s26, 1
      %p149 = scmp.ne.s32.totalorder %s144, %s146
      %p150 = scmp.eq.s32.totalorder %s26, 0
      %p151 = por %p149, %p150
      %p152 = scmp.ne.s32.totalorder %s144, %s146
      %p153 = scmp.eq.s32.totalorder %s31, 1
      %p154 = por %p152, %p153
      %p155 = scmp.ne.s32.totalorder %s146, %s147
      %p156 = scmp.eq.s32.totalorder %s31, 0
      %p157 = por %p155, %p156
      %p158 = scmp.ne.s32.totalorder %s146, %s147
      %p159 = scmp.eq.s32.totalorder %s32, 1
      %p160 = por %p158, %p159
      %p162 = scmp.ne.s32.totalorder %s147, %s161
      %p163 = scmp.eq.s32.totalorder %s32, 0
      %p164 = por %p162, %p163
      %s166 = sadd.s32 %s165, 1
      %p169 = scmp.eq.s32.totalorder %s26, 1
      %p170 = scmp.ne.s32.totalorder %s165, %s167
      %p171 = scmp.eq.s32.totalorder %s26, 0
      %p172 = por %p170, %p171
      %p173 = scmp.ne.s32.totalorder %s165, %s167
      %p174 = scmp.eq.s32.totalorder %s31, 1
      %p175 = por %p173, %p174
      %p176 = scmp.ne.s32.totalorder %s167, %s168
      %p177 = scmp.eq.s32.totalorder %s31, 0
      %p178 = por %p176, %p177
      %p179 = scmp.ne.s32.totalorder %s167, %s168
      %p180 = scmp.eq.s32.totalorder %s32, 1
      %p181 = por %p179, %p180
      %p183 = scmp.ne.s32.totalorder %s168, %s182
      %p184 = scmp.eq.s32.totalorder %s32, 0
      %p185 = por %p183, %p184
      %s187 = sadd.s32 %s186, 1
      %p190 = scmp.eq.s32.totalorder %s26, 1
      %p191 = scmp.ne.s32.totalorder %s186, %s188
      %p192 = scmp.eq.s32.totalorder %s26, 0
      %p193 = por %p191, %p192
      %p194 = scmp.ne.s32.totalorder %s186, %s188
      %p195 = scmp.eq.s32.totalorder %s31, 1
      %p196 = por %p194, %p195
      %p197 = scmp.ne.s32.totalorder %s188, %s189
      %p198 = scmp.eq.s32.totalorder %s31, 0
      %p199 = por %p197, %p198
      %p200 = scmp.ne.s32.totalorder %s188, %s189
      %p201 = scmp.eq.s32.totalorder %s32, 1
      %p202 = por %p200, %p201
      %p204 = scmp.ne.s32.totalorder %s189, %s203
      %p205 = scmp.eq.s32.totalorder %s32, 0
      %p206 = por %p204, %p205
      %s208 = sadd.s32 %s207, 1
      %p211 = scmp.eq.s32.totalorder %s26, 1
      %p212 = scmp.ne.s32.totalorder %s207, %s209
      %p213 = scmp.eq.s32.totalorder %s26, 0
      %p214 = por %p212, %p213
      %p215 = scmp.ne.s32.totalorder %s207, %s209
      %p216 = scmp.eq.s32.totalorder %s31, 1
      %p217 = por %p215, %p216
      %p218 = scmp.ne.s32.totalorder %s209, %s210
      %p219 = scmp.eq.s32.totalorder %s31, 0
      %p220 = por %p218, %p219
      %p221 = scmp.ne.s32.totalorder %s209, %s210
      %p222 = scmp.eq.s32.totalorder %s32, 1
      %p223 = por %p221, %p222
      %p225 = scmp.ne.s32.totalorder %s210, %s224
      %p226 = scmp.eq.s32.totalorder %s32, 0
      %p227 = por %p225, %p226
      %s229 = sadd.s32 %s228, 1
      %p232 = scmp.eq.s32.totalorder %s26, 1
      %p233 = scmp.ne.s32.totalorder %s228, %s230
      %p234 = scmp.eq.s32.totalorder %s26, 0
      %p235 = por %p233, %p234
      %p236 = scmp.ne.s32.totalorder %s228, %s230
      %p237 = scmp.eq.s32.totalorder %s31, 1
      %p238 = por %p236, %p237
      %p239 = scmp.ne.s32.totalorder %s230, %s231
      %p240 = scmp.eq.s32.totalorder %s31, 0
      %p241 = por %p239, %p240
      %p242 = scmp.ne.s32.totalorder %s230, %s231
      %p243 = scmp.eq.s32.totalorder %s32, 1
      %p244 = por %p242, %p243
      %p246 = scmp.ne.s32.totalorder %s231, %s245
      %p247 = scmp.eq.s32.totalorder %s32, 0
      %p248 = por %p246, %p247
      %s250 = sadd.s32 %s249, 1
      %p253 = scmp.eq.s32.totalorder %s26, 1
      %p254 = scmp.ne.s32.totalorder %s249, %s251
      %p255 = scmp.eq.s32.totalorder %s26, 0
      %p256 = por %p254, %p255
      %p257 = scmp.ne.s32.totalorder %s249, %s251
      %p258 = scmp.eq.s32.totalorder %s31, 1
      %p259 = por %p257, %p258
      %p260 = scmp.ne.s32.totalorder %s251, %s252
      %p261 = scmp.eq.s32.totalorder %s31, 0
      %p262 = por %p260, %p261
      %p263 = scmp.ne.s32.totalorder %s251, %s252
      %p264 = scmp.eq.s32.totalorder %s32, 1
      %p265 = por %p263, %p264
      %p267 = scmp.ne.s32.totalorder %s252, %s266
      %p268 = scmp.eq.s32.totalorder %s32, 0
      %p269 = por %p267, %p268
      %s271 = sadd.s32 %s270, 1
      %p274 = scmp.eq.s32.totalorder %s26, 1
      %p275 = scmp.ne.s32.totalorder %s270, %s272
      %p276 = scmp.eq.s32.totalorder %s26, 0
      %p277 = por %p275, %p276
      %p278 = scmp.ne.s32.totalorder %s270, %s272
      %p279 = scmp.eq.s32.totalorder %s31, 1
      %p280 = por %p278, %p279
      %p281 = scmp.ne.s32.totalorder %s272, %s273
      %p282 = scmp.eq.s32.totalorder %s31, 0
      %p283 = por %p281, %p282
      %p284 = scmp.ne.s32.totalorder %s272, %s273
      %p285 = scmp.eq.s32.totalorder %s32, 1
      %p286 = por %p284, %p285
      %p288 = scmp.ne.s32.totalorder %s273, %s287
      %p289 = scmp.eq.s32.totalorder %s32, 0
      %p290 = por %p288, %p289
      %s292 = sadd.s32 %s291, 1
      %p295 = scmp.eq.s32.totalorder %s26, 1
      %p296 = scmp.ne.s32.totalorder %s291, %s293
      %p297 = scmp.eq.s32.totalorder %s26, 0
      %p298 = por %p296, %p297
      %p299 = scmp.ne.s32.totalorder %s291, %s293
      %p300 = scmp.eq.s32.totalorder %s31, 1
      %p301 = por %p299, %p300
      %p302 = scmp.ne.s32.totalorder %s293, %s294
      %p303 = scmp.eq.s32.totalorder %s31, 0
      %p304 = por %p302, %p303
      %p305 = scmp.ne.s32.totalorder %s293, %s294
      %p306 = scmp.eq.s32.totalorder %s32, 1
      %p307 = por %p305, %p306
      %p309 = scmp.ne.s32.totalorder %s294, %s308
      %p310 = scmp.eq.s32.totalorder %s32, 0
      %p311 = por %p309, %p310
      %s313 = sadd.s32 %s312, 1
      %p316 = scmp.eq.s32.totalorder %s26, 1
      %p317 = scmp.ne.s32.totalorder %s312, %s314
      %p318 = scmp.eq.s32.totalorder %s26, 0
      %p319 = por %p317, %p318
      %p320 = scmp.ne.s32.totalorder %s312, %s314
      %p321 = scmp.eq.s32.totalorder %s31, 1
      %p322 = por %p320, %p321
      %p323 = scmp.ne.s32.totalorder %s314, %s315
      %p324 = scmp.eq.s32.totalorder %s31, 0
      %p325 = por %p323, %p324
      %p326 = scmp.ne.s32.totalorder %s314, %s315
      %p327 = scmp.eq.s32.totalorder %s32, 1
      %p328 = por %p326, %p327
      %p330 = scmp.ne.s32.totalorder %s315, %s329
      %p331 = scmp.eq.s32.totalorder %s32, 0
      %p332 = por %p330, %p331
      %s334 = sadd.s32 %s333, 1
      %p337 = scmp.eq.s32.totalorder %s26, 1
      %p338 = scmp.ne.s32.totalorder %s333, %s335
      %p339 = scmp.eq.s32.totalorder %s26, 0
      %p340 = por %p338, %p339
      %p341 = scmp.ne.s32.totalorder %s333, %s335
      %p342 = scmp.eq.s32.totalorder %s31, 1
      %p343 = por %p341, %p342
      %p344 = scmp.ne.s32.totalorder %s335, %s336
      %p345 = scmp.eq.s32.totalorder %s31, 0
      %p346 = por %p344, %p345
      %p347 = scmp.ne.s32.totalorder %s335, %s336
      %p348 = scmp.eq.s32.totalorder %s32, 1
      %p349 = por %p347, %p348
      %p351 = scmp.ne.s32.totalorder %s336, %s350
      %p352 = scmp.eq.s32.totalorder %s32, 0
      %p353 = por %p351, %p352
      %s355 = sadd.s32 %s354, 1
      %p358 = scmp.eq.s32.totalorder %s26, 1
      %p359 = scmp.ne.s32.totalorder %s354, %s356
      %p360 = scmp.eq.s32.totalorder %s26, 0
      %p361 = por %p359, %p360
      %p362 = scmp.ne.s32.totalorder %s354, %s356
      %p363 = scmp.eq.s32.totalorder %s31, 1
      %p364 = por %p362, %p363
      %p365 = scmp.ne.s32.totalorder %s356, %s357
      %p366 = scmp.eq.s32.totalorder %s31, 0
      %p367 = por %p365, %p366
      %p368 = scmp.ne.s32.totalorder %s356, %s357
      %p369 = scmp.eq.s32.totalorder %s32, 1
      %p370 = por %p368, %p369
      %p372 = scmp.ne.s32.totalorder %s357, %s371
      %p373 = scmp.eq.s32.totalorder %s32, 0
      %p374 = por %p372, %p373
      %s376 = sadd.s32 %s375, 1
      %p379 = scmp.eq.s32.totalorder %s26, 1
      %p380 = scmp.ne.s32.totalorder %s375, %s377
      %p381 = scmp.eq.s32.totalorder %s26, 0
      %p382 = por %p380, %p381
      %p383 = scmp.ne.s32.totalorder %s375, %s377
      %p384 = scmp.eq.s32.totalorder %s31, 1
      %p385 = por %p383, %p384
      %p386 = scmp.ne.s32.totalorder %s377, %s378
      %p387 = scmp.eq.s32.totalorder %s31, 0
      %p388 = por %p386, %p387
      %p389 = scmp.ne.s32.totalorder %s377, %s378
      %p390 = scmp.eq.s32.totalorder %s32, 1
      %p391 = por %p389, %p390
      %p393 = scmp.ne.s32.totalorder %s378, %s392
      %p394 = scmp.eq.s32.totalorder %s32, 0
      %p395 = por %p393, %p394
      %s396 = ssub.s32 %s26, %s33
      %p397 = scmp.eq.s32.totalorder %s396, 0
      %s399 = sadd.s32 %s398, 1
      %s400 = scalar_select %p397, %s398, %s399
      %p403 = pneg %p397
      %p404 = scmp.eq.s32.totalorder %s26, 1
      %p405 = por %p403, %p404
      %p406 = scmp.ne.s32.totalorder %s398, %s401
      %p407 = scmp.eq.s32.totalorder %s26, 0
      %p408 = por %p406, %p407
      %p409 = scmp.ne.s32.totalorder %s398, %s401
      %p410 = scmp.eq.s32.totalorder %s31, 1
      %p411 = por %p409, %p410
      %p412 = scmp.ne.s32.totalorder %s401, %s402
      %p413 = scmp.eq.s32.totalorder %s31, 0
      %p414 = por %p412, %p413
      %p415 = scmp.ne.s32.totalorder %s401, %s402
      %p416 = scmp.eq.s32.totalorder %s32, 1
      %p417 = por %p415, %p416
      %p419 = scmp.ne.s32.totalorder %s402, %s418
      %p420 = scmp.eq.s32.totalorder %s32, 0
      %p421 = por %p419, %p420
      %p422 = scmp.le.s32.totalorder 1, %s26
      %p423 = scmp.lt.s32.totalorder %s26, 3
      %p424 = pnand %p422, %p423
      %p425 = pneg %p424
      // Predicated region
      $region9: #{tpu_custom_call.1} parent=5 // pred_check
        _
      $region10: #{tpu_custom_call.1} parent=5 // pred_check_branch
        %427 = sbr.rel (%p424) target = $region12
      $region11: #{tpu_custom_call.1} parent=5 // pred_region
        %s428 = ssub.s32 %s26, 1
        // Predicated region
        $region13: #{tpu_custom_call.1} parent=11 // pred_check
          %p429 = pneg %p73
        $region14: #{tpu_custom_call.1} parent=11 // pred_check_branch
          %431 = sbr.rel (%p429) target = $region16
        $region15: #{tpu_custom_call.1} parent=11 // pred_region
          _
        $region16: #{tpu_custom_call.1} parent=11 // pred_fallthru
          _
        // Predicated region
        $region17: #{tpu_custom_call.1} parent=11 // pred_check
          %p432 = pneg %p94
        $region18: #{tpu_custom_call.1} parent=11 // pred_check_branch
          %434 = sbr.rel (%p432) target = $region20
        $region19: #{tpu_custom_call.1} parent=11 // pred_region
          _
        $region20: #{tpu_custom_call.1} parent=11 // pred_fallthru
          _
        // Predicated region
        $region21: #{tpu_custom_call.1} parent=11 // pred_check
          %p435 = pneg %p115
        $region22: #{tpu_custom_call.1} parent=11 // pred_check_branch
          %437 = sbr.rel (%p435) target = $region24
        $region23: #{tpu_custom_call.1} parent=11 // pred_region
          _
        $region24: #{tpu_custom_call.1} parent=11 // pred_fallthru
          _
        // Predicated region
        $region25: #{tpu_custom_call.1} parent=11 // pred_check
          %p438 = pneg %p136
        $region26: #{tpu_custom_call.1} parent=11 // pred_check_branch
          %440 = sbr.rel (%p438) target = $region28
        $region27: #{tpu_custom_call.1} parent=11 // pred_region
          _
        $region28: #{tpu_custom_call.1} parent=11 // pred_fallthru
          _
        // Predicated region
        $region29: #{tpu_custom_call.1} parent=11 // pred_check
          %p441 = pneg %p157
        $region30: #{tpu_custom_call.1} parent=11 // pred_check_branch
          %443 = sbr.rel (%p441) target = $region32
        $region31: #{tpu_custom_call.1} parent=11 // pred_region
          _
        $region32: #{tpu_custom_call.1} parent=11 // pred_fallthru
          _
        // Predicated region
        $region33: #{tpu_custom_call.1} parent=11 // pred_check
          %p444 = pneg %p178
        $region34: #{tpu_custom_call.1} parent=11 // pred_check_branch
          %446 = sbr.rel (%p444) target = $region36
        $region35: #{tpu_custom_call.1} parent=11 // pred_region
          _
        $region36: #{tpu_custom_call.1} parent=11 // pred_fallthru
          _
        // Predicated region
        $region37: #{tpu_custom_call.1} parent=11 // pred_check
          %p447 = pneg %p199
        $region38: #{tpu_custom_call.1} parent=11 // pred_check_branch
          %449 = sbr.rel (%p447) target = $region40
        $region39: #{tpu_custom_call.1} parent=11 // pred_region
          _
        $region40: #{tpu_custom_call.1} parent=11 // pred_fallthru
          _
        // Predicated region
        $region41: #{tpu_custom_call.1} parent=11 // pred_check
          %p450 = pneg %p220
        $region42: #{tpu_custom_call.1} parent=11 // pred_check_branch
          %452 = sbr.rel (%p450) target = $region44
        $region43: #{tpu_custom_call.1} parent=11 // pred_region
          _
        $region44: #{tpu_custom_call.1} parent=11 // pred_fallthru
          _
        // Predicated region
        $region45: #{tpu_custom_call.1} parent=11 // pred_check
          %p453 = pneg %p241
        $region46: #{tpu_custom_call.1} parent=11 // pred_check_branch
          %455 = sbr.rel (%p453) target = $region48
        $region47: #{tpu_custom_call.1} parent=11 // pred_region
          _
        $region48: #{tpu_custom_call.1} parent=11 // pred_fallthru
          _
        // Predicated region
        $region49: #{tpu_custom_call.1} parent=11 // pred_check
          %p456 = pneg %p262
        $region50: #{tpu_custom_call.1} parent=11 // pred_check_branch
          %458 = sbr.rel (%p456) target = $region52
        $region51: #{tpu_custom_call.1} parent=11 // pred_region
          _
        $region52: #{tpu_custom_call.1} parent=11 // pred_fallthru
          _
        // Predicated region
        $region53: #{tpu_custom_call.1} parent=11 // pred_check
          %p459 = pneg %p283
        $region54: #{tpu_custom_call.1} parent=11 // pred_check_branch
          %461 = sbr.rel (%p459) target = $region56
        $region55: #{tpu_custom_call.1} parent=11 // pred_region
          _
        $region56: #{tpu_custom_call.1} parent=11 // pred_fallthru
          _
        // Predicated region
        $region57: #{tpu_custom_call.1} parent=11 // pred_check
          %p462 = pneg %p304
        $region58: #{tpu_custom_call.1} parent=11 // pred_check_branch
          %464 = sbr.rel (%p462) target = $region60
        $region59: #{tpu_custom_call.1} parent=11 // pred_region
          _
        $region60: #{tpu_custom_call.1} parent=11 // pred_fallthru
          _
        // Predicated region
        $region61: #{tpu_custom_call.1} parent=11 // pred_check
          %p465 = pneg %p325
        $region62: #{tpu_custom_call.1} parent=11 // pred_check_branch
          %467 = sbr.rel (%p465) target = $region64
        $region63: #{tpu_custom_call.1} parent=11 // pred_region
          _
        $region64: #{tpu_custom_call.1} parent=11 // pred_fallthru
          _
        // Predicated region
        $region65: #{tpu_custom_call.1} parent=11 // pred_check
          %p468 = pneg %p346
        $region66: #{tpu_custom_call.1} parent=11 // pred_check_branch
          %470 = sbr.rel (%p468) target = $region68
        $region67: #{tpu_custom_call.1} parent=11 // pred_region
          _
        $region68: #{tpu_custom_call.1} parent=11 // pred_fallthru
          _
        // Predicated region
        $region69: #{tpu_custom_call.1} parent=11 // pred_check
          %p471 = pneg %p367
        $region70: #{tpu_custom_call.1} parent=11 // pred_check_branch
          %473 = sbr.rel (%p471) target = $region72
        $region71: #{tpu_custom_call.1} parent=11 // pred_region
          _
        $region72: #{tpu_custom_call.1} parent=11 // pred_fallthru
          _
        // Predicated region
        $region73: #{tpu_custom_call.1} parent=11 // pred_check
          %p474 = pneg %p388
        $region74: #{tpu_custom_call.1} parent=11 // pred_check_branch
          %476 = sbr.rel (%p474) target = $region76
        $region75: #{tpu_custom_call.1} parent=11 // pred_region
          _
        $region76: #{tpu_custom_call.1} parent=11 // pred_fallthru
          _
      $region12: #{tpu_custom_call.1} parent=5 // pred_fallthru
        _
      %p477 = scmp.lt.s32.totalorder %s26, 2
      // Predicated region
      $region77: #{tpu_custom_call.1} parent=5 // pred_check
        %p478 = pneg %p477
      $region78: #{tpu_custom_call.1} parent=5 // pred_check_branch
        %480 = sbr.rel (%p478) target = $region80
      $region79: #{tpu_custom_call.1} parent=5 // pred_region
        // Predicated region
        $region81: #{tpu_custom_call.1} parent=79 // pred_check
          %p481 = pneg %p46
        $region82: #{tpu_custom_call.1} parent=79 // pred_check_branch
          %483 = sbr.rel (%p481) target = $region84
        $region83: #{tpu_custom_call.1} parent=79 // pred_region
          %s484 = smul.u32 2, %s26
          %p485 = scmp.lt.s32.totalorder %s484, 3
          %s486 = scalar_select %p485, %s484, 3
          %s487 = smul.addr %s486, 8
          %s488 = scalar_lea.vmem %s0, %s487
          %s489 = smul.u32 2, %s26
        $region84: #{tpu_custom_call.1} parent=79 // pred_fallthru
          _
      $region80: #{tpu_custom_call.1} parent=5 // pred_fallthru
        _
      %p490 = scmp.le.s32.totalorder 1, %s26
      %p491 = scmp.lt.s32.totalorder %s26, 3
      %p492 = pnand %p490, %p491
      %p493 = pneg %p492
      // Predicated region
      $region85: #{tpu_custom_call.1} parent=5 // pred_check
        _
      $region86: #{tpu_custom_call.1} parent=5 // pred_check_branch
        %495 = sbr.rel (%p492) target = $region88
      $region87: #{tpu_custom_call.1} parent=5 // pred_region
        %s496 = ssub.s32 %s26, 1
        %s497 = smul.u32 2, %s31
        %p498 = scmp.lt.s32.totalorder %s497, 3
        %s499 = scalar_select %p498, %s497, 3
        %s500 = smul.addr %s499, 8
        %s501 = scalar_lea.vmem %s0, %s500
        %p502 = pneg %p52
        %p503 = pneg %p49
        %p504 = pneg %p73
        %p505 = pneg %p70
        %p506 = pneg %p94
        %p507 = pneg %p91
        %p508 = pneg %p115
        %p509 = pneg %p112
        %p510 = pneg %p136
        %p511 = pneg %p133
        %p512 = pneg %p157
        %p513 = pneg %p154
        %p514 = pneg %p178
        %p515 = pneg %p175
        %p516 = pneg %p199
        %p517 = pneg %p196
        %p518 = pneg %p220
        %p519 = pneg %p217
        %p520 = pneg %p241
        %p521 = pneg %p238
        %p522 = pneg %p262
        %p523 = pneg %p259
        %p524 = pneg %p283
        %p525 = pneg %p280
        %p526 = pneg %p304
        %p527 = pneg %p301
        %p528 = pneg %p325
        %p529 = pneg %p322
        %p530 = pneg %p346
        %p531 = pneg %p343
        %p532 = pneg %p367
        %p533 = pneg %p364
        %p534 = pneg %p388
        %p535 = pneg %p385
        %p536 = pneg %p414
        %p537 = pneg %p411
        %s538 = sand.u32 %s401, 1
        %s539 = scalar_lea.sflag [#allocation3], %s538
        %s540 = sand.u32 %s401, 1
        %s541 = smul.addr %s540, 16
        %s542 = scalar_lea.vmem [#allocation2], %s541
        %s543 = smul.u32 2, %s31
        %p544 = scmp.lt.s32.totalorder %s543, 3
        %s545 = scalar_select %p544, %s543, 3
        %s546 = smul.addr %s545, 8
        %s547 = scalar_lea.vmem %s0, %s546
        %s548 = smul.u32 2, %s31
        %s549 = smul.u32 2, %s31
        %v550 = vld [vmem:[%s547] sm:$0xff]
        %v551 = vld [vmem:[%s547 + $0x8] sm:$0xff]
        %v552 = vld [vmem:[%s1] sm:$0x1]
        %v553 = vld [vmem:[%s2] sm:$0x1]
        %vm554 = vcmask 261120
        %v555 = vsel %vm554, %v550, 0.0
        %556 = vadd.xlane.f32.xlu0 %v555
        %v557 = vpop.xlane.xlu0 %556
        %v558 = vsel %vm554, %v551, 0.0
        %559 = vadd.xlane.f32.xlu0 %v558
        %v560 = vpop.xlane.xlu0 %559
        %v561 = vrcp.pop 32.0
        %v562 = vmul.f32 %v557, %v561
        %v563 = vmul.f32 %v560, %v561
        %v564 = vsub.f32 %v550, %v562
        %v565 = vsub.f32 %v551, %v563
        %v566 = vmul.f32 %v564, %v564
        %v567 = vmul.f32 %v565, %v565
        %v568 = vsel %vm554, %v566, 0.0
        %569 = vadd.xlane.f32.xlu0 %v568
        %v570 = vpop.xlane.xlu0 %569
        %v571 = vsel %vm554, %v567, 0.0
        %572 = vadd.xlane.f32.xlu0 %v571
        %v573 = vpop.xlane.xlu0 %572
        %v574 = vmul.f32 %v570, %v561
        %v575 = vmul.f32 %v573, %v561
        %v576 = vadd.f32 %v574, 1e-05
        %v577 = vadd.f32 %v575, 1e-05
        %v578 = vrsqrt.pop %v576
        %v579 = vrsqrt.pop %v577
        %v580 = vmul.f32 %v564, %v578
        %v581 = vmul.f32 %v565, %v579
        %v583 = vlaneseq
        %v584 = vshrl.u32 %v583, 7
        %v585 = vsub.s32 0, %v584
        %v586 = vrot.slane %v552, %v585
        %v588 = vmul.f32 %v580, %v586
        %v589 = vmul.f32 %v581, %v586
        %v591 = vlaneseq
        %v592 = vshrl.u32 %v591, 7
        %v593 = vsub.s32 0, %v592
        %v594 = vrot.slane %v553, %v593
        %v596 = vadd.f32 %v588, %v594
        %v597 = vadd.f32 %v589, %v594
        %v598 = vld [vmem:[%s3] sm:$0xff]
        %v599 = vld [vmem:[%s3 + $0x8] sm:$0xff]
        %v600 = vld [vmem:[%s3 + $0x10] sm:$0xff]
        %v601 = vld [vmem:[%s3 + $0x18] sm:$0xff]
        %v602 = vld [vmem:[%s6] sm:$0x1]
        %v604 = vlaneseq
        %v605 = vshrl.u32 %v604, 7
        %v606 = vsub.s32 0, %v605
        %v607 = vrot.slane %v602, %v606
        %v610 = vsel %vm554, %v596, 0
        %v613 = vsel %vm554, %v597, 0
        %615 = vmatprep.subr.mxu0 0.0
        %616 = vmatpush1.msra.mxu0 %v598
        %617 = vmatprep.subr.mxu0 0.0
        %618 = vmatpush1.msra.mxu0 %v599
        %619 = vmatprep.subr.mxu0 0.0
        %620 = vmatpush1.msra.mxu0 %v600
        %621 = vmatprep.subr.mxu0 0.0
        %622 = vmatpush1.msra.mxu0 %v601
        %623 = vmatprep.subr.mxu0 0.0
        %624 = vmatpush1.msra.mxu0 0.0
        %625 = vmatprep.subr.mxu0 0.0
        %626 = vmatpush1.msra.mxu0 0.0
        %627 = vmatprep.subr.mxu0 0.0
        %628 = vmatpush1.msra.mxu0 0.0
        %629 = vmatprep.subr.mxu0 0.0
        %630 = vmatpush1.msra.mxu0 0.0
        %631 = vmatprep.subr.mxu0 0.0
        %632 = vmatpush1.msra.mxu0 0.0
        %633 = vmatprep.subr.mxu0 0.0
        %634 = vmatpush1.msra.mxu0 0.0
        %635 = vmatprep.subr.mxu0 0.0
        %636 = vmatpush1.msra.mxu0 0.0
        %637 = vmatprep.subr.mxu0 0.0
        %638 = vmatpush1.msra.mxu0 0.0
        %639 = vmatprep.subr.mxu0 0.0
        %640 = vmatpush1.msra.mxu0 0.0
        %641 = vmatprep.subr.mxu0 0.0
        %642 = vmatpush1.msra.mxu0 0.0
        %643 = vmatprep.subr.mxu0 0.0
        %644 = vmatpush1.msra.mxu0 0.0
        %645 = vmatprep.subr.mxu0 0.0
        %646 = vmatpush1.msra.mxu0 0.0
        %647 = vmatprep.subr.mxu0 0.0
        %648 = vmatpush1.msra.mxu0 0.0
        %649 = vmatprep.subr.mxu0 0.0
        %650 = vmatpush1.msra.mxu0 0.0
        %651 = vmatprep.subr.mxu0 0.0
        %652 = vmatpush1.msra.mxu0 0.0
        %653 = vmatprep.subr.mxu0 0.0
        %654 = vmatpush1.msra.mxu0 0.0
        %655 = vmatprep.subr.mxu0 0.0
        %656 = vmatpush1.msra.mxu0 0.0
        %657 = vmatprep.subr.mxu0 0.0
        %658 = vmatpush1.msra.mxu0 0.0
        %659 = vmatprep.subr.mxu0 0.0
        %660 = vmatpush1.msra.mxu0 0.0
        %661 = vmatprep.subr.mxu0 0.0
        %662 = vmatpush1.msra.mxu0 0.0
        %663 = vmatprep.subr.mxu0 0.0
        %664 = vmatpush1.msra.mxu0 0.0
        %665 = vmatprep.subr.mxu0 0.0
        %666 = vmatpush1.msra.mxu0 0.0
        %667 = vmatprep.subr.mxu0 0.0
        %668 = vmatpush1.msra.mxu0 0.0
        %669 = vmatprep.subr.mxu0 0.0
        %670 = vmatpush1.msra.mxu0 0.0
        %671 = vmatprep.subr.mxu0 0.0
        %672 = vmatpush1.msra.mxu0 0.0
        %673 = vmatprep.subr.mxu0 0.0
        %674 = vmatpush1.msra.mxu0 0.0
        %675 = vmatprep.subr.mxu0 0.0
        %676 = vmatpush1.msra.mxu0 0.0
        %677 = vmatprep.subr.mxu0 0.0
        %678 = vmatpush1.msra.mxu0 0.0
        %679 = vmatprep.mubr.f32.mxu0 0.0
        %680 = vmatmul.mubr.f32.gmra.mrb[0].mxu0 %v610
        %v681 = vpop.f32.mrb[0].mxu0
        %v682 = vadd.f32 %v607, %v681
        %v683 = vpop.f32.mrb[0].mxu0
        %684 = vmatprep.mubr.f32.mxu0 0.0
        %685 = vmatmul.mubr.f32.gmra.mrb[0].mxu0 %v613
        %v686 = vpop.f32.mrb[0].mxu0
        %v687 = vadd.f32 %v607, %v686
        %v688 = vpop.f32.mrb[0].mxu0
        %689 = vdwg.mxu0
        %v690 = vld [vmem:[%s4] sm:$0xff]
        %v691 = vld [vmem:[%s4 + $0x8] sm:$0xff]
        %v692 = vld [vmem:[%s4 + $0x10] sm:$0xff]
        %v693 = vld [vmem:[%s4 + $0x18] sm:$0xff]
        %v694 = vld [vmem:[%s7] sm:$0x1]
        %v696 = vlaneseq
        %v697 = vshrl.u32 %v696, 7
        %v698 = vsub.s32 0, %v697
        %v699 = vrot.slane %v694, %v698
        %701 = vmatprep.subr.mxu0 0.0
        %702 = vmatpush1.msra.mxu0 %v690
        %703 = vmatprep.subr.mxu0 0.0
        %704 = vmatpush1.msra.mxu0 %v691
        %705 = vmatprep.subr.mxu0 0.0
        %706 = vmatpush1.msra.mxu0 %v692
        %707 = vmatprep.subr.mxu0 0.0
        %708 = vmatpush1.msra.mxu0 %v693
        %709 = vmatprep.subr.mxu0 0.0
        %710 = vmatpush1.msra.mxu0 0.0
        %711 = vmatprep.subr.mxu0 0.0
        %712 = vmatpush1.msra.mxu0 0.0
        %713 = vmatprep.subr.mxu0 0.0
        %714 = vmatpush1.msra.mxu0 0.0
        %715 = vmatprep.subr.mxu0 0.0
        %716 = vmatpush1.msra.mxu0 0.0
        %717 = vmatprep.subr.mxu0 0.0
        %718 = vmatpush1.msra.mxu0 0.0
        %719 = vmatprep.subr.mxu0 0.0
        %720 = vmatpush1.msra.mxu0 0.0
        %721 = vmatprep.subr.mxu0 0.0
        %722 = vmatpush1.msra.mxu0 0.0
        %723 = vmatprep.subr.mxu0 0.0
        %724 = vmatpush1.msra.mxu0 0.0
        %725 = vmatprep.subr.mxu0 0.0
        %726 = vmatpush1.msra.mxu0 0.0
        %727 = vmatprep.subr.mxu0 0.0
        %728 = vmatpush1.msra.mxu0 0.0
        %729 = vmatprep.subr.mxu0 0.0
        %730 = vmatpush1.msra.mxu0 0.0
        %731 = vmatprep.subr.mxu0 0.0
        %732 = vmatpush1.msra.mxu0 0.0
        %733 = vmatprep.subr.mxu0 0.0
        %734 = vmatpush1.msra.mxu0 0.0
        %735 = vmatprep.subr.mxu0 0.0
        %736 = vmatpush1.msra.mxu0 0.0
        %737 = vmatprep.subr.mxu0 0.0
        %738 = vmatpush1.msra.mxu0 0.0
        %739 = vmatprep.subr.mxu0 0.0
        %740 = vmatpush1.msra.mxu0 0.0
        %741 = vmatprep.subr.mxu0 0.0
        %742 = vmatpush1.msra.mxu0 0.0
        %743 = vmatprep.subr.mxu0 0.0
        %744 = vmatpush1.msra.mxu0 0.0
        %745 = vmatprep.subr.mxu0 0.0
        %746 = vmatpush1.msra.mxu0 0.0
        %747 = vmatprep.subr.mxu0 0.0
        %748 = vmatpush1.msra.mxu0 0.0
        %749 = vmatprep.subr.mxu0 0.0
        %750 = vmatpush1.msra.mxu0 0.0
        %751 = vmatprep.subr.mxu0 0.0
        %752 = vmatpush1.msra.mxu0 0.0
        %753 = vmatprep.subr.mxu0 0.0
        %754 = vmatpush1.msra.mxu0 0.0
        %755 = vmatprep.subr.mxu0 0.0
        %756 = vmatpush1.msra.mxu0 0.0
        %757 = vmatprep.subr.mxu0 0.0
        %758 = vmatpush1.msra.mxu0 0.0
        %759 = vmatprep.subr.mxu0 0.0
        %760 = vmatpush1.msra.mxu0 0.0
        %761 = vmatprep.subr.mxu0 0.0
        %762 = vmatpush1.msra.mxu0 0.0
        %763 = vmatprep.subr.mxu0 0.0
        %764 = vmatpush1.msra.mxu0 0.0
        %765 = vmatprep.mubr.f32.mxu0 0.0
        %766 = vmatmul.mubr.f32.gmra.mrb[0].mxu0 %v610
        %v767 = vpop.f32.mrb[0].mxu0
        %v768 = vadd.f32 %v699, %v767
        %v769 = vpop.f32.mrb[0].mxu0
        %770 = vmatprep.mubr.f32.mxu0 0.0
        %771 = vmatmul.mubr.f32.gmra.mrb[0].mxu0 %v613
        %v772 = vpop.f32.mrb[0].mxu0
        %v773 = vadd.f32 %v699, %v772
        %v774 = vpop.f32.mrb[0].mxu0
        %775 = vdwg.mxu0
        %v776 = vld [vmem:[%s5] sm:$0xff]
        %v777 = vld [vmem:[%s5 + $0x8] sm:$0xff]
        %v778 = vld [vmem:[%s5 + $0x10] sm:$0xff]
        %v779 = vld [vmem:[%s5 + $0x18] sm:$0xff]
        %v780 = vld [vmem:[%s8] sm:$0x1]
        %v782 = vlaneseq
        %v783 = vshrl.u32 %v782, 7
        %v784 = vsub.s32 0, %v783
        %v785 = vrot.slane %v780, %v784
        %787 = vmatprep.subr.mxu0 0.0
        %788 = vmatpush1.msra.mxu0 %v776
        %789 = vmatprep.subr.mxu0 0.0
        %790 = vmatpush1.msra.mxu0 %v777
        %791 = vmatprep.subr.mxu0 0.0
        %792 = vmatpush1.msra.mxu0 %v778
        %793 = vmatprep.subr.mxu0 0.0
        %794 = vmatpush1.msra.mxu0 %v779
        %795 = vmatprep.subr.mxu0 0.0
        %796 = vmatpush1.msra.mxu0 0.0
        %797 = vmatprep.subr.mxu0 0.0
        %798 = vmatpush1.msra.mxu0 0.0
        %799 = vmatprep.subr.mxu0 0.0
        %800 = vmatpush1.msra.mxu0 0.0
        %801 = vmatprep.subr.mxu0 0.0
        %802 = vmatpush1.msra.mxu0 0.0
        %803 = vmatprep.subr.mxu0 0.0
        %804 = vmatpush1.msra.mxu0 0.0
        %805 = vmatprep.subr.mxu0 0.0
        %806 = vmatpush1.msra.mxu0 0.0
        %807 = vmatprep.subr.mxu0 0.0
        %808 = vmatpush1.msra.mxu0 0.0
        %809 = vmatprep.subr.mxu0 0.0
        %810 = vmatpush1.msra.mxu0 0.0
        %811 = vmatprep.subr.mxu0 0.0
        %812 = vmatpush1.msra.mxu0 0.0
        %813 = vmatprep.subr.mxu0 0.0
        %814 = vmatpush1.msra.mxu0 0.0
        %815 = vmatprep.subr.mxu0 0.0
        %816 = vmatpush1.msra.mxu0 0.0
        %817 = vmatprep.subr.mxu0 0.0
        %818 = vmatpush1.msra.mxu0 0.0
        %819 = vmatprep.subr.mxu0 0.0
        %820 = vmatpush1.msra.mxu0 0.0
        %821 = vmatprep.subr.mxu0 0.0
        %822 = vmatpush1.msra.mxu0 0.0
        %823 = vmatprep.subr.mxu0 0.0
        %824 = vmatpush1.msra.mxu0 0.0
        %825 = vmatprep.subr.mxu0 0.0
        %826 = vmatpush1.msra.mxu0 0.0
        %827 = vmatprep.subr.mxu0 0.0
        %828 = vmatpush1.msra.mxu0 0.0
        %829 = vmatprep.subr.mxu0 0.0
        %830 = vmatpush1.msra.mxu0 0.0
        %831 = vmatprep.subr.mxu0 0.0
        %832 = vmatpush1.msra.mxu0 0.0
        %833 = vmatprep.subr.mxu0 0.0
        %834 = vmatpush1.msra.mxu0 0.0
        %835 = vmatprep.subr.mxu0 0.0
        %836 = vmatpush1.msra.mxu0 0.0
        %837 = vmatprep.subr.mxu0 0.0
        %838 = vmatpush1.msra.mxu0 0.0
        %839 = vmatprep.subr.mxu0 0.0
        %840 = vmatpush1.msra.mxu0 0.0
        %841 = vmatprep.subr.mxu0 0.0
        %842 = vmatpush1.msra.mxu0 0.0
        %843 = vmatprep.subr.mxu0 0.0
        %844 = vmatpush1.msra.mxu0 0.0
        %845 = vmatprep.subr.mxu0 0.0
        %846 = vmatpush1.msra.mxu0 0.0
        %847 = vmatprep.subr.mxu0 0.0
        %848 = vmatpush1.msra.mxu0 0.0
        %849 = vmatprep.subr.mxu0 0.0
        %850 = vmatpush1.msra.mxu0 0.0
        %851 = vmatprep.mubr.f32.mxu0 0.0
        %852 = vmatmul.mubr.f32.gmra.mrb[0].mxu0 %v610
        %v853 = vpop.f32.mrb[0].mxu0
        %v854 = vadd.f32 %v785, %v853
        %v855 = vpop.f32.mrb[0].mxu0
        %856 = vmatprep.mubr.f32.mxu0 0.0
        %857 = vmatmul.mubr.f32.gmra.mrb[0].mxu0 %v613
        %v858 = vpop.f32.mrb[0].mxu0
        %v859 = vadd.f32 %v785, %v858
        %v860 = vpop.f32.mrb[0].mxu0
        %861 = vdwg.mxu0
        %v862 = vmul.f32 %v682, 0.35355338
        %v863 = vmul.f32 %v687, 0.35355338
        %vm864 = vcmask 64512
        %v866 = vsel %vm864, %v862, 0
        %v869 = vsel %vm864, %v768, 0
        %871 = vmatprep.subr.mxu0 0.0
        %872 = vmatpush1.xpose.msra.mxu0 %v869
        %873 = vmatprep.subr.mxu0 0.0
        %874 = vmatpush1.xpose.msra.mxu0 0.0
        %875 = vmatprep.subr.mxu0 0.0
        %876 = vmatpush1.xpose.msra.mxu0 0.0
        %877 = vmatprep.subr.mxu0 0.0
        %878 = vmatpush1.xpose.msra.mxu0 0.0
        %879 = vmatprep.subr.mxu0 0.0
        %880 = vmatpush1.xpose.msra.mxu0 0.0
        %881 = vmatprep.subr.mxu0 0.0
        %882 = vmatpush1.xpose.msra.mxu0 0.0
        %883 = vmatprep.subr.mxu0 0.0
        %884 = vmatpush1.xpose.msra.mxu0 0.0
        %885 = vmatprep.subr.mxu0 0.0
        %886 = vmatpush1.xpose.msra.mxu0 0.0
        %887 = vmatprep.subr.mxu0 0.0
        %888 = vmatpush1.xpose.msra.mxu0 0.0
        %889 = vmatprep.subr.mxu0 0.0
        %890 = vmatpush1.xpose.msra.mxu0 0.0
        %891 = vmatprep.subr.mxu0 0.0
        %892 = vmatpush1.xpose.msra.mxu0 0.0
        %893 = vmatprep.subr.mxu0 0.0
        %894 = vmatpush1.xpose.msra.mxu0 0.0
        %895 = vmatprep.subr.mxu0 0.0
        %896 = vmatpush1.xpose.msra.mxu0 0.0
        %897 = vmatprep.subr.mxu0 0.0
        %898 = vmatpush1.xpose.msra.mxu0 0.0
        %899 = vmatprep.subr.mxu0 0.0
        %900 = vmatpush1.xpose.msra.mxu0 0.0
        %901 = vmatprep.subr.mxu0 0.0
        %902 = vmatpush1.xpose.msra.mxu0 0.0
        %903 = vmatprep.subr.mxu0 0.0
        %904 = vmatpush1.xpose.msra.mxu0 0.0
        %905 = vmatprep.subr.mxu0 0.0
        %906 = vmatpush1.xpose.msra.mxu0 0.0
        %907 = vmatprep.subr.mxu0 0.0
        %908 = vmatpush1.xpose.msra.mxu0 0.0
        %909 = vmatprep.subr.mxu0 0.0
        %910 = vmatpush1.xpose.msra.mxu0 0.0
        %911 = vmatprep.subr.mxu0 0.0
        %912 = vmatpush1.xpose.msra.mxu0 0.0
        %913 = vmatprep.subr.mxu0 0.0
        %914 = vmatpush1.xpose.msra.mxu0 0.0
        %915 = vmatprep.subr.mxu0 0.0
        %916 = vmatpush1.xpose.msra.mxu0 0.0
        %917 = vmatprep.subr.mxu0 0.0
        %918 = vmatpush1.xpose.msra.mxu0 0.0
        %919 = vmatprep.subr.mxu0 0.0
        %920 = vmatpush1.xpose.msra.mxu0 0.0
        %921 = vmatprep.subr.mxu0 0.0
        %922 = vmatpush1.xpose.msra.mxu0 0.0
        %923 = vmatprep.subr.mxu0 0.0
        %924 = vmatpush1.xpose.msra.mxu0 0.0
        %925 = vmatprep.subr.mxu0 0.0
        %926 = vmatpush1.xpose.msra.mxu0 0.0
        %927 = vmatprep.subr.mxu0 0.0
        %928 = vmatpush1.xpose.msra.mxu0 0.0
        %929 = vmatprep.subr.mxu0 0.0
        %930 = vmatpush1.xpose.msra.mxu0 0.0
        %931 = vmatprep.subr.mxu0 0.0
        %932 = vmatpush1.xpose.msra.mxu0 0.0
        %933 = vmatprep.subr.mxu0 0.0
        %934 = vmatpush1.xpose.msra.mxu0 0.0
        %935 = vmatprep.mubr.f32.mxu0 0.0
        %936 = vmatmul.mubr.f32.gmra.mrb[0].mxu0 %v866
        %v937 = vpop.f32.mrb[0].mxu0
        %v938 = vadd.f32 0.0, %v937
        %v939 = vpop.f32.mrb[0].mxu0
        %940 = vdwg.mxu0
        %v942 = vsel %vm864, %v863, 0
        %v945 = vsel %vm864, %v773, 0
        %947 = vmatprep.subr.mxu0 0.0
        %948 = vmatpush1.xpose.msra.mxu0 %v945
        %949 = vmatprep.subr.mxu0 0.0
        %950 = vmatpush1.xpose.msra.mxu0 0.0
        %951 = vmatprep.subr.mxu0 0.0
        %952 = vmatpush1.xpose.msra.mxu0 0.0
        %953 = vmatprep.subr.mxu0 0.0
        %954 = vmatpush1.xpose.msra.mxu0 0.0
        %955 = vmatprep.subr.mxu0 0.0
        %956 = vmatpush1.xpose.msra.mxu0 0.0
        %957 = vmatprep.subr.mxu0 0.0
        %958 = vmatpush1.xpose.msra.mxu0 0.0
        %959 = vmatprep.subr.mxu0 0.0
        %960 = vmatpush1.xpose.msra.mxu0 0.0
        %961 = vmatprep.subr.mxu0 0.0
        %962 = vmatpush1.xpose.msra.mxu0 0.0
        %963 = vmatprep.subr.mxu0 0.0
        %964 = vmatpush1.xpose.msra.mxu0 0.0
        %965 = vmatprep.subr.mxu0 0.0
        %966 = vmatpush1.xpose.msra.mxu0 0.0
        %967 = vmatprep.subr.mxu0 0.0
        %968 = vmatpush1.xpose.msra.mxu0 0.0
        %969 = vmatprep.subr.mxu0 0.0
        %970 = vmatpush1.xpose.msra.mxu0 0.0
        %971 = vmatprep.subr.mxu0 0.0
        %972 = vmatpush1.xpose.msra.mxu0 0.0
        %973 = vmatprep.subr.mxu0 0.0
        %974 = vmatpush1.xpose.msra.mxu0 0.0
        %975 = vmatprep.subr.mxu0 0.0
        %976 = vmatpush1.xpose.msra.mxu0 0.0
        %977 = vmatprep.subr.mxu0 0.0
        %978 = vmatpush1.xpose.msra.mxu0 0.0
        %979 = vmatprep.subr.mxu0 0.0
        %980 = vmatpush1.xpose.msra.mxu0 0.0
        %981 = vmatprep.subr.mxu0 0.0
        %982 = vmatpush1.xpose.msra.mxu0 0.0
        %983 = vmatprep.subr.mxu0 0.0
        %984 = vmatpush1.xpose.msra.mxu0 0.0
        %985 = vmatprep.subr.mxu0 0.0
        %986 = vmatpush1.xpose.msra.mxu0 0.0
        %987 = vmatprep.subr.mxu0 0.0
        %988 = vmatpush1.xpose.msra.mxu0 0.0
        %989 = vmatprep.subr.mxu0 0.0
        %990 = vmatpush1.xpose.msra.mxu0 0.0
        %991 = vmatprep.subr.mxu0 0.0
        %992 = vmatpush1.xpose.msra.mxu0 0.0
        %993 = vmatprep.subr.mxu0 0.0
        %994 = vmatpush1.xpose.msra.mxu0 0.0
        %995 = vmatprep.subr.mxu0 0.0
        %996 = vmatpush1.xpose.msra.mxu0 0.0
        %997 = vmatprep.subr.mxu0 0.0
        %998 = vmatpush1.xpose.msra.mxu0 0.0
        %999 = vmatprep.subr.mxu0 0.0
        %1000 = vmatpush1.xpose.msra.mxu0 0.0
        %1001 = vmatprep.subr.mxu0 0.0
        %1002 = vmatpush1.xpose.msra.mxu0 0.0
        %1003 = vmatprep.subr.mxu0 0.0
        %1004 = vmatpush1.xpose.msra.mxu0 0.0
        %1005 = vmatprep.subr.mxu0 0.0
        %1006 = vmatpush1.xpose.msra.mxu0 0.0
        %1007 = vmatprep.subr.mxu0 0.0
        %1008 = vmatpush1.xpose.msra.mxu0 0.0
        %1009 = vmatprep.subr.mxu0 0.0
        %1010 = vmatpush1.xpose.msra.mxu0 0.0
        %1011 = vmatprep.mubr.f32.mxu0 0.0
        %1012 = vmatmul.mubr.f32.gmra.mrb[0].mxu0 %v942
        %v1013 = vpop.f32.mrb[0].mxu0
        %v1014 = vadd.f32 0.0, %v1013
        %v1015 = vpop.f32.mrb[0].mxu0
        %1016 = vdwg.mxu0
        %v1017 = vsel %vm864, %v938, -inf
        %1018 = vmax.xlane.f32.xlu0 %v1017
        %v1019 = vpop.xlane.xlu0 %1018
        %v1020 = vsel %vm864, %v1014, -inf
        %1021 = vmax.xlane.f32.xlu0 %v1020
        %v1022 = vpop.xlane.xlu0 %1021
        %v1023 = vsub.f32 %v938, %v1019
        %v1024 = vsub.f32 %v1014, %v1022
        %v1025 = vmul.f32 %v1023, 1.442695
        %v1026 = vpow.pop %v1025
        %v1027 = vmul.f32 %v1024, 1.442695
        %v1028 = vpow.pop %v1027
        %v1029 = vsel %vm864, %v1026, 0.0
        %1030 = vadd.xlane.f32.xlu0 %v1029
        %v1031 = vpop.xlane.xlu0 %1030
        %v1032 = vsel %vm864, %v1028, 0.0
        %1033 = vadd.xlane.f32.xlu0 %v1032
        %v1034 = vpop.xlane.xlu0 %1033
        %v1036 = vsel %vm864, %v1026, 0
        %1038 = vmatprep.subr.mxu0 0.0
        %1039 = vmatpush1.msra.mxu0 %v854
        %1040 = vmatprep.subr.mxu0 0.0
        %1041 = vmatpush1.msra.mxu0 0.0
        %1042 = vmatprep.subr.mxu0 0.0
        %1043 = vmatpush1.msra.mxu0 0.0
        %1044 = vmatprep.subr.mxu0 0.0
        %1045 = vmatpush1.msra.mxu0 0.0
        %1046 = vmatprep.subr.mxu0 0.0
        %1047 = vmatpush1.msra.mxu0 0.0
        %1048 = vmatprep.subr.mxu0 0.0
        %1049 = vmatpush1.msra.mxu0 0.0
        %1050 = vmatprep.subr.mxu0 0.0
        %1051 = vmatpush1.msra.mxu0 0.0
        %1052 = vmatprep.subr.mxu0 0.0
        %1053 = vmatpush1.msra.mxu0 0.0
        %1054 = vmatprep.subr.mxu0 0.0
        %1055 = vmatpush1.msra.mxu0 0.0
        %1056 = vmatprep.subr.mxu0 0.0
        %1057 = vmatpush1.msra.mxu0 0.0
        %1058 = vmatprep.subr.mxu0 0.0
        %1059 = vmatpush1.msra.mxu0 0.0
        %1060 = vmatprep.subr.mxu0 0.0
        %1061 = vmatpush1.msra.mxu0 0.0
        %1062 = vmatprep.subr.mxu0 0.0
        %1063 = vmatpush1.msra.mxu0 0.0
        %1064 = vmatprep.subr.mxu0 0.0
        %1065 = vmatpush1.msra.mxu0 0.0
        %1066 = vmatprep.subr.mxu0 0.0
        %1067 = vmatpush1.msra.mxu0 0.0
        %1068 = vmatprep.subr.mxu0 0.0
        %1069 = vmatpush1.msra.mxu0 0.0
        %1070 = vmatprep.subr.mxu0 0.0
        %1071 = vmatpush1.msra.mxu0 0.0
        %1072 = vmatprep.subr.mxu0 0.0
        %1073 = vmatpush1.msra.mxu0 0.0
        %1074 = vmatprep.subr.mxu0 0.0
        %1075 = vmatpush1.msra.mxu0 0.0
        %1076 = vmatprep.subr.mxu0 0.0
        %1077 = vmatpush1.msra.mxu0 0.0
        %1078 = vmatprep.subr.mxu0 0.0
        %1079 = vmatpush1.msra.mxu0 0.0
        %1080 = vmatprep.subr.mxu0 0.0
        %1081 = vmatpush1.msra.mxu0 0.0
        %1082 = vmatprep.subr.mxu0 0.0
        %1083 = vmatpush1.msra.mxu0 0.0
        %1084 = vmatprep.subr.mxu0 0.0
        %1085 = vmatpush1.msra.mxu0 0.0
        %1086 = vmatprep.subr.mxu0 0.0
        %1087 = vmatpush1.msra.mxu0 0.0
        %1088 = vmatprep.subr.mxu0 0.0
        %1089 = vmatpush1.msra.mxu0 0.0
        %1090 = vmatprep.subr.mxu0 0.0
        %1091 = vmatpush1.msra.mxu0 0.0
        %1092 = vmatprep.subr.mxu0 0.0
        %1093 = vmatpush1.msra.mxu0 0.0
        %1094 = vmatprep.subr.mxu0 0.0
        %1095 = vmatpush1.msra.mxu0 0.0
        %1096 = vmatprep.subr.mxu0 0.0
        %1097 = vmatpush1.msra.mxu0 0.0
        %1098 = vmatprep.subr.mxu0 0.0
        %1099 = vmatpush1.msra.mxu0 0.0
        %1100 = vmatprep.subr.mxu0 0.0
        %1101 = vmatpush1.msra.mxu0 0.0
        %1102 = vmatprep.mubr.f32.mxu0 0.0
        %1103 = vmatmul.mubr.f32.gmra.mrb[0].mxu0 %v1036
        %v1104 = vpop.f32.mrb[0].mxu0
        %v1105 = vadd.f32 0.0, %v1104
        %v1106 = vpop.f32.mrb[0].mxu0
        %1107 = vdwg.mxu0
        %v1109 = vsel %vm864, %v1028, 0
        %1111 = vmatprep.subr.mxu0 0.0
        %1112 = vmatpush1.msra.mxu0 %v859
        %1113 = vmatprep.subr.mxu0 0.0
        %1114 = vmatpush1.msra.mxu0 0.0
        %1115 = vmatprep.subr.mxu0 0.0
        %1116 = vmatpush1.msra.mxu0 0.0
        %1117 = vmatprep.subr.mxu0 0.0
        %1118 = vmatpush1.msra.mxu0 0.0
        %1119 = vmatprep.subr.mxu0 0.0
        %1120 = vmatpush1.msra.mxu0 0.0
        %1121 = vmatprep.subr.mxu0 0.0
        %1122 = vmatpush1.msra.mxu0 0.0
        %1123 = vmatprep.subr.mxu0 0.0
        %1124 = vmatpush1.msra.mxu0 0.0
        %1125 = vmatprep.subr.mxu0 0.0
        %1126 = vmatpush1.msra.mxu0 0.0
        %1127 = vmatprep.subr.mxu0 0.0
        %1128 = vmatpush1.msra.mxu0 0.0
        %1129 = vmatprep.subr.mxu0 0.0
        %1130 = vmatpush1.msra.mxu0 0.0
        %1131 = vmatprep.subr.mxu0 0.0
        %1132 = vmatpush1.msra.mxu0 0.0
        %1133 = vmatprep.subr.mxu0 0.0
        %1134 = vmatpush1.msra.mxu0 0.0
        %1135 = vmatprep.subr.mxu0 0.0
        %1136 = vmatpush1.msra.mxu0 0.0
        %1137 = vmatprep.subr.mxu0 0.0
        %1138 = vmatpush1.msra.mxu0 0.0
        %1139 = vmatprep.subr.mxu0 0.0
        %1140 = vmatpush1.msra.mxu0 0.0
        %1141 = vmatprep.subr.mxu0 0.0
        %1142 = vmatpush1.msra.mxu0 0.0
        %1143 = vmatprep.subr.mxu0 0.0
        %1144 = vmatpush1.msra.mxu0 0.0
        %1145 = vmatprep.subr.mxu0 0.0
        %1146 = vmatpush1.msra.mxu0 0.0
        %1147 = vmatprep.subr.mxu0 0.0
        %1148 = vmatpush1.msra.mxu0 0.0
        %1149 = vmatprep.subr.mxu0 0.0
        %1150 = vmatpush1.msra.mxu0 0.0
        %1151 = vmatprep.subr.mxu0 0.0
        %1152 = vmatpush1.msra.mxu0 0.0
        %1153 = vmatprep.subr.mxu0 0.0
        %1154 = vmatpush1.msra.mxu0 0.0
        %1155 = vmatprep.subr.mxu0 0.0
        %1156 = vmatpush1.msra.mxu0 0.0
        %1157 = vmatprep.subr.mxu0 0.0
        %1158 = vmatpush1.msra.mxu0 0.0
        %1159 = vmatprep.subr.mxu0 0.0
        %1160 = vmatpush1.msra.mxu0 0.0
        %1161 = vmatprep.subr.mxu0 0.0
        %1162 = vmatpush1.msra.mxu0 0.0
        %1163 = vmatprep.subr.mxu0 0.0
        %1164 = vmatpush1.msra.mxu0 0.0
        %1165 = vmatprep.subr.mxu0 0.0
        %1166 = vmatpush1.msra.mxu0 0.0
        %1167 = vmatprep.subr.mxu0 0.0
        %1168 = vmatpush1.msra.mxu0 0.0
        %1169 = vmatprep.subr.mxu0 0.0
        %1170 = vmatpush1.msra.mxu0 0.0
        %1171 = vmatprep.subr.mxu0 0.0
        %1172 = vmatpush1.msra.mxu0 0.0
        %1173 = vmatprep.subr.mxu0 0.0
        %1174 = vmatpush1.msra.mxu0 0.0
        %1175 = vmatprep.mubr.f32.mxu0 0.0
        %1176 = vmatmul.mubr.f32.gmra.mrb[0].mxu0 %v1109
        %v1177 = vpop.f32.mrb[0].mxu0
        %v1178 = vadd.f32 0.0, %v1177
        %v1179 = vpop.f32.mrb[0].mxu0
        %1180 = vdwg.mxu0
        %v1181 = vrcp.pop %v1031
        %v1182 = vrcp.pop %v1034
        %v1183 = vmul.f32 %v1105, %v1181
        %v1184 = vmul.f32 %v1178, %v1182
        %v1185 = vld [vmem:[%s9] sm:$0xff]
        %s1186 = scalar_lea.vmem %s3, 32
        %v1187 = vld [vmem:[%s1186] sm:$0xff]
        %v1188 = vld [vmem:[%s1186 + $0x8] sm:$0xff]
        %v1189 = vld [vmem:[%s1186 + $0x10] sm:$0xff]
        %v1190 = vld [vmem:[%s1186 + $0x18] sm:$0xff]
        %s1191 = scalar_lea.vmem %s6, 1
        %v1192 = vld [vmem:[%s1191] sm:$0x1]
        %v1194 = vlaneseq
        %v1195 = vshrl.u32 %v1194, 7
        %v1196 = vsub.s32 0, %v1195
        %v1197 = vrot.slane %v1192, %v1196
        %1199 = vmatprep.subr.mxu0 0.0
        %1200 = vmatpush1.msra.mxu0 %v1187
        %1201 = vmatprep.subr.mxu0 0.0
        %1202 = vmatpush1.msra.mxu0 %v1188
        %1203 = vmatprep.subr.mxu0 0.0
        %1204 = vmatpush1.msra.mxu0 %v1189
        %1205 = vmatprep.subr.mxu0 0.0
        %1206 = vmatpush1.msra.mxu0 %v1190
        %1207 = vmatprep.subr.mxu0 0.0
        %1208 = vmatpush1.msra.mxu0 0.0
        %1209 = vmatprep.subr.mxu0 0.0
        %1210 = vmatpush1.msra.mxu0 0.0
        %1211 = vmatprep.subr.mxu0 0.0
        %1212 = vmatpush1.msra.mxu0 0.0
        %1213 = vmatprep.subr.mxu0 0.0
        %1214 = vmatpush1.msra.mxu0 0.0
        %1215 = vmatprep.subr.mxu0 0.0
        %1216 = vmatpush1.msra.mxu0 0.0
        %1217 = vmatprep.subr.mxu0 0.0
        %1218 = vmatpush1.msra.mxu0 0.0
        %1219 = vmatprep.subr.mxu0 0.0
        %1220 = vmatpush1.msra.mxu0 0.0
        %1221 = vmatprep.subr.mxu0 0.0
        %1222 = vmatpush1.msra.mxu0 0.0
        %1223 = vmatprep.subr.mxu0 0.0
        %1224 = vmatpush1.msra.mxu0 0.0
        %1225 = vmatprep.subr.mxu0 0.0
        %1226 = vmatpush1.msra.mxu0 0.0
        %1227 = vmatprep.subr.mxu0 0.0
        %1228 = vmatpush1.msra.mxu0 0.0
        %1229 = vmatprep.subr.mxu0 0.0
        %1230 = vmatpush1.msra.mxu0 0.0
        %1231 = vmatprep.subr.mxu0 0.0
        %1232 = vmatpush1.msra.mxu0 0.0
        %1233 = vmatprep.subr.mxu0 0.0
        %1234 = vmatpush1.msra.mxu0 0.0
        %1235 = vmatprep.subr.mxu0 0.0
        %1236 = vmatpush1.msra.mxu0 0.0
        %1237 = vmatprep.subr.mxu0 0.0
        %1238 = vmatpush1.msra.mxu0 0.0
        %1239 = vmatprep.subr.mxu0 0.0
        %1240 = vmatpush1.msra.mxu0 0.0
        %1241 = vmatprep.subr.mxu0 0.0
        %1242 = vmatpush1.msra.mxu0 0.0
        %1243 = vmatprep.subr.mxu0 0.0
        %1244 = vmatpush1.msra.mxu0 0.0
        %1245 = vmatprep.subr.mxu0 0.0
        %1246 = vmatpush1.msra.mxu0 0.0
        %1247 = vmatprep.subr.mxu0 0.0
        %1248 = vmatpush1.msra.mxu0 0.0
        %1249 = vmatprep.subr.mxu0 0.0
        %1250 = vmatpush1.msra.mxu0 0.0
        %1251 = vmatprep.subr.mxu0 0.0
        %1252 = vmatpush1.msra.mxu0 0.0
        %1253 = vmatprep.subr.mxu0 0.0
        %1254 = vmatpush1.msra.mxu0 0.0
        %1255 = vmatprep.subr.mxu0 0.0
        %1256 = vmatpush1.msra.mxu0 0.0
        %1257 = vmatprep.subr.mxu0 0.0
        %1258 = vmatpush1.msra.mxu0 0.0
        %1259 = vmatprep.subr.mxu0 0.0
        %1260 = vmatpush1.msra.mxu0 0.0
        %1261 = vmatprep.subr.mxu0 0.0
        %1262 = vmatpush1.msra.mxu0 0.0
        %1263 = vmatprep.mubr.f32.mxu0 0.0
        %1264 = vmatmul.mubr.f32.gmra.mrb[0].mxu0 %v610
        %v1265 = vpop.f32.mrb[0].mxu0
        %v1266 = vadd.f32 %v1197, %v1265
        %v1267 = vpop.f32.mrb[0].mxu0
        %1268 = vmatprep.mubr.f32.mxu0 0.0
        %1269 = vmatmul.mubr.f32.gmra.mrb[0].mxu0 %v613
        %v1270 = vpop.f32.mrb[0].mxu0
        %v1271 = vadd.f32 %v1197, %v1270
        %v1272 = vpop.f32.mrb[0].mxu0
        %1273 = vdwg.mxu0
        %s1274 = scalar_lea.vmem %s4, 32
        %v1275 = vld [vmem:[%s1274] sm:$0xff]
        %v1276 = vld [vmem:[%s1274 + $0x8] sm:$0xff]
        %v1277 = vld [vmem:[%s1274 + $0x10] sm:$0xff]
        %v1278 = vld [vmem:[%s1274 + $0x18] sm:$0xff]
        %s1279 = scalar_lea.vmem %s7, 1
        %v1280 = vld [vmem:[%s1279] sm:$0x1]
        %v1282 = vlaneseq
        %v1283 = vshrl.u32 %v1282, 7
        %v1284 = vsub.s32 0, %v1283
        %v1285 = vrot.slane %v1280, %v1284
        %1287 = vmatprep.subr.mxu0 0.0
        %1288 = vmatpush1.msra.mxu0 %v1275
        %1289 = vmatprep.subr.mxu0 0.0
        %1290 = vmatpush1.msra.mxu0 %v1276
        %1291 = vmatprep.subr.mxu0 0.0
        %1292 = vmatpush1.msra.mxu0 %v1277
        %1293 = vmatprep.subr.mxu0 0.0
        %1294 = vmatpush1.msra.mxu0 %v1278
        %1295 = vmatprep.subr.mxu0 0.0
        %1296 = vmatpush1.msra.mxu0 0.0
        %1297 = vmatprep.subr.mxu0 0.0
        %1298 = vmatpush1.msra.mxu0 0.0
        %1299 = vmatprep.subr.mxu0 0.0
        %1300 = vmatpush1.msra.mxu0 0.0
        %1301 = vmatprep.subr.mxu0 0.0
        %1302 = vmatpush1.msra.mxu0 0.0
        %1303 = vmatprep.subr.mxu0 0.0
        %1304 = vmatpush1.msra.mxu0 0.0
        %1305 = vmatprep.subr.mxu0 0.0
        %1306 = vmatpush1.msra.mxu0 0.0
        %1307 = vmatprep.subr.mxu0 0.0
        %1308 = vmatpush1.msra.mxu0 0.0
        %1309 = vmatprep.subr.mxu0 0.0
        %1310 = vmatpush1.msra.mxu0 0.0
        %1311 = vmatprep.subr.mxu0 0.0
        %1312 = vmatpush1.msra.mxu0 0.0
        %1313 = vmatprep.subr.mxu0 0.0
        %1314 = vmatpush1.msra.mxu0 0.0
        %1315 = vmatprep.subr.mxu0 0.0
        %1316 = vmatpush1.msra.mxu0 0.0
        %1317 = vmatprep.subr.mxu0 0.0
        %1318 = vmatpush1.msra.mxu0 0.0
        %1319 = vmatprep.subr.mxu0 0.0
        %1320 = vmatpush1.msra.mxu0 0.0
        %1321 = vmatprep.subr.mxu0 0.0
        %1322 = vmatpush1.msra.mxu0 0.0
        %1323 = vmatprep.subr.mxu0 0.0
        %1324 = vmatpush1.msra.mxu0 0.0
        %1325 = vmatprep.subr.mxu0 0.0
        %1326 = vmatpush1.msra.mxu0 0.0
        %1327 = vmatprep.subr.mxu0 0.0
        %1328 = vmatpush1.msra.mxu0 0.0
        %1329 = vmatprep.subr.mxu0 0.0
        %1330 = vmatpush1.msra.mxu0 0.0
        %1331 = vmatprep.subr.mxu0 0.0
        %1332 = vmatpush1.msra.mxu0 0.0
        %1333 = vmatprep.subr.mxu0 0.0
        %1334 = vmatpush1.msra.mxu0 0.0
        %1335 = vmatprep.subr.mxu0 0.0
        %1336 = vmatpush1.msra.mxu0 0.0
        %1337 = vmatprep.subr.mxu0 0.0
        %1338 = vmatpush1.msra.mxu0 0.0
        %1339 = vmatprep.subr.mxu0 0.0
        %1340 = vmatpush1.msra.mxu0 0.0
        %1341 = vmatprep.subr.mxu0 0.0
        %1342 = vmatpush1.msra.mxu0 0.0
        %1343 = vmatprep.subr.mxu0 0.0
        %1344 = vmatpush1.msra.mxu0 0.0
        %1345 = vmatprep.subr.mxu0 0.0
        %1346 = vmatpush1.msra.mxu0 0.0
        %1347 = vmatprep.subr.mxu0 0.0
        %1348 = vmatpush1.msra.mxu0 0.0
        %1349 = vmatprep.subr.mxu0 0.0
        %1350 = vmatpush1.msra.mxu0 0.0
        %1351 = vmatprep.mubr.f32.mxu0 0.0
        %1352 = vmatmul.mubr.f32.gmra.mrb[0].mxu0 %v610
        %v1353 = vpop.f32.mrb[0].mxu0
        %v1354 = vadd.f32 %v1285, %v1353
        %v1355 = vpop.f32.mrb[0].mxu0
        %1356 = vmatprep.mubr.f32.mxu0 0.0
        %1357 = vmatmul.mubr.f32.gmra.mrb[0].mxu0 %v613
        %v1358 = vpop.f32.mrb[0].mxu0
        %v1359 = vadd.f32 %v1285, %v1358
        %v1360 = vpop.f32.mrb[0].mxu0
        %1361 = vdwg.mxu0
        %s1362 = scalar_lea.vmem %s5, 32
        %v1363 = vld [vmem:[%s1362] sm:$0xff]
        %v1364 = vld [vmem:[%s1362 + $0x8] sm:$0xff]
        %v1365 = vld [vmem:[%s1362 + $0x10] sm:$0xff]
        %v1366 = vld [vmem:[%s1362 + $0x18] sm:$0xff]
        %s1367 = scalar_lea.vmem %s8, 1
        %v1368 = vld [vmem:[%s1367] sm:$0x1]
        %v1370 = vlaneseq
        %v1371 = vshrl.u32 %v1370, 7
        %v1372 = vsub.s32 0, %v1371
        %v1373 = vrot.slane %v1368, %v1372
        %1375 = vmatprep.subr.mxu0 0.0
        %1376 = vmatpush1.msra.mxu0 %v1363
        %1377 = vmatprep.subr.mxu0 0.0
        %1378 = vmatpush1.msra.mxu0 %v1364
        %1379 = vmatprep.subr.mxu0 0.0
        %1380 = vmatpush1.msra.mxu0 %v1365
        %1381 = vmatprep.subr.mxu0 0.0
        %1382 = vmatpush1.msra.mxu0 %v1366
        %1383 = vmatprep.subr.mxu0 0.0
        %1384 = vmatpush1.msra.mxu0 0.0
        %1385 = vmatprep.subr.mxu0 0.0
        %1386 = vmatpush1.msra.mxu0 0.0
        %1387 = vmatprep.subr.mxu0 0.0
        %1388 = vmatpush1.msra.mxu0 0.0
        %1389 = vmatprep.subr.mxu0 0.0
        %1390 = vmatpush1.msra.mxu0 0.0
        %1391 = vmatprep.subr.mxu0 0.0
        %1392 = vmatpush1.msra.mxu0 0.0
        %1393 = vmatprep.subr.mxu0 0.0
        %1394 = vmatpush1.msra.mxu0 0.0
        %1395 = vmatprep.subr.mxu0 0.0
        %1396 = vmatpush1.msra.mxu0 0.0
        %1397 = vmatprep.subr.mxu0 0.0
        %1398 = vmatpush1.msra.mxu0 0.0
        %1399 = vmatprep.subr.mxu0 0.0
        %1400 = vmatpush1.msra.mxu0 0.0
        %1401 = vmatprep.subr.mxu0 0.0
        %1402 = vmatpush1.msra.mxu0 0.0
        %1403 = vmatprep.subr.mxu0 0.0
        %1404 = vmatpush1.msra.mxu0 0.0
        %1405 = vmatprep.subr.mxu0 0.0
        %1406 = vmatpush1.msra.mxu0 0.0
        %1407 = vmatprep.subr.mxu0 0.0
        %1408 = vmatpush1.msra.mxu0 0.0
        %1409 = vmatprep.subr.mxu0 0.0
        %1410 = vmatpush1.msra.mxu0 0.0
        %1411 = vmatprep.subr.mxu0 0.0
        %1412 = vmatpush1.msra.mxu0 0.0
        %1413 = vmatprep.subr.mxu0 0.0
        %1414 = vmatpush1.msra.mxu0 0.0
        %1415 = vmatprep.subr.mxu0 0.0
        %1416 = vmatpush1.msra.mxu0 0.0
        %1417 = vmatprep.subr.mxu0 0.0
        %1418 = vmatpush1.msra.mxu0 0.0
        %1419 = vmatprep.subr.mxu0 0.0
        %1420 = vmatpush1.msra.mxu0 0.0
        %1421 = vmatprep.subr.mxu0 0.0
        %1422 = vmatpush1.msra.mxu0 0.0
        %1423 = vmatprep.subr.mxu0 0.0
        %1424 = vmatpush1.msra.mxu0 0.0
        %1425 = vmatprep.subr.mxu0 0.0
        %1426 = vmatpush1.msra.mxu0 0.0
        %1427 = vmatprep.subr.mxu0 0.0
        %1428 = vmatpush1.msra.mxu0 0.0
        %1429 = vmatprep.subr.mxu0 0.0
        %1430 = vmatpush1.msra.mxu0 0.0
        %1431 = vmatprep.subr.mxu0 0.0
        %1432 = vmatpush1.msra.mxu0 0.0
        %1433 = vmatprep.subr.mxu0 0.0
        %1434 = vmatpush1.msra.mxu0 0.0
        %1435 = vmatprep.subr.mxu0 0.0
        %1436 = vmatpush1.msra.mxu0 0.0
        %1437 = vmatprep.subr.mxu0 0.0
        %1438 = vmatpush1.msra.mxu0 0.0
        %1439 = vmatprep.mubr.f32.mxu0 0.0
        %1440 = vmatmul.mubr.f32.gmra.mrb[0].mxu0 %v610
        %v1441 = vpop.f32.mrb[0].mxu0
        %v1442 = vadd.f32 %v1373, %v1441
        %v1443 = vpop.f32.mrb[0].mxu0
        %1444 = vmatprep.mubr.f32.mxu0 0.0
        %1445 = vmatmul.mubr.f32.gmra.mrb[0].mxu0 %v613
        %v1446 = vpop.f32.mrb[0].mxu0
        %v1447 = vadd.f32 %v1373, %v1446
        %v1448 = vpop.f32.mrb[0].mxu0
        %1449 = vdwg.mxu0
        %v1450 = vmul.f32 %v1266, 0.35355338
        %v1451 = vmul.f32 %v1271, 0.35355338
        %v1453 = vsel %vm864, %v1450, 0
        %v1456 = vsel %vm864, %v1354, 0
        %1458 = vmatprep.subr.mxu0 0.0
        %1459 = vmatpush1.xpose.msra.mxu0 %v1456
        %1460 = vmatprep.subr.mxu0 0.0
        %1461 = vmatpush1.xpose.msra.mxu0 0.0
        %1462 = vmatprep.subr.mxu0 0.0
        %1463 = vmatpush1.xpose.msra.mxu0 0.0
        %1464 = vmatprep.subr.mxu0 0.0
        %1465 = vmatpush1.xpose.msra.mxu0 0.0
        %1466 = vmatprep.subr.mxu0 0.0
        %1467 = vmatpush1.xpose.msra.mxu0 0.0
        %1468 = vmatprep.subr.mxu0 0.0
        %1469 = vmatpush1.xpose.msra.mxu0 0.0
        %1470 = vmatprep.subr.mxu0 0.0
        %1471 = vmatpush1.xpose.msra.mxu0 0.0
        %1472 = vmatprep.subr.mxu0 0.0
        %1473 = vmatpush1.xpose.msra.mxu0 0.0
        %1474 = vmatprep.subr.mxu0 0.0
        %1475 = vmatpush1.xpose.msra.mxu0 0.0
        %1476 = vmatprep.subr.mxu0 0.0
        %1477 = vmatpush1.xpose.msra.mxu0 0.0
        %1478 = vmatprep.subr.mxu0 0.0
        %1479 = vmatpush1.xpose.msra.mxu0 0.0
        %1480 = vmatprep.subr.mxu0 0.0
        %1481 = vmatpush1.xpose.msra.mxu0 0.0
        %1482 = vmatprep.subr.mxu0 0.0
        %1483 = vmatpush1.xpose.msra.mxu0 0.0
        %1484 = vmatprep.subr.mxu0 0.0
        %1485 = vmatpush1.xpose.msra.mxu0 0.0
        %1486 = vmatprep.subr.mxu0 0.0
        %1487 = vmatpush1.xpose.msra.mxu0 0.0
        %1488 = vmatprep.subr.mxu0 0.0
        %1489 = vmatpush1.xpose.msra.mxu0 0.0
        %1490 = vmatprep.subr.mxu0 0.0
        %1491 = vmatpush1.xpose.msra.mxu0 0.0
        %1492 = vmatprep.subr.mxu0 0.0
        %1493 = vmatpush1.xpose.msra.mxu0 0.0
        %1494 = vmatprep.subr.mxu0 0.0
        %1495 = vmatpush1.xpose.msra.mxu0 0.0
        %1496 = vmatprep.subr.mxu0 0.0
        %1497 = vmatpush1.xpose.msra.mxu0 0.0
        %1498 = vmatprep.subr.mxu0 0.0
        %1499 = vmatpush1.xpose.msra.mxu0 0.0
        %1500 = vmatprep.subr.mxu0 0.0
        %1501 = vmatpush1.xpose.msra.mxu0 0.0
        %1502 = vmatprep.subr.mxu0 0.0
        %1503 = vmatpush1.xpose.msra.mxu0 0.0
        %1504 = vmatprep.subr.mxu0 0.0
        %1505 = vmatpush1.xpose.msra.mxu0 0.0
        %1506 = vmatprep.subr.mxu0 0.0
        %1507 = vmatpush1.xpose.msra.mxu0 0.0
        %1508 = vmatprep.subr.mxu0 0.0
        %1509 = vmatpush1.xpose.msra.mxu0 0.0
        %1510 = vmatprep.subr.mxu0 0.0
        %1511 = vmatpush1.xpose.msra.mxu0 0.0
        %1512 = vmatprep.subr.mxu0 0.0
        %1513 = vmatpush1.xpose.msra.mxu0 0.0
        %1514 = vmatprep.subr.mxu0 0.0
        %1515 = vmatpush1.xpose.msra.mxu0 0.0
        %1516 = vmatprep.subr.mxu0 0.0
        %1517 = vmatpush1.xpose.msra.mxu0 0.0
        %1518 = vmatprep.subr.mxu0 0.0
        %1519 = vmatpush1.xpose.msra.mxu0 0.0
        %1520 = vmatprep.subr.mxu0 0.0
        %1521 = vmatpush1.xpose.msra.mxu0 0.0
        %1522 = vmatprep.mubr.f32.mxu0 0.0
        %1523 = vmatmul.mubr.f32.gmra.mrb[0].mxu0 %v1453
        %v1524 = vpop.f32.mrb[0].mxu0
        %v1525 = vadd.f32 0.0, %v1524
        %v1526 = vpop.f32.mrb[0].mxu0
        %1527 = vdwg.mxu0
        %v1529 = vsel %vm864, %v1451, 0
        %v1532 = vsel %vm864, %v1359, 0
        %1534 = vmatprep.subr.mxu0 0.0
        %1535 = vmatpush1.xpose.msra.mxu0 %v1532
        %1536 = vmatprep.subr.mxu0 0.0
        %1537 = vmatpush1.xpose.msra.mxu0 0.0
        %1538 = vmatprep.subr.mxu0 0.0
        %1539 = vmatpush1.xpose.msra.mxu0 0.0
        %1540 = vmatprep.subr.mxu0 0.0
        %1541 = vmatpush1.xpose.msra.mxu0 0.0
        %1542 = vmatprep.subr.mxu0 0.0
        %1543 = vmatpush1.xpose.msra.mxu0 0.0
        %1544 = vmatprep.subr.mxu0 0.0
        %1545 = vmatpush1.xpose.msra.mxu0 0.0
        %1546 = vmatprep.subr.mxu0 0.0
        %1547 = vmatpush1.xpose.msra.mxu0 0.0
        %1548 = vmatprep.subr.mxu0 0.0
        %1549 = vmatpush1.xpose.msra.mxu0 0.0
        %1550 = vmatprep.subr.mxu0 0.0
        %1551 = vmatpush1.xpose.msra.mxu0 0.0
        %1552 = vmatprep.subr.mxu0 0.0
        %1553 = vmatpush1.xpose.msra.mxu0 0.0
        %1554 = vmatprep.subr.mxu0 0.0
        %1555 = vmatpush1.xpose.msra.mxu0 0.0
        %1556 = vmatprep.subr.mxu0 0.0
        %1557 = vmatpush1.xpose.msra.mxu0 0.0
        %1558 = vmatprep.subr.mxu0 0.0
        %1559 = vmatpush1.xpose.msra.mxu0 0.0
        %1560 = vmatprep.subr.mxu0 0.0
        %1561 = vmatpush1.xpose.msra.mxu0 0.0
        %1562 = vmatprep.subr.mxu0 0.0
        %1563 = vmatpush1.xpose.msra.mxu0 0.0
        %1564 = vmatprep.subr.mxu0 0.0
        %1565 = vmatpush1.xpose.msra.mxu0 0.0
        %1566 = vmatprep.subr.mxu0 0.0
        %1567 = vmatpush1.xpose.msra.mxu0 0.0
        %1568 = vmatprep.subr.mxu0 0.0
        %1569 = vmatpush1.xpose.msra.mxu0 0.0
        %1570 = vmatprep.subr.mxu0 0.0
        %1571 = vmatpush1.xpose.msra.mxu0 0.0
        %1572 = vmatprep.subr.mxu0 0.0
        %1573 = vmatpush1.xpose.msra.mxu0 0.0
        %1574 = vmatprep.subr.mxu0 0.0
        %1575 = vmatpush1.xpose.msra.mxu0 0.0
        %1576 = vmatprep.subr.mxu0 0.0
        %1577 = vmatpush1.xpose.msra.mxu0 0.0
        %1578 = vmatprep.subr.mxu0 0.0
        %1579 = vmatpush1.xpose.msra.mxu0 0.0
        %1580 = vmatprep.subr.mxu0 0.0
        %1581 = vmatpush1.xpose.msra.mxu0 0.0
        %1582 = vmatprep.subr.mxu0 0.0
        %1583 = vmatpush1.xpose.msra.mxu0 0.0
        %1584 = vmatprep.subr.mxu0 0.0
        %1585 = vmatpush1.xpose.msra.mxu0 0.0
        %1586 = vmatprep.subr.mxu0 0.0
        %1587 = vmatpush1.xpose.msra.mxu0 0.0
        %1588 = vmatprep.subr.mxu0 0.0
        %1589 = vmatpush1.xpose.msra.mxu0 0.0
        %1590 = vmatprep.subr.mxu0 0.0
        %1591 = vmatpush1.xpose.msra.mxu0 0.0
        %1592 = vmatprep.subr.mxu0 0.0
        %1593 = vmatpush1.xpose.msra.mxu0 0.0
        %1594 = vmatprep.subr.mxu0 0.0
        %1595 = vmatpush1.xpose.msra.mxu0 0.0
        %1596 = vmatprep.subr.mxu0 0.0
        %1597 = vmatpush1.xpose.msra.mxu0 0.0
        %1598 = vmatprep.mubr.f32.mxu0 0.0
        %1599 = vmatmul.mubr.f32.gmra.mrb[0].mxu0 %v1529
        %v1600 = vpop.f32.mrb[0].mxu0
        %v1601 = vadd.f32 0.0, %v1600
        %v1602 = vpop.f32.mrb[0].mxu0
        %1603 = vdwg.mxu0
        %v1604 = vsel %vm864, %v1525, -inf
        %1605 = vmax.xlane.f32.xlu0 %v1604
        %v1606 = vpop.xlane.xlu0 %1605
        %v1607 = vsel %vm864, %v1601, -inf
        %1608 = vmax.xlane.f32.xlu0 %v1607
        %v1609 = vpop.xlane.xlu0 %1608
        %v1610 = vsub.f32 %v1525, %v1606
        %v1611 = vsub.f32 %v1601, %v1609
        %v1612 = vmul.f32 %v1610, 1.442695
        %v1613 = vpow.pop %v1612
        %v1614 = vmul.f32 %v1611, 1.442695
        %v1615 = vpow.pop %v1614
        %v1616 = vsel %vm864, %v1613, 0.0
        %1617 = vadd.xlane.f32.xlu0 %v1616
        %v1618 = vpop.xlane.xlu0 %1617
        %v1619 = vsel %vm864, %v1615, 0.0
        %1620 = vadd.xlane.f32.xlu0 %v1619
        %v1621 = vpop.xlane.xlu0 %1620
        %v1623 = vsel %vm864, %v1613, 0
        %1625 = vmatprep.subr.mxu0 0.0
        %1626 = vmatpush1.msra.mxu0 %v1442
        %1627 = vmatprep.subr.mxu0 0.0
        %1628 = vmatpush1.msra.mxu0 0.0
        %1629 = vmatprep.subr.mxu0 0.0
        %1630 = vmatpush1.msra.mxu0 0.0
        %1631 = vmatprep.subr.mxu0 0.0
        %1632 = vmatpush1.msra.mxu0 0.0
        %1633 = vmatprep.subr.mxu0 0.0
        %1634 = vmatpush1.msra.mxu0 0.0
        %1635 = vmatprep.subr.mxu0 0.0
        %1636 = vmatpush1.msra.mxu0 0.0
        %1637 = vmatprep.subr.mxu0 0.0
        %1638 = vmatpush1.msra.mxu0 0.0
        %1639 = vmatprep.subr.mxu0 0.0
        %1640 = vmatpush1.msra.mxu0 0.0
        %1641 = vmatprep.subr.mxu0 0.0
        %1642 = vmatpush1.msra.mxu0 0.0
        %1643 = vmatprep.subr.mxu0 0.0
        %1644 = vmatpush1.msra.mxu0 0.0
        %1645 = vmatprep.subr.mxu0 0.0
        %1646 = vmatpush1.msra.mxu0 0.0
        %1647 = vmatprep.subr.mxu0 0.0
        %1648 = vmatpush1.msra.mxu0 0.0
        %1649 = vmatprep.subr.mxu0 0.0
        %1650 = vmatpush1.msra.mxu0 0.0
        %1651 = vmatprep.subr.mxu0 0.0
        %1652 = vmatpush1.msra.mxu0 0.0
        %1653 = vmatprep.subr.mxu0 0.0
        %1654 = vmatpush1.msra.mxu0 0.0
        %1655 = vmatprep.subr.mxu0 0.0
        %1656 = vmatpush1.msra.mxu0 0.0
        %1657 = vmatprep.subr.mxu0 0.0
        %1658 = vmatpush1.msra.mxu0 0.0
        %1659 = vmatprep.subr.mxu0 0.0
        %1660 = vmatpush1.msra.mxu0 0.0
        %1661 = vmatprep.subr.mxu0 0.0
        %1662 = vmatpush1.msra.mxu0 0.0
        %1663 = vmatprep.subr.mxu0 0.0
        %1664 = vmatpush1.msra.mxu0 0.0
        %1665 = vmatprep.subr.mxu0 0.0
        %1666 = vmatpush1.msra.mxu0 0.0
        %1667 = vmatprep.subr.mxu0 0.0
        %1668 = vmatpush1.msra.mxu0 0.0
        %1669 = vmatprep.subr.mxu0 0.0
        %1670 = vmatpush1.msra.mxu0 0.0
        %1671 = vmatprep.subr.mxu0 0.0
        %1672 = vmatpush1.msra.mxu0 0.0
        %1673 = vmatprep.subr.mxu0 0.0
        %1674 = vmatpush1.msra.mxu0 0.0
        %1675 = vmatprep.subr.mxu0 0.0
        %1676 = vmatpush1.msra.mxu0 0.0
        %1677 = vmatprep.subr.mxu0 0.0
        %1678 = vmatpush1.msra.mxu0 0.0
        %1679 = vmatprep.subr.mxu0 0.0
        %1680 = vmatpush1.msra.mxu0 0.0
        %1681 = vmatprep.subr.mxu0 0.0
        %1682 = vmatpush1.msra.mxu0 0.0
        %1683 = vmatprep.subr.mxu0 0.0
        %1684 = vmatpush1.msra.mxu0 0.0
        %1685 = vmatprep.subr.mxu0 0.0
        %1686 = vmatpush1.msra.mxu0 0.0
        %1687 = vmatprep.subr.mxu0 0.0
        %1688 = vmatpush1.msra.mxu0 0.0
        %1689 = vmatprep.mubr.f32.mxu0 0.0
        %1690 = vmatmul.mubr.f32.gmra.mrb[0].mxu0 %v1623
        %v1691 = vpop.f32.mrb[0].mxu0
        %v1692 = vadd.f32 0.0, %v1691
        %v1693 = vpop.f32.mrb[0].mxu0
        %1694 = vdwg.mxu0
        %v1696 = vsel %vm864, %v1615, 0
        %1698 = vmatprep.subr.mxu0 0.0
        %1699 = vmatpush1.msra.mxu0 %v1447
        %1700 = vmatprep.subr.mxu0 0.0
        %1701 = vmatpush1.msra.mxu0 0.0
        %1702 = vmatprep.subr.mxu0 0.0
        %1703 = vmatpush1.msra.mxu0 0.0
        %1704 = vmatprep.subr.mxu0 0.0
        %1705 = vmatpush1.msra.mxu0 0.0
        %1706 = vmatprep.subr.mxu0 0.0
        %1707 = vmatpush1.msra.mxu0 0.0
        %1708 = vmatprep.subr.mxu0 0.0
        %1709 = vmatpush1.msra.mxu0 0.0
        %1710 = vmatprep.subr.mxu0 0.0
        %1711 = vmatpush1.msra.mxu0 0.0
        %1712 = vmatprep.subr.mxu0 0.0
        %1713 = vmatpush1.msra.mxu0 0.0
        %1714 = vmatprep.subr.mxu0 0.0
        %1715 = vmatpush1.msra.mxu0 0.0
        %1716 = vmatprep.subr.mxu0 0.0
        %1717 = vmatpush1.msra.mxu0 0.0
        %1718 = vmatprep.subr.mxu0 0.0
        %1719 = vmatpush1.msra.mxu0 0.0
        %1720 = vmatprep.subr.mxu0 0.0
        %1721 = vmatpush1.msra.mxu0 0.0
        %1722 = vmatprep.subr.mxu0 0.0
        %1723 = vmatpush1.msra.mxu0 0.0
        %1724 = vmatprep.subr.mxu0 0.0
        %1725 = vmatpush1.msra.mxu0 0.0
        %1726 = vmatprep.subr.mxu0 0.0
        %1727 = vmatpush1.msra.mxu0 0.0
        %1728 = vmatprep.subr.mxu0 0.0
        %1729 = vmatpush1.msra.mxu0 0.0
        %1730 = vmatprep.subr.mxu0 0.0
        %1731 = vmatpush1.msra.mxu0 0.0
        %1732 = vmatprep.subr.mxu0 0.0
        %1733 = vmatpush1.msra.mxu0 0.0
        %1734 = vmatprep.subr.mxu0 0.0
        %1735 = vmatpush1.msra.mxu0 0.0
        %1736 = vmatprep.subr.mxu0 0.0
        %1737 = vmatpush1.msra.mxu0 0.0
        %1738 = vmatprep.subr.mxu0 0.0
        %1739 = vmatpush1.msra.mxu0 0.0
        %1740 = vmatprep.subr.mxu0 0.0
        %1741 = vmatpush1.msra.mxu0 0.0
        %1742 = vmatprep.subr.mxu0 0.0
        %1743 = vmatpush1.msra.mxu0 0.0
        %1744 = vmatprep.subr.mxu0 0.0
        %1745 = vmatpush1.msra.mxu0 0.0
        %1746 = vmatprep.subr.mxu0 0.0
        %1747 = vmatpush1.msra.mxu0 0.0
        %1748 = vmatprep.subr.mxu0 0.0
        %1749 = vmatpush1.msra.mxu0 0.0
        %1750 = vmatprep.subr.mxu0 0.0
        %1751 = vmatpush1.msra.mxu0 0.0
        %1752 = vmatprep.subr.mxu0 0.0
        %1753 = vmatpush1.msra.mxu0 0.0
        %1754 = vmatprep.subr.mxu0 0.0
        %1755 = vmatpush1.msra.mxu0 0.0
        %1756 = vmatprep.subr.mxu0 0.0
        %1757 = vmatpush1.msra.mxu0 0.0
        %1758 = vmatprep.subr.mxu0 0.0
        %1759 = vmatpush1.msra.mxu0 0.0
        %1760 = vmatprep.subr.mxu0 0.0
        %1761 = vmatpush1.msra.mxu0 0.0
        %1762 = vmatprep.mubr.f32.mxu0 0.0
        %1763 = vmatmul.mubr.f32.gmra.mrb[0].mxu0 %v1696
        %v1764 = vpop.f32.mrb[0].mxu0
        %v1765 = vadd.f32 0.0, %v1764
        %v1766 = vpop.f32.mrb[0].mxu0
        %1767 = vdwg.mxu0
        %v1768 = vrcp.pop %v1618
        %v1769 = vrcp.pop %v1621
        %v1770 = vmul.f32 %v1692, %v1768
        %v1771 = vmul.f32 %v1765, %v1769
        %s1772 = scalar_lea.vmem %s9, 8
        %v1773 = vld [vmem:[%s1772] sm:$0xff]
        %v1775 = vsel %vm864, %v1770, 0
        %v1778 = vsel %vm864, %v1771, 0
        %1780 = vmatprep.subr.mxu0 0.0
        %1781 = vmatpush1.msra.mxu0 %v1773
        %1782 = vmatprep.subr.mxu0 0.0
        %1783 = vmatpush1.msra.mxu0 0.0
        %1784 = vmatprep.subr.mxu0 0.0
        %1785 = vmatpush1.msra.mxu0 0.0
        %1786 = vmatprep.subr.mxu0 0.0
        %1787 = vmatpush1.msra.mxu0 0.0
        %1788 = vmatprep.subr.mxu0 0.0
        %1789 = vmatpush1.msra.mxu0 0.0
        %1790 = vmatprep.subr.mxu0 0.0
        %1791 = vmatpush1.msra.mxu0 0.0
        %1792 = vmatprep.subr.mxu0 0.0
        %1793 = vmatpush1.msra.mxu0 0.0
        %1794 = vmatprep.subr.mxu0 0.0
        %1795 = vmatpush1.msra.mxu0 0.0
        %1796 = vmatprep.subr.mxu0 0.0
        %1797 = vmatpush1.msra.mxu0 0.0
        %1798 = vmatprep.subr.mxu0 0.0
        %1799 = vmatpush1.msra.mxu0 0.0
        %1800 = vmatprep.subr.mxu0 0.0
        %1801 = vmatpush1.msra.mxu0 0.0
        %1802 = vmatprep.subr.mxu0 0.0
        %1803 = vmatpush1.msra.mxu0 0.0
        %1804 = vmatprep.subr.mxu0 0.0
        %1805 = vmatpush1.msra.mxu0 0.0
        %1806 = vmatprep.subr.mxu0 0.0
        %1807 = vmatpush1.msra.mxu0 0.0
        %1808 = vmatprep.subr.mxu0 0.0
        %1809 = vmatpush1.msra.mxu0 0.0
        %1810 = vmatprep.subr.mxu0 0.0
        %1811 = vmatpush1.msra.mxu0 0.0
        %1812 = vmatprep.subr.mxu0 0.0
        %1813 = vmatpush1.msra.mxu0 0.0
        %1814 = vmatprep.subr.mxu0 0.0
        %1815 = vmatpush1.msra.mxu0 0.0
        %1816 = vmatprep.subr.mxu0 0.0
        %1817 = vmatpush1.msra.mxu0 0.0
        %1818 = vmatprep.subr.mxu0 0.0
        %1819 = vmatpush1.msra.mxu0 0.0
        %1820 = vmatprep.subr.mxu0 0.0
        %1821 = vmatpush1.msra.mxu0 0.0
        %1822 = vmatprep.subr.mxu0 0.0
        %1823 = vmatpush1.msra.mxu0 0.0
        %1824 = vmatprep.subr.mxu0 0.0
        %1825 = vmatpush1.msra.mxu0 0.0
        %1826 = vmatprep.subr.mxu0 0.0
        %1827 = vmatpush1.msra.mxu0 0.0
        %1828 = vmatprep.subr.mxu0 0.0
        %1829 = vmatpush1.msra.mxu0 0.0
        %1830 = vmatprep.subr.mxu0 0.0
        %1831 = vmatpush1.msra.mxu0 0.0
        %1832 = vmatprep.subr.mxu0 0.0
        %1833 = vmatpush1.msra.mxu0 0.0
        %1834 = vmatprep.subr.mxu0 0.0
        %1835 = vmatpush1.msra.mxu0 0.0
        %1836 = vmatprep.subr.mxu0 0.0
        %1837 = vmatpush1.msra.mxu0 0.0
        %1838 = vmatprep.subr.mxu0 0.0
        %1839 = vmatpush1.msra.mxu0 0.0
        %1840 = vmatprep.subr.mxu0 0.0
        %1841 = vmatpush1.msra.mxu0 0.0
        %1842 = vmatprep.subr.mxu0 0.0
        %1843 = vmatpush1.msra.mxu0 0.0
        %1844 = vmatprep.mubr.f32.mxu0 0.0
        %1845 = vmatmul.mubr.f32.gmra.mrb[0].mxu0 %v1775
        %v1846 = vpop.f32.mrb[0].mxu0
        %v1847 = vadd.f32 0.0, %v1846
        %v1848 = vpop.f32.mrb[0].mxu0
        %1849 = vmatprep.mubr.f32.mxu0 0.0
        %1850 = vmatmul.mubr.f32.gmra.mrb[0].mxu0 %v1778
        %v1851 = vpop.f32.mrb[0].mxu0
        %v1852 = vadd.f32 0.0, %v1851
        %v1853 = vpop.f32.mrb[0].mxu0
        %1854 = vdwg.mxu0
        %v1856 = vsel %vm864, %v1183, 0
        %v1859 = vsel %vm864, %v1184, 0
        %1861 = vmatprep.subr.mxu0 0.0
        %1862 = vmatpush1.msra.mxu0 %v1185
        %1863 = vmatprep.subr.mxu0 0.0
        %1864 = vmatpush1.msra.mxu0 0.0
        %1865 = vmatprep.subr.mxu0 0.0
        %1866 = vmatpush1.msra.mxu0 0.0
        %1867 = vmatprep.subr.mxu0 0.0
        %1868 = vmatpush1.msra.mxu0 0.0
        %1869 = vmatprep.subr.mxu0 0.0
        %1870 = vmatpush1.msra.mxu0 0.0
        %1871 = vmatprep.subr.mxu0 0.0
        %1872 = vmatpush1.msra.mxu0 0.0
        %1873 = vmatprep.subr.mxu0 0.0
        %1874 = vmatpush1.msra.mxu0 0.0
        %1875 = vmatprep.subr.mxu0 0.0
        %1876 = vmatpush1.msra.mxu0 0.0
        %1877 = vmatprep.subr.mxu0 0.0
        %1878 = vmatpush1.msra.mxu0 0.0
        %1879 = vmatprep.subr.mxu0 0.0
        %1880 = vmatpush1.msra.mxu0 0.0
        %1881 = vmatprep.subr.mxu0 0.0
        %1882 = vmatpush1.msra.mxu0 0.0
        %1883 = vmatprep.subr.mxu0 0.0
        %1884 = vmatpush1.msra.mxu0 0.0
        %1885 = vmatprep.subr.mxu0 0.0
        %1886 = vmatpush1.msra.mxu0 0.0
        %1887 = vmatprep.subr.mxu0 0.0
        %1888 = vmatpush1.msra.mxu0 0.0
        %1889 = vmatprep.subr.mxu0 0.0
        %1890 = vmatpush1.msra.mxu0 0.0
        %1891 = vmatprep.subr.mxu0 0.0
        %1892 = vmatpush1.msra.mxu0 0.0
        %1893 = vmatprep.subr.mxu0 0.0
        %1894 = vmatpush1.msra.mxu0 0.0
        %1895 = vmatprep.subr.mxu0 0.0
        %1896 = vmatpush1.msra.mxu0 0.0
        %1897 = vmatprep.subr.mxu0 0.0
        %1898 = vmatpush1.msra.mxu0 0.0
        %1899 = vmatprep.subr.mxu0 0.0
        %1900 = vmatpush1.msra.mxu0 0.0
        %1901 = vmatprep.subr.mxu0 0.0
        %1902 = vmatpush1.msra.mxu0 0.0
        %1903 = vmatprep.subr.mxu0 0.0
        %1904 = vmatpush1.msra.mxu0 0.0
        %1905 = vmatprep.subr.mxu0 0.0
        %1906 = vmatpush1.msra.mxu0 0.0
        %1907 = vmatprep.subr.mxu0 0.0
        %1908 = vmatpush1.msra.mxu0 0.0
        %1909 = vmatprep.subr.mxu0 0.0
        %1910 = vmatpush1.msra.mxu0 0.0
        %1911 = vmatprep.subr.mxu0 0.0
        %1912 = vmatpush1.msra.mxu0 0.0
        %1913 = vmatprep.subr.mxu0 0.0
        %1914 = vmatpush1.msra.mxu0 0.0
        %1915 = vmatprep.subr.mxu0 0.0
        %1916 = vmatpush1.msra.mxu0 0.0
        %1917 = vmatprep.subr.mxu0 0.0
        %1918 = vmatpush1.msra.mxu0 0.0
        %1919 = vmatprep.subr.mxu0 0.0
        %1920 = vmatpush1.msra.mxu0 0.0
        %1921 = vmatprep.subr.mxu0 0.0
        %1922 = vmatpush1.msra.mxu0 0.0
        %1923 = vmatprep.subr.mxu0 0.0
        %1924 = vmatpush1.msra.mxu0 0.0
        %1925 = vmatprep.mubr.f32.mxu0 0.0
        %1926 = vmatmul.mubr.f32.gmra.mrb[0].mxu0 %v1856
        %v1927 = vpop.f32.mrb[0].mxu0
        %v1928 = vadd.f32 %v1847, %v1927
        %v1929 = vpop.f32.mrb[0].mxu0
        %1930 = vmatprep.mubr.f32.mxu0 0.0
        %1931 = vmatmul.mubr.f32.gmra.mrb[0].mxu0 %v1859
        %v1932 = vpop.f32.mrb[0].mxu0
        %v1933 = vadd.f32 %v1852, %v1932
        %v1934 = vpop.f32.mrb[0].mxu0
        %1935 = vdwg.mxu0
        %s1936 = scalar_lea.vmem %s3, 64
        %v1937 = vld [vmem:[%s1936] sm:$0xff]
        %v1938 = vld [vmem:[%s1936 + $0x8] sm:$0xff]
        %v1939 = vld [vmem:[%s1936 + $0x10] sm:$0xff]
        %v1940 = vld [vmem:[%s1936 + $0x18] sm:$0xff]
        %s1941 = scalar_lea.vmem %s6, 2
        %v1942 = vld [vmem:[%s1941] sm:$0x1]
        %v1944 = vlaneseq
        %v1945 = vshrl.u32 %v1944, 7
        %v1946 = vsub.s32 0, %v1945
        %v1947 = vrot.slane %v1942, %v1946
        %1949 = vmatprep.subr.mxu0 0.0
        %1950 = vmatpush1.msra.mxu0 %v1937
        %1951 = vmatprep.subr.mxu0 0.0
        %1952 = vmatpush1.msra.mxu0 %v1938
        %1953 = vmatprep.subr.mxu0 0.0
        %1954 = vmatpush1.msra.mxu0 %v1939
        %1955 = vmatprep.subr.mxu0 0.0
        %1956 = vmatpush1.msra.mxu0 %v1940
        %1957 = vmatprep.subr.mxu0 0.0
        %1958 = vmatpush1.msra.mxu0 0.0
        %1959 = vmatprep.subr.mxu0 0.0
        %1960 = vmatpush1.msra.mxu0 0.0
        %1961 = vmatprep.subr.mxu0 0.0
        %1962 = vmatpush1.msra.mxu0 0.0
        %1963 = vmatprep.subr.mxu0 0.0
        %1964 = vmatpush1.msra.mxu0 0.0
        %1965 = vmatprep.subr.mxu0 0.0
        %1966 = vmatpush1.msra.mxu0 0.0
        %1967 = vmatprep.subr.mxu0 0.0
        %1968 = vmatpush1.msra.mxu0 0.0
        %1969 = vmatprep.subr.mxu0 0.0
        %1970 = vmatpush1.msra.mxu0 0.0
        %1971 = vmatprep.subr.mxu0 0.0
        %1972 = vmatpush1.msra.mxu0 0.0
        %1973 = vmatprep.subr.mxu0 0.0
        %1974 = vmatpush1.msra.mxu0 0.0
        %1975 = vmatprep.subr.mxu0 0.0
        %1976 = vmatpush1.msra.mxu0 0.0
        %1977 = vmatprep.subr.mxu0 0.0
        %1978 = vmatpush1.msra.mxu0 0.0
        %1979 = vmatprep.subr.mxu0 0.0
        %1980 = vmatpush1.msra.mxu0 0.0
        %1981 = vmatprep.subr.mxu0 0.0
        %1982 = vmatpush1.msra.mxu0 0.0
        %1983 = vmatprep.subr.mxu0 0.0
        %1984 = vmatpush1.msra.mxu0 0.0
        %1985 = vmatprep.subr.mxu0 0.0
        %1986 = vmatpush1.msra.mxu0 0.0
        %1987 = vmatprep.subr.mxu0 0.0
        %1988 = vmatpush1.msra.mxu0 0.0
        %1989 = vmatprep.subr.mxu0 0.0
        %1990 = vmatpush1.msra.mxu0 0.0
        %1991 = vmatprep.subr.mxu0 0.0
        %1992 = vmatpush1.msra.mxu0 0.0
        %1993 = vmatprep.subr.mxu0 0.0
        %1994 = vmatpush1.msra.mxu0 0.0
        %1995 = vmatprep.subr.mxu0 0.0
        %1996 = vmatpush1.msra.mxu0 0.0
        %1997 = vmatprep.subr.mxu0 0.0
        %1998 = vmatpush1.msra.mxu0 0.0
        %1999 = vmatprep.subr.mxu0 0.0
        %2000 = vmatpush1.msra.mxu0 0.0
        %2001 = vmatprep.subr.mxu0 0.0
        %2002 = vmatpush1.msra.mxu0 0.0
        %2003 = vmatprep.subr.mxu0 0.0
        %2004 = vmatpush1.msra.mxu0 0.0
        %2005 = vmatprep.subr.mxu0 0.0
        %2006 = vmatpush1.msra.mxu0 0.0
        %2007 = vmatprep.subr.mxu0 0.0
        %2008 = vmatpush1.msra.mxu0 0.0
        %2009 = vmatprep.subr.mxu0 0.0
        %2010 = vmatpush1.msra.mxu0 0.0
        %2011 = vmatprep.subr.mxu0 0.0
        %2012 = vmatpush1.msra.mxu0 0.0
        %2013 = vmatprep.mubr.f32.mxu0 0.0
        %2014 = vmatmul.mubr.f32.gmra.mrb[0].mxu0 %v610
        %v2015 = vpop.f32.mrb[0].mxu0
        %v2016 = vadd.f32 %v1947, %v2015
        %v2017 = vpop.f32.mrb[0].mxu0
        %2018 = vmatprep.mubr.f32.mxu0 0.0
        %2019 = vmatmul.mubr.f32.gmra.mrb[0].mxu0 %v613
        %v2020 = vpop.f32.mrb[0].mxu0
        %v2021 = vadd.f32 %v1947, %v2020
        %v2022 = vpop.f32.mrb[0].mxu0
        %2023 = vdwg.mxu0
        %s2024 = scalar_lea.vmem %s4, 64
        %v2025 = vld [vmem:[%s2024] sm:$0xff]
        %v2026 = vld [vmem:[%s2024 + $0x8] sm:$0xff]
        %v2027 = vld [vmem:[%s2024 + $0x10] sm:$0xff]
        %v2028 = vld [vmem:[%s2024 + $0x18] sm:$0xff]
        %s2029 = scalar_lea.vmem %s7, 2
        %v2030 = vld [vmem:[%s2029] sm:$0x1]
        %v2032 = vlaneseq
        %v2033 = vshrl.u32 %v2032, 7
        %v2034 = vsub.s32 0, %v2033
        %v2035 = vrot.slane %v2030, %v2034
        %2037 = vmatprep.subr.mxu0 0.0
        %2038 = vmatpush1.msra.mxu0 %v2025
        %2039 = vmatprep.subr.mxu0 0.0
        %2040 = vmatpush1.msra.mxu0 %v2026
        %2041 = vmatprep.subr.mxu0 0.0
        %2042 = vmatpush1.msra.mxu0 %v2027
        %2043 = vmatprep.subr.mxu0 0.0
        %2044 = vmatpush1.msra.mxu0 %v2028
        %2045 = vmatprep.subr.mxu0 0.0
        %2046 = vmatpush1.msra.mxu0 0.0
        %2047 = vmatprep.subr.mxu0 0.0
        %2048 = vmatpush1.msra.mxu0 0.0
        %2049 = vmatprep.subr.mxu0 0.0
        %2050 = vmatpush1.msra.mxu0 0.0
        %2051 = vmatprep.subr.mxu0 0.0
        %2052 = vmatpush1.msra.mxu0 0.0
        %2053 = vmatprep.subr.mxu0 0.0
        %2054 = vmatpush1.msra.mxu0 0.0
        %2055 = vmatprep.subr.mxu0 0.0
        %2056 = vmatpush1.msra.mxu0 0.0
        %2057 = vmatprep.subr.mxu0 0.0
        %2058 = vmatpush1.msra.mxu0 0.0
        %2059 = vmatprep.subr.mxu0 0.0
        %2060 = vmatpush1.msra.mxu0 0.0
        %2061 = vmatprep.subr.mxu0 0.0
        %2062 = vmatpush1.msra.mxu0 0.0
        %2063 = vmatprep.subr.mxu0 0.0
        %2064 = vmatpush1.msra.mxu0 0.0
        %2065 = vmatprep.subr.mxu0 0.0
        %2066 = vmatpush1.msra.mxu0 0.0
        %2067 = vmatprep.subr.mxu0 0.0
        %2068 = vmatpush1.msra.mxu0 0.0
        %2069 = vmatprep.subr.mxu0 0.0
        %2070 = vmatpush1.msra.mxu0 0.0
        %2071 = vmatprep.subr.mxu0 0.0
        %2072 = vmatpush1.msra.mxu0 0.0
        %2073 = vmatprep.subr.mxu0 0.0
        %2074 = vmatpush1.msra.mxu0 0.0
        %2075 = vmatprep.subr.mxu0 0.0
        %2076 = vmatpush1.msra.mxu0 0.0
        %2077 = vmatprep.subr.mxu0 0.0
        %2078 = vmatpush1.msra.mxu0 0.0
        %2079 = vmatprep.subr.mxu0 0.0
        %2080 = vmatpush1.msra.mxu0 0.0
        %2081 = vmatprep.subr.mxu0 0.0
        %2082 = vmatpush1.msra.mxu0 0.0
        %2083 = vmatprep.subr.mxu0 0.0
        %2084 = vmatpush1.msra.mxu0 0.0
        %2085 = vmatprep.subr.mxu0 0.0
        %2086 = vmatpush1.msra.mxu0 0.0
        %2087 = vmatprep.subr.mxu0 0.0
        %2088 = vmatpush1.msra.mxu0 0.0
        %2089 = vmatprep.subr.mxu0 0.0
        %2090 = vmatpush1.msra.mxu0 0.0
        %2091 = vmatprep.subr.mxu0 0.0
        %2092 = vmatpush1.msra.mxu0 0.0
        %2093 = vmatprep.subr.mxu0 0.0
        %2094 = vmatpush1.msra.mxu0 0.0
        %2095 = vmatprep.subr.mxu0 0.0
        %2096 = vmatpush1.msra.mxu0 0.0
        %2097 = vmatprep.subr.mxu0 0.0
        %2098 = vmatpush1.msra.mxu0 0.0
        %2099 = vmatprep.subr.mxu0 0.0
        %2100 = vmatpush1.msra.mxu0 0.0
        %2101 = vmatprep.mubr.f32.mxu0 0.0
        %2102 = vmatmul.mubr.f32.gmra.mrb[0].mxu0 %v610
        %v2103 = vpop.f32.mrb[0].mxu0
        %v2104 = vadd.f32 %v2035, %v2103
        %v2105 = vpop.f32.mrb[0].mxu0
        %2106 = vmatprep.mubr.f32.mxu0 0.0
        %2107 = vmatmul.mubr.f32.gmra.mrb[0].mxu0 %v613
        %v2108 = vpop.f32.mrb[0].mxu0
        %v2109 = vadd.f32 %v2035, %v2108
        %v2110 = vpop.f32.mrb[0].mxu0
        %2111 = vdwg.mxu0
        %s2112 = scalar_lea.vmem %s5, 64
        %v2113 = vld [vmem:[%s2112] sm:$0xff]
        %v2114 = vld [vmem:[%s2112 + $0x8] sm:$0xff]
        %v2115 = vld [vmem:[%s2112 + $0x10] sm:$0xff]
        %v2116 = vld [vmem:[%s2112 + $0x18] sm:$0xff]
        %s2117 = scalar_lea.vmem %s8, 2
        %v2118 = vld [vmem:[%s2117] sm:$0x1]
        %v2120 = vlaneseq
        %v2121 = vshrl.u32 %v2120, 7
        %v2122 = vsub.s32 0, %v2121
        %v2123 = vrot.slane %v2118, %v2122
        %2125 = vmatprep.subr.mxu0 0.0
        %2126 = vmatpush1.msra.mxu0 %v2113
        %2127 = vmatprep.subr.mxu0 0.0
        %2128 = vmatpush1.msra.mxu0 %v2114
        %2129 = vmatprep.subr.mxu0 0.0
        %2130 = vmatpush1.msra.mxu0 %v2115
        %2131 = vmatprep.subr.mxu0 0.0
        %2132 = vmatpush1.msra.mxu0 %v2116
        %2133 = vmatprep.subr.mxu0 0.0
        %2134 = vmatpush1.msra.mxu0 0.0
        %2135 = vmatprep.subr.mxu0 0.0
        %2136 = vmatpush1.msra.mxu0 0.0
        %2137 = vmatprep.subr.mxu0 0.0
        %2138 = vmatpush1.msra.mxu0 0.0
        %2139 = vmatprep.subr.mxu0 0.0
        %2140 = vmatpush1.msra.mxu0 0.0
        %2141 = vmatprep.subr.mxu0 0.0
        %2142 = vmatpush1.msra.mxu0 0.0
        %2143 = vmatprep.subr.mxu0 0.0
        %2144 = vmatpush1.msra.mxu0 0.0
        %2145 = vmatprep.subr.mxu0 0.0
        %2146 = vmatpush1.msra.mxu0 0.0
        %2147 = vmatprep.subr.mxu0 0.0
        %2148 = vmatpush1.msra.mxu0 0.0
        %2149 = vmatprep.subr.mxu0 0.0
        %2150 = vmatpush1.msra.mxu0 0.0
        %2151 = vmatprep.subr.mxu0 0.0
        %2152 = vmatpush1.msra.mxu0 0.0
        %2153 = vmatprep.subr.mxu0 0.0
        %2154 = vmatpush1.msra.mxu0 0.0
        %2155 = vmatprep.subr.mxu0 0.0
        %2156 = vmatpush1.msra.mxu0 0.0
        %2157 = vmatprep.subr.mxu0 0.0
        %2158 = vmatpush1.msra.mxu0 0.0
        %2159 = vmatprep.subr.mxu0 0.0
        %2160 = vmatpush1.msra.mxu0 0.0
        %2161 = vmatprep.subr.mxu0 0.0
        %2162 = vmatpush1.msra.mxu0 0.0
        %2163 = vmatprep.subr.mxu0 0.0
        %2164 = vmatpush1.msra.mxu0 0.0
        %2165 = vmatprep.subr.mxu0 0.0
        %2166 = vmatpush1.msra.mxu0 0.0
        %2167 = vmatprep.subr.mxu0 0.0
        %2168 = vmatpush1.msra.mxu0 0.0
        %2169 = vmatprep.subr.mxu0 0.0
        %2170 = vmatpush1.msra.mxu0 0.0
        %2171 = vmatprep.subr.mxu0 0.0
        %2172 = vmatpush1.msra.mxu0 0.0
        %2173 = vmatprep.subr.mxu0 0.0
        %2174 = vmatpush1.msra.mxu0 0.0
        %2175 = vmatprep.subr.mxu0 0.0
        %2176 = vmatpush1.msra.mxu0 0.0
        %2177 = vmatprep.subr.mxu0 0.0
        %2178 = vmatpush1.msra.mxu0 0.0
        %2179 = vmatprep.subr.mxu0 0.0
        %2180 = vmatpush1.msra.mxu0 0.0
        %2181 = vmatprep.subr.mxu0 0.0
        %2182 = vmatpush1.msra.mxu0 0.0
        %2183 = vmatprep.subr.mxu0 0.0
        %2184 = vmatpush1.msra.mxu0 0.0
        %2185 = vmatprep.subr.mxu0 0.0
        %2186 = vmatpush1.msra.mxu0 0.0
        %2187 = vmatprep.subr.mxu0 0.0
        %2188 = vmatpush1.msra.mxu0 0.0
        %2189 = vmatprep.mubr.f32.mxu0 0.0
        %2190 = vmatmul.mubr.f32.gmra.mrb[0].mxu0 %v610
        %v2191 = vpop.f32.mrb[0].mxu0
        %v2192 = vadd.f32 %v2123, %v2191
        %v2193 = vpop.f32.mrb[0].mxu0
        %2194 = vmatprep.mubr.f32.mxu0 0.0
        %2195 = vmatmul.mubr.f32.gmra.mrb[0].mxu0 %v613
        %v2196 = vpop.f32.mrb[0].mxu0
        %v2197 = vadd.f32 %v2123, %v2196
        %v2198 = vpop.f32.mrb[0].mxu0
        %2199 = vdwg.mxu0
        %v2200 = vmul.f32 %v2016, 0.35355338
        %v2201 = vmul.f32 %v2021, 0.35355338
        %v2203 = vsel %vm864, %v2200, 0
        %v2206 = vsel %vm864, %v2104, 0
        %2208 = vmatprep.subr.mxu0 0.0
        %2209 = vmatpush1.xpose.msra.mxu0 %v2206
        %2210 = vmatprep.subr.mxu0 0.0
        %2211 = vmatpush1.xpose.msra.mxu0 0.0
        %2212 = vmatprep.subr.mxu0 0.0
        %2213 = vmatpush1.xpose.msra.mxu0 0.0
        %2214 = vmatprep.subr.mxu0 0.0
        %2215 = vmatpush1.xpose.msra.mxu0 0.0
        %2216 = vmatprep.subr.mxu0 0.0
        %2217 = vmatpush1.xpose.msra.mxu0 0.0
        %2218 = vmatprep.subr.mxu0 0.0
        %2219 = vmatpush1.xpose.msra.mxu0 0.0
        %2220 = vmatprep.subr.mxu0 0.0
        %2221 = vmatpush1.xpose.msra.mxu0 0.0
        %2222 = vmatprep.subr.mxu0 0.0
        %2223 = vmatpush1.xpose.msra.mxu0 0.0
        %2224 = vmatprep.subr.mxu0 0.0
        %2225 = vmatpush1.xpose.msra.mxu0 0.0
        %2226 = vmatprep.subr.mxu0 0.0
        %2227 = vmatpush1.xpose.msra.mxu0 0.0
        %2228 = vmatprep.subr.mxu0 0.0
        %2229 = vmatpush1.xpose.msra.mxu0 0.0
        %2230 = vmatprep.subr.mxu0 0.0
        %2231 = vmatpush1.xpose.msra.mxu0 0.0
        %2232 = vmatprep.subr.mxu0 0.0
        %2233 = vmatpush1.xpose.msra.mxu0 0.0
        %2234 = vmatprep.subr.mxu0 0.0
        %2235 = vmatpush1.xpose.msra.mxu0 0.0
        %2236 = vmatprep.subr.mxu0 0.0
        %2237 = vmatpush1.xpose.msra.mxu0 0.0
        %2238 = vmatprep.subr.mxu0 0.0
        %2239 = vmatpush1.xpose.msra.mxu0 0.0
        %2240 = vmatprep.subr.mxu0 0.0
        %2241 = vmatpush1.xpose.msra.mxu0 0.0
        %2242 = vmatprep.subr.mxu0 0.0
        %2243 = vmatpush1.xpose.msra.mxu0 0.0
        %2244 = vmatprep.subr.mxu0 0.0
        %2245 = vmatpush1.xpose.msra.mxu0 0.0
        %2246 = vmatprep.subr.mxu0 0.0
        %2247 = vmatpush1.xpose.msra.mxu0 0.0
        %2248 = vmatprep.subr.mxu0 0.0
        %2249 = vmatpush1.xpose.msra.mxu0 0.0
        %2250 = vmatprep.subr.mxu0 0.0
        %2251 = vmatpush1.xpose.msra.mxu0 0.0
        %2252 = vmatprep.subr.mxu0 0.0
        %2253 = vmatpush1.xpose.msra.mxu0 0.0
        %2254 = vmatprep.subr.mxu0 0.0
        %2255 = vmatpush1.xpose.msra.mxu0 0.0
        %2256 = vmatprep.subr.mxu0 0.0
        %2257 = vmatpush1.xpose.msra.mxu0 0.0
        %2258 = vmatprep.subr.mxu0 0.0
        %2259 = vmatpush1.xpose.msra.mxu0 0.0
        %2260 = vmatprep.subr.mxu0 0.0
        %2261 = vmatpush1.xpose.msra.mxu0 0.0
        %2262 = vmatprep.subr.mxu0 0.0
        %2263 = vmatpush1.xpose.msra.mxu0 0.0
        %2264 = vmatprep.subr.mxu0 0.0
        %2265 = vmatpush1.xpose.msra.mxu0 0.0
        %2266 = vmatprep.subr.mxu0 0.0
        %2267 = vmatpush1.xpose.msra.mxu0 0.0
        %2268 = vmatprep.subr.mxu0 0.0
        %2269 = vmatpush1.xpose.msra.mxu0 0.0
        %2270 = vmatprep.subr.mxu0 0.0
        %2271 = vmatpush1.xpose.msra.mxu0 0.0
        %2272 = vmatprep.mubr.f32.mxu0 0.0
        %2273 = vmatmul.mubr.f32.gmra.mrb[0].mxu0 %v2203
        %v2274 = vpop.f32.mrb[0].mxu0
        %v2275 = vadd.f32 0.0, %v2274
        %v2276 = vpop.f32.mrb[0].mxu0
        %2277 = vdwg.mxu0
        %v2279 = vsel %vm864, %v2201, 0
        %v2282 = vsel %vm864, %v2109, 0
        %2284 = vmatprep.subr.mxu0 0.0
        %2285 = vmatpush1.xpose.msra.mxu0 %v2282
        %2286 = vmatprep.subr.mxu0 0.0
        %2287 = vmatpush1.xpose.msra.mxu0 0.0
        %2288 = vmatprep.subr.mxu0 0.0
        %2289 = vmatpush1.xpose.msra.mxu0 0.0
        %2290 = vmatprep.subr.mxu0 0.0
        %2291 = vmatpush1.xpose.msra.mxu0 0.0
        %2292 = vmatprep.subr.mxu0 0.0
        %2293 = vmatpush1.xpose.msra.mxu0 0.0
        %2294 = vmatprep.subr.mxu0 0.0
        %2295 = vmatpush1.xpose.msra.mxu0 0.0
        %2296 = vmatprep.subr.mxu0 0.0
        %2297 = vmatpush1.xpose.msra.mxu0 0.0
        %2298 = vmatprep.subr.mxu0 0.0
        %2299 = vmatpush1.xpose.msra.mxu0 0.0
        %2300 = vmatprep.subr.mxu0 0.0
        %2301 = vmatpush1.xpose.msra.mxu0 0.0
        %2302 = vmatprep.subr.mxu0 0.0
        %2303 = vmatpush1.xpose.msra.mxu0 0.0
        %2304 = vmatprep.subr.mxu0 0.0
        %2305 = vmatpush1.xpose.msra.mxu0 0.0
        %2306 = vmatprep.subr.mxu0 0.0
        %2307 = vmatpush1.xpose.msra.mxu0 0.0
        %2308 = vmatprep.subr.mxu0 0.0
        %2309 = vmatpush1.xpose.msra.mxu0 0.0
        %2310 = vmatprep.subr.mxu0 0.0
        %2311 = vmatpush1.xpose.msra.mxu0 0.0
        %2312 = vmatprep.subr.mxu0 0.0
        %2313 = vmatpush1.xpose.msra.mxu0 0.0
        %2314 = vmatprep.subr.mxu0 0.0
        %2315 = vmatpush1.xpose.msra.mxu0 0.0
        %2316 = vmatprep.subr.mxu0 0.0
        %2317 = vmatpush1.xpose.msra.mxu0 0.0
        %2318 = vmatprep.subr.mxu0 0.0
        %2319 = vmatpush1.xpose.msra.mxu0 0.0
        %2320 = vmatprep.subr.mxu0 0.0
        %2321 = vmatpush1.xpose.msra.mxu0 0.0
        %2322 = vmatprep.subr.mxu0 0.0
        %2323 = vmatpush1.xpose.msra.mxu0 0.0
        %2324 = vmatprep.subr.mxu0 0.0
        %2325 = vmatpush1.xpose.msra.mxu0 0.0
        %2326 = vmatprep.subr.mxu0 0.0
        %2327 = vmatpush1.xpose.msra.mxu0 0.0
        %2328 = vmatprep.subr.mxu0 0.0
        %2329 = vmatpush1.xpose.msra.mxu0 0.0
        %2330 = vmatprep.subr.mxu0 0.0
        %2331 = vmatpush1.xpose.msra.mxu0 0.0
        %2332 = vmatprep.subr.mxu0 0.0
        %2333 = vmatpush1.xpose.msra.mxu0 0.0
        %2334 = vmatprep.subr.mxu0 0.0
        %2335 = vmatpush1.xpose.msra.mxu0 0.0
        %2336 = vmatprep.subr.mxu0 0.0
        %2337 = vmatpush1.xpose.msra.mxu0 0.0
        %2338 = vmatprep.subr.mxu0 0.0
        %2339 = vmatpush1.xpose.msra.mxu0 0.0
        %2340 = vmatprep.subr.mxu0 0.0
        %2341 = vmatpush1.xpose.msra.mxu0 0.0
        %2342 = vmatprep.subr.mxu0 0.0
        %2343 = vmatpush1.xpose.msra.mxu0 0.0
        %2344 = vmatprep.subr.mxu0 0.0
        %2345 = vmatpush1.xpose.msra.mxu0 0.0
        %2346 = vmatprep.subr.mxu0 0.0
        %2347 = vmatpush1.xpose.msra.mxu0 0.0
        %2348 = vmatprep.mubr.f32.mxu0 0.0
        %2349 = vmatmul.mubr.f32.gmra.mrb[0].mxu0 %v2279
        %v2350 = vpop.f32.mrb[0].mxu0
        %v2351 = vadd.f32 0.0, %v2350
        %v2352 = vpop.f32.mrb[0].mxu0
        %2353 = vdwg.mxu0
        %v2354 = vsel %vm864, %v2275, -inf
        %2355 = vmax.xlane.f32.xlu0 %v2354
        %v2356 = vpop.xlane.xlu0 %2355
        %v2357 = vsel %vm864, %v2351, -inf
        %2358 = vmax.xlane.f32.xlu0 %v2357
        %v2359 = vpop.xlane.xlu0 %2358
        %v2360 = vsub.f32 %v2275, %v2356
        %v2361 = vsub.f32 %v2351, %v2359
        %v2362 = vmul.f32 %v2360, 1.442695
        %v2363 = vpow.pop %v2362
        %v2364 = vmul.f32 %v2361, 1.442695
        %v2365 = vpow.pop %v2364
        %v2366 = vsel %vm864, %v2363, 0.0
        %2367 = vadd.xlane.f32.xlu0 %v2366
        %v2368 = vpop.xlane.xlu0 %2367
        %v2369 = vsel %vm864, %v2365, 0.0
        %2370 = vadd.xlane.f32.xlu0 %v2369
        %v2371 = vpop.xlane.xlu0 %2370
        %v2373 = vsel %vm864, %v2363, 0
        %2375 = vmatprep.subr.mxu0 0.0
        %2376 = vmatpush1.msra.mxu0 %v2192
        %2377 = vmatprep.subr.mxu0 0.0
        %2378 = vmatpush1.msra.mxu0 0.0
        %2379 = vmatprep.subr.mxu0 0.0
        %2380 = vmatpush1.msra.mxu0 0.0
        %2381 = vmatprep.subr.mxu0 0.0
        %2382 = vmatpush1.msra.mxu0 0.0
        %2383 = vmatprep.subr.mxu0 0.0
        %2384 = vmatpush1.msra.mxu0 0.0
        %2385 = vmatprep.subr.mxu0 0.0
        %2386 = vmatpush1.msra.mxu0 0.0
        %2387 = vmatprep.subr.mxu0 0.0
        %2388 = vmatpush1.msra.mxu0 0.0
        %2389 = vmatprep.subr.mxu0 0.0
        %2390 = vmatpush1.msra.mxu0 0.0
        %2391 = vmatprep.subr.mxu0 0.0
        %2392 = vmatpush1.msra.mxu0 0.0
        %2393 = vmatprep.subr.mxu0 0.0
        %2394 = vmatpush1.msra.mxu0 0.0
        %2395 = vmatprep.subr.mxu0 0.0
        %2396 = vmatpush1.msra.mxu0 0.0
        %2397 = vmatprep.subr.mxu0 0.0
        %2398 = vmatpush1.msra.mxu0 0.0
        %2399 = vmatprep.subr.mxu0 0.0
        %2400 = vmatpush1.msra.mxu0 0.0
        %2401 = vmatprep.subr.mxu0 0.0
        %2402 = vmatpush1.msra.mxu0 0.0
        %2403 = vmatprep.subr.mxu0 0.0
        %2404 = vmatpush1.msra.mxu0 0.0
        %2405 = vmatprep.subr.mxu0 0.0
        %2406 = vmatpush1.msra.mxu0 0.0
        %2407 = vmatprep.subr.mxu0 0.0
        %2408 = vmatpush1.msra.mxu0 0.0
        %2409 = vmatprep.subr.mxu0 0.0
        %2410 = vmatpush1.msra.mxu0 0.0
        %2411 = vmatprep.subr.mxu0 0.0
        %2412 = vmatpush1.msra.mxu0 0.0
        %2413 = vmatprep.subr.mxu0 0.0
        %2414 = vmatpush1.msra.mxu0 0.0
        %2415 = vmatprep.subr.mxu0 0.0
        %2416 = vmatpush1.msra.mxu0 0.0
        %2417 = vmatprep.subr.mxu0 0.0
        %2418 = vmatpush1.msra.mxu0 0.0
        %2419 = vmatprep.subr.mxu0 0.0
        %2420 = vmatpush1.msra.mxu0 0.0
        %2421 = vmatprep.subr.mxu0 0.0
        %2422 = vmatpush1.msra.mxu0 0.0
        %2423 = vmatprep.subr.mxu0 0.0
        %2424 = vmatpush1.msra.mxu0 0.0
        %2425 = vmatprep.subr.mxu0 0.0
        %2426 = vmatpush1.msra.mxu0 0.0
        %2427 = vmatprep.subr.mxu0 0.0
        %2428 = vmatpush1.msra.mxu0 0.0
        %2429 = vmatprep.subr.mxu0 0.0
        %2430 = vmatpush1.msra.mxu0 0.0
        %2431 = vmatprep.subr.mxu0 0.0
        %2432 = vmatpush1.msra.mxu0 0.0
        %2433 = vmatprep.subr.mxu0 0.0
        %2434 = vmatpush1.msra.mxu0 0.0
        %2435 = vmatprep.subr.mxu0 0.0
        %2436 = vmatpush1.msra.mxu0 0.0
        %2437 = vmatprep.subr.mxu0 0.0
        %2438 = vmatpush1.msra.mxu0 0.0
        %2439 = vmatprep.mubr.f32.mxu0 0.0
        %2440 = vmatmul.mubr.f32.gmra.mrb[0].mxu0 %v2373
        %v2441 = vpop.f32.mrb[0].mxu0
        %v2442 = vadd.f32 0.0, %v2441
        %v2443 = vpop.f32.mrb[0].mxu0
        %2444 = vdwg.mxu0
        %v2446 = vsel %vm864, %v2365, 0
        %2448 = vmatprep.subr.mxu0 0.0
        %2449 = vmatpush1.msra.mxu0 %v2197
        %2450 = vmatprep.subr.mxu0 0.0
        %2451 = vmatpush1.msra.mxu0 0.0
        %2452 = vmatprep.subr.mxu0 0.0
        %2453 = vmatpush1.msra.mxu0 0.0
        %2454 = vmatprep.subr.mxu0 0.0
        %2455 = vmatpush1.msra.mxu0 0.0
        %2456 = vmatprep.subr.mxu0 0.0
        %2457 = vmatpush1.msra.mxu0 0.0
        %2458 = vmatprep.subr.mxu0 0.0
        %2459 = vmatpush1.msra.mxu0 0.0
        %2460 = vmatprep.subr.mxu0 0.0
        %2461 = vmatpush1.msra.mxu0 0.0
        %2462 = vmatprep.subr.mxu0 0.0
        %2463 = vmatpush1.msra.mxu0 0.0
        %2464 = vmatprep.subr.mxu0 0.0
        %2465 = vmatpush1.msra.mxu0 0.0
        %2466 = vmatprep.subr.mxu0 0.0
        %2467 = vmatpush1.msra.mxu0 0.0
        %2468 = vmatprep.subr.mxu0 0.0
        %2469 = vmatpush1.msra.mxu0 0.0
        %2470 = vmatprep.subr.mxu0 0.0
        %2471 = vmatpush1.msra.mxu0 0.0
        %2472 = vmatprep.subr.mxu0 0.0
        %2473 = vmatpush1.msra.mxu0 0.0
        %2474 = vmatprep.subr.mxu0 0.0
        %2475 = vmatpush1.msra.mxu0 0.0
        %2476 = vmatprep.subr.mxu0 0.0
        %2477 = vmatpush1.msra.mxu0 0.0
        %2478 = vmatprep.subr.mxu0 0.0
        %2479 = vmatpush1.msra.mxu0 0.0
        %2480 = vmatprep.subr.mxu0 0.0
        %2481 = vmatpush1.msra.mxu0 0.0
        %2482 = vmatprep.subr.mxu0 0.0
        %2483 = vmatpush1.msra.mxu0 0.0
        %2484 = vmatprep.subr.mxu0 0.0
        %2485 = vmatpush1.msra.mxu0 0.0
        %2486 = vmatprep.subr.mxu0 0.0
        %2487 = vmatpush1.msra.mxu0 0.0
        %2488 = vmatprep.subr.mxu0 0.0
        %2489 = vmatpush1.msra.mxu0 0.0
        %2490 = vmatprep.subr.mxu0 0.0
        %2491 = vmatpush1.msra.mxu0 0.0
        %2492 = vmatprep.subr.mxu0 0.0
        %2493 = vmatpush1.msra.mxu0 0.0
        %2494 = vmatprep.subr.mxu0 0.0
        %2495 = vmatpush1.msra.mxu0 0.0
        %2496 = vmatprep.subr.mxu0 0.0
        %2497 = vmatpush1.msra.mxu0 0.0
        %2498 = vmatprep.subr.mxu0 0.0
        %2499 = vmatpush1.msra.mxu0 0.0
        %2500 = vmatprep.subr.mxu0 0.0
        %2501 = vmatpush1.msra.mxu0 0.0
        %2502 = vmatprep.subr.mxu0 0.0
        %2503 = vmatpush1.msra.mxu0 0.0
        %2504 = vmatprep.subr.mxu0 0.0
        %2505 = vmatpush1.msra.mxu0 0.0
        %2506 = vmatprep.subr.mxu0 0.0
        %2507 = vmatpush1.msra.mxu0 0.0
        %2508 = vmatprep.subr.mxu0 0.0
        %2509 = vmatpush1.msra.mxu0 0.0
        %2510 = vmatprep.subr.mxu0 0.0
        %2511 = vmatpush1.msra.mxu0 0.0
        %2512 = vmatprep.mubr.f32.mxu0 0.0
        %2513 = vmatmul.mubr.f32.gmra.mrb[0].mxu0 %v2446
        %v2514 = vpop.f32.mrb[0].mxu0
        %v2515 = vadd.f32 0.0, %v2514
        %v2516 = vpop.f32.mrb[0].mxu0
        %2517 = vdwg.mxu0
        %v2518 = vrcp.pop %v2368
        %v2519 = vrcp.pop %v2371
        %v2520 = vmul.f32 %v2442, %v2518
        %v2521 = vmul.f32 %v2515, %v2519
        %s2522 = scalar_lea.vmem %s9, 16
        %v2523 = vld [vmem:[%s2522] sm:$0xff]
        %v2525 = vsel %vm864, %v2520, 0
        %v2528 = vsel %vm864, %v2521, 0
        %2530 = vmatprep.subr.mxu0 0.0
        %2531 = vmatpush1.msra.mxu0 %v2523
        %2532 = vmatprep.subr.mxu0 0.0
        %2533 = vmatpush1.msra.mxu0 0.0
        %2534 = vmatprep.subr.mxu0 0.0
        %2535 = vmatpush1.msra.mxu0 0.0
        %2536 = vmatprep.subr.mxu0 0.0
        %2537 = vmatpush1.msra.mxu0 0.0
        %2538 = vmatprep.subr.mxu0 0.0
        %2539 = vmatpush1.msra.mxu0 0.0
        %2540 = vmatprep.subr.mxu0 0.0
        %2541 = vmatpush1.msra.mxu0 0.0
        %2542 = vmatprep.subr.mxu0 0.0
        %2543 = vmatpush1.msra.mxu0 0.0
        %2544 = vmatprep.subr.mxu0 0.0
        %2545 = vmatpush1.msra.mxu0 0.0
        %2546 = vmatprep.subr.mxu0 0.0
        %2547 = vmatpush1.msra.mxu0 0.0
        %2548 = vmatprep.subr.mxu0 0.0
        %2549 = vmatpush1.msra.mxu0 0.0
        %2550 = vmatprep.subr.mxu0 0.0
        %2551 = vmatpush1.msra.mxu0 0.0
        %2552 = vmatprep.subr.mxu0 0.0
        %2553 = vmatpush1.msra.mxu0 0.0
        %2554 = vmatprep.subr.mxu0 0.0
        %2555 = vmatpush1.msra.mxu0 0.0
        %2556 = vmatprep.subr.mxu0 0.0
        %2557 = vmatpush1.msra.mxu0 0.0
        %2558 = vmatprep.subr.mxu0 0.0
        %2559 = vmatpush1.msra.mxu0 0.0
        %2560 = vmatprep.subr.mxu0 0.0
        %2561 = vmatpush1.msra.mxu0 0.0
        %2562 = vmatprep.subr.mxu0 0.0
        %2563 = vmatpush1.msra.mxu0 0.0
        %2564 = vmatprep.subr.mxu0 0.0
        %2565 = vmatpush1.msra.mxu0 0.0
        %2566 = vmatprep.subr.mxu0 0.0
        %2567 = vmatpush1.msra.mxu0 0.0
        %2568 = vmatprep.subr.mxu0 0.0
        %2569 = vmatpush1.msra.mxu0 0.0
        %2570 = vmatprep.subr.mxu0 0.0
        %2571 = vmatpush1.msra.mxu0 0.0
        %2572 = vmatprep.subr.mxu0 0.0
        %2573 = vmatpush1.msra.mxu0 0.0
        %2574 = vmatprep.subr.mxu0 0.0
        %2575 = vmatpush1.msra.mxu0 0.0
        %2576 = vmatprep.subr.mxu0 0.0
        %2577 = vmatpush1.msra.mxu0 0.0
        %2578 = vmatprep.subr.mxu0 0.0
        %2579 = vmatpush1.msra.mxu0 0.0
        %2580 = vmatprep.subr.mxu0 0.0
        %2581 = vmatpush1.msra.mxu0 0.0
        %2582 = vmatprep.subr.mxu0 0.0
        %2583 = vmatpush1.msra.mxu0 0.0
        %2584 = vmatprep.subr.mxu0 0.0
        %2585 = vmatpush1.msra.mxu0 0.0
        %2586 = vmatprep.subr.mxu0 0.0
        %2587 = vmatpush1.msra.mxu0 0.0
        %2588 = vmatprep.subr.mxu0 0.0
        %2589 = vmatpush1.msra.mxu0 0.0
        %2590 = vmatprep.subr.mxu0 0.0
        %2591 = vmatpush1.msra.mxu0 0.0
        %2592 = vmatprep.subr.mxu0 0.0
        %2593 = vmatpush1.msra.mxu0 0.0
        %2594 = vmatprep.mubr.f32.mxu0 0.0
        %2595 = vmatmul.mubr.f32.gmra.mrb[0].mxu0 %v2525
        %v2596 = vpop.f32.mrb[0].mxu0
        %v2597 = vadd.f32 0.0, %v2596
        %v2598 = vpop.f32.mrb[0].mxu0
        %2599 = vmatprep.mubr.f32.mxu0 0.0
        %2600 = vmatmul.mubr.f32.gmra.mrb[0].mxu0 %v2528
        %v2601 = vpop.f32.mrb[0].mxu0
        %v2602 = vadd.f32 0.0, %v2601
        %v2603 = vpop.f32.mrb[0].mxu0
        %2604 = vdwg.mxu0
        %v2605 = vadd.f32 %v1928, %v2597
        %v2606 = vadd.f32 %v1933, %v2602
        %s2607 = scalar_lea.vmem %s3, 96
        %v2608 = vld [vmem:[%s2607] sm:$0xff]
        %v2609 = vld [vmem:[%s2607 + $0x8] sm:$0xff]
        %v2610 = vld [vmem:[%s2607 + $0x10] sm:$0xff]
        %v2611 = vld [vmem:[%s2607 + $0x18] sm:$0xff]
        %s2612 = scalar_lea.vmem %s6, 3
        %v2613 = vld [vmem:[%s2612] sm:$0x1]
        %v2615 = vlaneseq
        %v2616 = vshrl.u32 %v2615, 7
        %v2617 = vsub.s32 0, %v2616
        %v2618 = vrot.slane %v2613, %v2617
        %2620 = vmatprep.subr.mxu0 0.0
        %2621 = vmatpush1.msra.mxu0 %v2608
        %2622 = vmatprep.subr.mxu0 0.0
        %2623 = vmatpush1.msra.mxu0 %v2609
        %2624 = vmatprep.subr.mxu0 0.0
        %2625 = vmatpush1.msra.mxu0 %v2610
        %2626 = vmatprep.subr.mxu0 0.0
        %2627 = vmatpush1.msra.mxu0 %v2611
        %2628 = vmatprep.subr.mxu0 0.0
        %2629 = vmatpush1.msra.mxu0 0.0
        %2630 = vmatprep.subr.mxu0 0.0
        %2631 = vmatpush1.msra.mxu0 0.0
        %2632 = vmatprep.subr.mxu0 0.0
        %2633 = vmatpush1.msra.mxu0 0.0
        %2634 = vmatprep.subr.mxu0 0.0
        %2635 = vmatpush1.msra.mxu0 0.0
        %2636 = vmatprep.subr.mxu0 0.0
        %2637 = vmatpush1.msra.mxu0 0.0
        %2638 = vmatprep.subr.mxu0 0.0
        %2639 = vmatpush1.msra.mxu0 0.0
        %2640 = vmatprep.subr.mxu0 0.0
        %2641 = vmatpush1.msra.mxu0 0.0
        %2642 = vmatprep.subr.mxu0 0.0
        %2643 = vmatpush1.msra.mxu0 0.0
        %2644 = vmatprep.subr.mxu0 0.0
        %2645 = vmatpush1.msra.mxu0 0.0
        %2646 = vmatprep.subr.mxu0 0.0
        %2647 = vmatpush1.msra.mxu0 0.0
        %2648 = vmatprep.subr.mxu0 0.0
        %2649 = vmatpush1.msra.mxu0 0.0
        %2650 = vmatprep.subr.mxu0 0.0
        %2651 = vmatpush1.msra.mxu0 0.0
        %2652 = vmatprep.subr.mxu0 0.0
        %2653 = vmatpush1.msra.mxu0 0.0
        %2654 = vmatprep.subr.mxu0 0.0
        %2655 = vmatpush1.msra.mxu0 0.0
        %2656 = vmatprep.subr.mxu0 0.0
        %2657 = vmatpush1.msra.mxu0 0.0
        %2658 = vmatprep.subr.mxu0 0.0
        %2659 = vmatpush1.msra.mxu0 0.0
        %2660 = vmatprep.subr.mxu0 0.0
        %2661 = vmatpush1.msra.mxu0 0.0
        %2662 = vmatprep.subr.mxu0 0.0
        %2663 = vmatpush1.msra.mxu0 0.0
        %2664 = vmatprep.subr.mxu0 0.0
        %2665 = vmatpush1.msra.mxu0 0.0
        %2666 = vmatprep.subr.mxu0 0.0
        %2667 = vmatpush1.msra.mxu0 0.0
        %2668 = vmatprep.subr.mxu0 0.0
        %2669 = vmatpush1.msra.mxu0 0.0
        %2670 = vmatprep.subr.mxu0 0.0
        %2671 = vmatpush1.msra.mxu0 0.0
        %2672 = vmatprep.subr.mxu0 0.0
        %2673 = vmatpush1.msra.mxu0 0.0
        %2674 = vmatprep.subr.mxu0 0.0
        %2675 = vmatpush1.msra.mxu0 0.0
        %2676 = vmatprep.subr.mxu0 0.0
        %2677 = vmatpush1.msra.mxu0 0.0
        %2678 = vmatprep.subr.mxu0 0.0
        %2679 = vmatpush1.msra.mxu0 0.0
        %2680 = vmatprep.subr.mxu0 0.0
        %2681 = vmatpush1.msra.mxu0 0.0
        %2682 = vmatprep.subr.mxu0 0.0
        %2683 = vmatpush1.msra.mxu0 0.0
        %2684 = vmatprep.mubr.f32.mxu0 0.0
        %2685 = vmatmul.mubr.f32.gmra.mrb[0].mxu0 %v610
        %v2686 = vpop.f32.mrb[0].mxu0
        %v2687 = vadd.f32 %v2618, %v2686
        %v2688 = vpop.f32.mrb[0].mxu0
        %2689 = vmatprep.mubr.f32.mxu0 0.0
        %2690 = vmatmul.mubr.f32.gmra.mrb[0].mxu0 %v613
        %v2691 = vpop.f32.mrb[0].mxu0
        %v2692 = vadd.f32 %v2618, %v2691
        %v2693 = vpop.f32.mrb[0].mxu0
        %2694 = vdwg.mxu0
        %s2695 = scalar_lea.vmem %s4, 96
        %v2696 = vld [vmem:[%s2695] sm:$0xff]
        %v2697 = vld [vmem:[%s2695 + $0x8] sm:$0xff]
        %v2698 = vld [vmem:[%s2695 + $0x10] sm:$0xff]
        %v2699 = vld [vmem:[%s2695 + $0x18] sm:$0xff]
        %s2700 = scalar_lea.vmem %s7, 3
        %v2701 = vld [vmem:[%s2700] sm:$0x1]
        %v2703 = vlaneseq
        %v2704 = vshrl.u32 %v2703, 7
        %v2705 = vsub.s32 0, %v2704
        %v2706 = vrot.slane %v2701, %v2705
        %2708 = vmatprep.subr.mxu0 0.0
        %2709 = vmatpush1.msra.mxu0 %v2696
        %2710 = vmatprep.subr.mxu0 0.0
        %2711 = vmatpush1.msra.mxu0 %v2697
        %2712 = vmatprep.subr.mxu0 0.0
        %2713 = vmatpush1.msra.mxu0 %v2698
        %2714 = vmatprep.subr.mxu0 0.0
        %2715 = vmatpush1.msra.mxu0 %v2699
        %2716 = vmatprep.subr.mxu0 0.0
        %2717 = vmatpush1.msra.mxu0 0.0
        %2718 = vmatprep.subr.mxu0 0.0
        %2719 = vmatpush1.msra.mxu0 0.0
        %2720 = vmatprep.subr.mxu0 0.0
        %2721 = vmatpush1.msra.mxu0 0.0
        %2722 = vmatprep.subr.mxu0 0.0
        %2723 = vmatpush1.msra.mxu0 0.0
        %2724 = vmatprep.subr.mxu0 0.0
        %2725 = vmatpush1.msra.mxu0 0.0
        %2726 = vmatprep.subr.mxu0 0.0
        %2727 = vmatpush1.msra.mxu0 0.0
        %2728 = vmatprep.subr.mxu0 0.0
        %2729 = vmatpush1.msra.mxu0 0.0
        %2730 = vmatprep.subr.mxu0 0.0
        %2731 = vmatpush1.msra.mxu0 0.0
        %2732 = vmatprep.subr.mxu0 0.0
        %2733 = vmatpush1.msra.mxu0 0.0
        %2734 = vmatprep.subr.mxu0 0.0
        %2735 = vmatpush1.msra.mxu0 0.0
        %2736 = vmatprep.subr.mxu0 0.0
        %2737 = vmatpush1.msra.mxu0 0.0
        %2738 = vmatprep.subr.mxu0 0.0
        %2739 = vmatpush1.msra.mxu0 0.0
        %2740 = vmatprep.subr.mxu0 0.0
        %2741 = vmatpush1.msra.mxu0 0.0
        %2742 = vmatprep.subr.mxu0 0.0
        %2743 = vmatpush1.msra.mxu0 0.0
        %2744 = vmatprep.subr.mxu0 0.0
        %2745 = vmatpush1.msra.mxu0 0.0
        %2746 = vmatprep.subr.mxu0 0.0
        %2747 = vmatpush1.msra.mxu0 0.0
        %2748 = vmatprep.subr.mxu0 0.0
        %2749 = vmatpush1.msra.mxu0 0.0
        %2750 = vmatprep.subr.mxu0 0.0
        %2751 = vmatpush1.msra.mxu0 0.0
        %2752 = vmatprep.subr.mxu0 0.0
        %2753 = vmatpush1.msra.mxu0 0.0
        %2754 = vmatprep.subr.mxu0 0.0
        %2755 = vmatpush1.msra.mxu0 0.0
        %2756 = vmatprep.subr.mxu0 0.0
        %2757 = vmatpush1.msra.mxu0 0.0
        %2758 = vmatprep.subr.mxu0 0.0
        %2759 = vmatpush1.msra.mxu0 0.0
        %2760 = vmatprep.subr.mxu0 0.0
        %2761 = vmatpush1.msra.mxu0 0.0
        %2762 = vmatprep.subr.mxu0 0.0
        %2763 = vmatpush1.msra.mxu0 0.0
        %2764 = vmatprep.subr.mxu0 0.0
        %2765 = vmatpush1.msra.mxu0 0.0
        %2766 = vmatprep.subr.mxu0 0.0
        %2767 = vmatpush1.msra.mxu0 0.0
        %2768 = vmatprep.subr.mxu0 0.0
        %2769 = vmatpush1.msra.mxu0 0.0
        %2770 = vmatprep.subr.mxu0 0.0
        %2771 = vmatpush1.msra.mxu0 0.0
        %2772 = vmatprep.mubr.f32.mxu0 0.0
        %2773 = vmatmul.mubr.f32.gmra.mrb[0].mxu0 %v610
        %v2774 = vpop.f32.mrb[0].mxu0
        %v2775 = vadd.f32 %v2706, %v2774
        %v2776 = vpop.f32.mrb[0].mxu0
        %2777 = vmatprep.mubr.f32.mxu0 0.0
        %2778 = vmatmul.mubr.f32.gmra.mrb[0].mxu0 %v613
        %v2779 = vpop.f32.mrb[0].mxu0
        %v2780 = vadd.f32 %v2706, %v2779
        %v2781 = vpop.f32.mrb[0].mxu0
        %2782 = vdwg.mxu0
        %s2783 = scalar_lea.vmem %s5, 96
        %v2784 = vld [vmem:[%s2783] sm:$0xff]
        %v2785 = vld [vmem:[%s2783 + $0x8] sm:$0xff]
        %v2786 = vld [vmem:[%s2783 + $0x10] sm:$0xff]
        %v2787 = vld [vmem:[%s2783 + $0x18] sm:$0xff]
        %s2788 = scalar_lea.vmem %s8, 3
        %v2789 = vld [vmem:[%s2788] sm:$0x1]
        %v2791 = vlaneseq
        %v2792 = vshrl.u32 %v2791, 7
        %v2793 = vsub.s32 0, %v2792
        %v2794 = vrot.slane %v2789, %v2793
        %2796 = vmatprep.subr.mxu0 0.0
        %2797 = vmatpush1.msra.mxu0 %v2784
        %2798 = vmatprep.subr.mxu0 0.0
        %2799 = vmatpush1.msra.mxu0 %v2785
        %2800 = vmatprep.subr.mxu0 0.0
        %2801 = vmatpush1.msra.mxu0 %v2786
        %2802 = vmatprep.subr.mxu0 0.0
        %2803 = vmatpush1.msra.mxu0 %v2787
        %2804 = vmatprep.subr.mxu0 0.0
        %2805 = vmatpush1.msra.mxu0 0.0
        %2806 = vmatprep.subr.mxu0 0.0
        %2807 = vmatpush1.msra.mxu0 0.0
        %2808 = vmatprep.subr.mxu0 0.0
        %2809 = vmatpush1.msra.mxu0 0.0
        %2810 = vmatprep.subr.mxu0 0.0
        %2811 = vmatpush1.msra.mxu0 0.0
        %2812 = vmatprep.subr.mxu0 0.0
        %2813 = vmatpush1.msra.mxu0 0.0
        %2814 = vmatprep.subr.mxu0 0.0
        %2815 = vmatpush1.msra.mxu0 0.0
        %2816 = vmatprep.subr.mxu0 0.0
        %2817 = vmatpush1.msra.mxu0 0.0
        %2818 = vmatprep.subr.mxu0 0.0
        %2819 = vmatpush1.msra.mxu0 0.0
        %2820 = vmatprep.subr.mxu0 0.0
        %2821 = vmatpush1.msra.mxu0 0.0
        %2822 = vmatprep.subr.mxu0 0.0
        %2823 = vmatpush1.msra.mxu0 0.0
        %2824 = vmatprep.subr.mxu0 0.0
        %2825 = vmatpush1.msra.mxu0 0.0
        %2826 = vmatprep.subr.mxu0 0.0
        %2827 = vmatpush1.msra.mxu0 0.0
        %2828 = vmatprep.subr.mxu0 0.0
        %2829 = vmatpush1.msra.mxu0 0.0
        %2830 = vmatprep.subr.mxu0 0.0
        %2831 = vmatpush1.msra.mxu0 0.0
        %2832 = vmatprep.subr.mxu0 0.0
        %2833 = vmatpush1.msra.mxu0 0.0
        %2834 = vmatprep.subr.mxu0 0.0
        %2835 = vmatpush1.msra.mxu0 0.0
        %2836 = vmatprep.subr.mxu0 0.0
        %2837 = vmatpush1.msra.mxu0 0.0
        %2838 = vmatprep.subr.mxu0 0.0
        %2839 = vmatpush1.msra.mxu0 0.0
        %2840 = vmatprep.subr.mxu0 0.0
        %2841 = vmatpush1.msra.mxu0 0.0
        %2842 = vmatprep.subr.mxu0 0.0
        %2843 = vmatpush1.msra.mxu0 0.0
        %2844 = vmatprep.subr.mxu0 0.0
        %2845 = vmatpush1.msra.mxu0 0.0
        %2846 = vmatprep.subr.mxu0 0.0
        %2847 = vmatpush1.msra.mxu0 0.0
        %2848 = vmatprep.subr.mxu0 0.0
        %2849 = vmatpush1.msra.mxu0 0.0
        %2850 = vmatprep.subr.mxu0 0.0
        %2851 = vmatpush1.msra.mxu0 0.0
        %2852 = vmatprep.subr.mxu0 0.0
        %2853 = vmatpush1.msra.mxu0 0.0
        %2854 = vmatprep.subr.mxu0 0.0
        %2855 = vmatpush1.msra.mxu0 0.0
        %2856 = vmatprep.subr.mxu0 0.0
        %2857 = vmatpush1.msra.mxu0 0.0
        %2858 = vmatprep.subr.mxu0 0.0
        %2859 = vmatpush1.msra.mxu0 0.0
        %2860 = vmatprep.mubr.f32.mxu0 0.0
        %2861 = vmatmul.mubr.f32.gmra.mrb[0].mxu0 %v610
        %v2862 = vpop.f32.mrb[0].mxu0
        %v2863 = vadd.f32 %v2794, %v2862
        %v2864 = vpop.f32.mrb[0].mxu0
        %2865 = vmatprep.mubr.f32.mxu0 0.0
        %2866 = vmatmul.mubr.f32.gmra.mrb[0].mxu0 %v613
        %v2867 = vpop.f32.mrb[0].mxu0
        %v2868 = vadd.f32 %v2794, %v2867
        %v2869 = vpop.f32.mrb[0].mxu0
        %2870 = vdwg.mxu0
        %v2871 = vmul.f32 %v2687, 0.35355338
        %v2872 = vmul.f32 %v2692, 0.35355338
        %v2874 = vsel %vm864, %v2871, 0
        %v2877 = vsel %vm864, %v2775, 0
        %2879 = vmatprep.subr.mxu0 0.0
        %2880 = vmatpush1.xpose.msra.mxu0 %v2877
        %2881 = vmatprep.subr.mxu0 0.0
        %2882 = vmatpush1.xpose.msra.mxu0 0.0
        %2883 = vmatprep.subr.mxu0 0.0
        %2884 = vmatpush1.xpose.msra.mxu0 0.0
        %2885 = vmatprep.subr.mxu0 0.0
        %2886 = vmatpush1.xpose.msra.mxu0 0.0
        %2887 = vmatprep.subr.mxu0 0.0
        %2888 = vmatpush1.xpose.msra.mxu0 0.0
        %2889 = vmatprep.subr.mxu0 0.0
        %2890 = vmatpush1.xpose.msra.mxu0 0.0
        %2891 = vmatprep.subr.mxu0 0.0
        %2892 = vmatpush1.xpose.msra.mxu0 0.0
        %2893 = vmatprep.subr.mxu0 0.0
        %2894 = vmatpush1.xpose.msra.mxu0 0.0
        %2895 = vmatprep.subr.mxu0 0.0
        %2896 = vmatpush1.xpose.msra.mxu0 0.0
        %2897 = vmatprep.subr.mxu0 0.0
        %2898 = vmatpush1.xpose.msra.mxu0 0.0
        %2899 = vmatprep.subr.mxu0 0.0
        %2900 = vmatpush1.xpose.msra.mxu0 0.0
        %2901 = vmatprep.subr.mxu0 0.0
        %2902 = vmatpush1.xpose.msra.mxu0 0.0
        %2903 = vmatprep.subr.mxu0 0.0
        %2904 = vmatpush1.xpose.msra.mxu0 0.0
        %2905 = vmatprep.subr.mxu0 0.0
        %2906 = vmatpush1.xpose.msra.mxu0 0.0
        %2907 = vmatprep.subr.mxu0 0.0
        %2908 = vmatpush1.xpose.msra.mxu0 0.0
        %2909 = vmatprep.subr.mxu0 0.0
        %2910 = vmatpush1.xpose.msra.mxu0 0.0
        %2911 = vmatprep.subr.mxu0 0.0
        %2912 = vmatpush1.xpose.msra.mxu0 0.0
        %2913 = vmatprep.subr.mxu0 0.0
        %2914 = vmatpush1.xpose.msra.mxu0 0.0
        %2915 = vmatprep.subr.mxu0 0.0
        %2916 = vmatpush1.xpose.msra.mxu0 0.0
        %2917 = vmatprep.subr.mxu0 0.0
        %2918 = vmatpush1.xpose.msra.mxu0 0.0
        %2919 = vmatprep.subr.mxu0 0.0
        %2920 = vmatpush1.xpose.msra.mxu0 0.0
        %2921 = vmatprep.subr.mxu0 0.0
        %2922 = vmatpush1.xpose.msra.mxu0 0.0
        %2923 = vmatprep.subr.mxu0 0.0
        %2924 = vmatpush1.xpose.msra.mxu0 0.0
        %2925 = vmatprep.subr.mxu0 0.0
        %2926 = vmatpush1.xpose.msra.mxu0 0.0
        %2927 = vmatprep.subr.mxu0 0.0
        %2928 = vmatpush1.xpose.msra.mxu0 0.0
        %2929 = vmatprep.subr.mxu0 0.0
        %2930 = vmatpush1.xpose.msra.mxu0 0.0
        %2931 = vmatprep.subr.mxu0 0.0
        %2932 = vmatpush1.xpose.msra.mxu0 0.0
        %2933 = vmatprep.subr.mxu0 0.0
        %2934 = vmatpush1.xpose.msra.mxu0 0.0
        %2935 = vmatprep.subr.mxu0 0.0
        %2936 = vmatpush1.xpose.msra.mxu0 0.0
        %2937 = vmatprep.subr.mxu0 0.0
        %2938 = vmatpush1.xpose.msra.mxu0 0.0
        %2939 = vmatprep.subr.mxu0 0.0
        %2940 = vmatpush1.xpose.msra.mxu0 0.0
        %2941 = vmatprep.subr.mxu0 0.0
        %2942 = vmatpush1.xpose.msra.mxu0 0.0
        %2943 = vmatprep.mubr.f32.mxu0 0.0
        %2944 = vmatmul.mubr.f32.gmra.mrb[0].mxu0 %v2874
        %v2945 = vpop.f32.mrb[0].mxu0
        %v2946 = vadd.f32 0.0, %v2945
        %v2947 = vpop.f32.mrb[0].mxu0
        %2948 = vdwg.mxu0
        %v2950 = vsel %vm864, %v2872, 0
        %v2953 = vsel %vm864, %v2780, 0
        %2955 = vmatprep.subr.mxu0 0.0
        %2956 = vmatpush1.xpose.msra.mxu0 %v2953
        %2957 = vmatprep.subr.mxu0 0.0
        %2958 = vmatpush1.xpose.msra.mxu0 0.0
        %2959 = vmatprep.subr.mxu0 0.0
        %2960 = vmatpush1.xpose.msra.mxu0 0.0
        %2961 = vmatprep.subr.mxu0 0.0
        %2962 = vmatpush1.xpose.msra.mxu0 0.0
        %2963 = vmatprep.subr.mxu0 0.0
        %2964 = vmatpush1.xpose.msra.mxu0 0.0
        %2965 = vmatprep.subr.mxu0 0.0
        %2966 = vmatpush1.xpose.msra.mxu0 0.0
        %2967 = vmatprep.subr.mxu0 0.0
        %2968 = vmatpush1.xpose.msra.mxu0 0.0
        %2969 = vmatprep.subr.mxu0 0.0
        %2970 = vmatpush1.xpose.msra.mxu0 0.0
        %2971 = vmatprep.subr.mxu0 0.0
        %2972 = vmatpush1.xpose.msra.mxu0 0.0
        %2973 = vmatprep.subr.mxu0 0.0
        %2974 = vmatpush1.xpose.msra.mxu0 0.0
        %2975 = vmatprep.subr.mxu0 0.0
        %2976 = vmatpush1.xpose.msra.mxu0 0.0
        %2977 = vmatprep.subr.mxu0 0.0
        %2978 = vmatpush1.xpose.msra.mxu0 0.0
        %2979 = vmatprep.subr.mxu0 0.0
        %2980 = vmatpush1.xpose.msra.mxu0 0.0
        %2981 = vmatprep.subr.mxu0 0.0
        %2982 = vmatpush1.xpose.msra.mxu0 0.0
        %2983 = vmatprep.subr.mxu0 0.0
        %2984 = vmatpush1.xpose.msra.mxu0 0.0
        %2985 = vmatprep.subr.mxu0 0.0
        %2986 = vmatpush1.xpose.msra.mxu0 0.0
        %2987 = vmatprep.subr.mxu0 0.0
        %2988 = vmatpush1.xpose.msra.mxu0 0.0
        %2989 = vmatprep.subr.mxu0 0.0
        %2990 = vmatpush1.xpose.msra.mxu0 0.0
        %2991 = vmatprep.subr.mxu0 0.0
        %2992 = vmatpush1.xpose.msra.mxu0 0.0
        %2993 = vmatprep.subr.mxu0 0.0
        %2994 = vmatpush1.xpose.msra.mxu0 0.0
        %2995 = vmatprep.subr.mxu0 0.0
        %2996 = vmatpush1.xpose.msra.mxu0 0.0
        %2997 = vmatprep.subr.mxu0 0.0
        %2998 = vmatpush1.xpose.msra.mxu0 0.0
        %2999 = vmatprep.subr.mxu0 0.0
        %3000 = vmatpush1.xpose.msra.mxu0 0.0
        %3001 = vmatprep.subr.mxu0 0.0
        %3002 = vmatpush1.xpose.msra.mxu0 0.0
        %3003 = vmatprep.subr.mxu0 0.0
        %3004 = vmatpush1.xpose.msra.mxu0 0.0
        %3005 = vmatprep.subr.mxu0 0.0
        %3006 = vmatpush1.xpose.msra.mxu0 0.0
        %3007 = vmatprep.subr.mxu0 0.0
        %3008 = vmatpush1.xpose.msra.mxu0 0.0
        %3009 = vmatprep.subr.mxu0 0.0
        %3010 = vmatpush1.xpose.msra.mxu0 0.0
        %3011 = vmatprep.subr.mxu0 0.0
        %3012 = vmatpush1.xpose.msra.mxu0 0.0
        %3013 = vmatprep.subr.mxu0 0.0
        %3014 = vmatpush1.xpose.msra.mxu0 0.0
        %3015 = vmatprep.subr.mxu0 0.0
        %3016 = vmatpush1.xpose.msra.mxu0 0.0
        %3017 = vmatprep.subr.mxu0 0.0
        %3018 = vmatpush1.xpose.msra.mxu0 0.0
        %3019 = vmatprep.mubr.f32.mxu0 0.0
        %3020 = vmatmul.mubr.f32.gmra.mrb[0].mxu0 %v2950
        %v3021 = vpop.f32.mrb[0].mxu0
        %v3022 = vadd.f32 0.0, %v3021
        %v3023 = vpop.f32.mrb[0].mxu0
        %3024 = vdwg.mxu0
        %v3025 = vsel %vm864, %v2946, -inf
        %3026 = vmax.xlane.f32.xlu0 %v3025
        %v3027 = vpop.xlane.xlu0 %3026
        %v3028 = vsel %vm864, %v3022, -inf
        %3029 = vmax.xlane.f32.xlu0 %v3028
        %v3030 = vpop.xlane.xlu0 %3029
        %v3031 = vsub.f32 %v2946, %v3027
        %v3032 = vsub.f32 %v3022, %v3030
        %v3033 = vmul.f32 %v3031, 1.442695
        %v3034 = vpow.pop %v3033
        %v3035 = vmul.f32 %v3032, 1.442695
        %v3036 = vpow.pop %v3035
        %v3037 = vsel %vm864, %v3034, 0.0
        %3038 = vadd.xlane.f32.xlu0 %v3037
        %v3039 = vpop.xlane.xlu0 %3038
        %v3040 = vsel %vm864, %v3036, 0.0
        %3041 = vadd.xlane.f32.xlu0 %v3040
        %v3042 = vpop.xlane.xlu0 %3041
        %v3044 = vsel %vm864, %v3034, 0
        %3046 = vmatprep.subr.mxu0 0.0
        %3047 = vmatpush1.msra.mxu0 %v2863
        %3048 = vmatprep.subr.mxu0 0.0
        %3049 = vmatpush1.msra.mxu0 0.0
        %3050 = vmatprep.subr.mxu0 0.0
        %3051 = vmatpush1.msra.mxu0 0.0
        %3052 = vmatprep.subr.mxu0 0.0
        %3053 = vmatpush1.msra.mxu0 0.0
        %3054 = vmatprep.subr.mxu0 0.0
        %3055 = vmatpush1.msra.mxu0 0.0
        %3056 = vmatprep.subr.mxu0 0.0
        %3057 = vmatpush1.msra.mxu0 0.0
        %3058 = vmatprep.subr.mxu0 0.0
        %3059 = vmatpush1.msra.mxu0 0.0
        %3060 = vmatprep.subr.mxu0 0.0
        %3061 = vmatpush1.msra.mxu0 0.0
        %3062 = vmatprep.subr.mxu0 0.0
        %3063 = vmatpush1.msra.mxu0 0.0
        %3064 = vmatprep.subr.mxu0 0.0
        %3065 = vmatpush1.msra.mxu0 0.0
        %3066 = vmatprep.subr.mxu0 0.0
        %3067 = vmatpush1.msra.mxu0 0.0
        %3068 = vmatprep.subr.mxu0 0.0
        %3069 = vmatpush1.msra.mxu0 0.0
        %3070 = vmatprep.subr.mxu0 0.0
        %3071 = vmatpush1.msra.mxu0 0.0
        %3072 = vmatprep.subr.mxu0 0.0
        %3073 = vmatpush1.msra.mxu0 0.0
        %3074 = vmatprep.subr.mxu0 0.0
        %3075 = vmatpush1.msra.mxu0 0.0
        %3076 = vmatprep.subr.mxu0 0.0
        %3077 = vmatpush1.msra.mxu0 0.0
        %3078 = vmatprep.subr.mxu0 0.0
        %3079 = vmatpush1.msra.mxu0 0.0
        %3080 = vmatprep.subr.mxu0 0.0
        %3081 = vmatpush1.msra.mxu0 0.0
        %3082 = vmatprep.subr.mxu0 0.0
        %3083 = vmatpush1.msra.mxu0 0.0
        %3084 = vmatprep.subr.mxu0 0.0
        %3085 = vmatpush1.msra.mxu0 0.0
        %3086 = vmatprep.subr.mxu0 0.0
        %3087 = vmatpush1.msra.mxu0 0.0
        %3088 = vmatprep.subr.mxu0 0.0
        %3089 = vmatpush1.msra.mxu0 0.0
        %3090 = vmatprep.subr.mxu0 0.0
        %3091 = vmatpush1.msra.mxu0 0.0
        %3092 = vmatprep.subr.mxu0 0.0
        %3093 = vmatpush1.msra.mxu0 0.0
        %3094 = vmatprep.subr.mxu0 0.0
        %3095 = vmatpush1.msra.mxu0 0.0
        %3096 = vmatprep.subr.mxu0 0.0
        %3097 = vmatpush1.msra.mxu0 0.0
        %3098 = vmatprep.subr.mxu0 0.0
        %3099 = vmatpush1.msra.mxu0 0.0
        %3100 = vmatprep.subr.mxu0 0.0
        %3101 = vmatpush1.msra.mxu0 0.0
        %3102 = vmatprep.subr.mxu0 0.0
        %3103 = vmatpush1.msra.mxu0 0.0
        %3104 = vmatprep.subr.mxu0 0.0
        %3105 = vmatpush1.msra.mxu0 0.0
        %3106 = vmatprep.subr.mxu0 0.0
        %3107 = vmatpush1.msra.mxu0 0.0
        %3108 = vmatprep.subr.mxu0 0.0
        %3109 = vmatpush1.msra.mxu0 0.0
        %3110 = vmatprep.mubr.f32.mxu0 0.0
        %3111 = vmatmul.mubr.f32.gmra.mrb[0].mxu0 %v3044
        %v3112 = vpop.f32.mrb[0].mxu0
        %v3113 = vadd.f32 0.0, %v3112
        %v3114 = vpop.f32.mrb[0].mxu0
        %3115 = vdwg.mxu0
        %v3117 = vsel %vm864, %v3036, 0
        %3119 = vmatprep.subr.mxu0 0.0
        %3120 = vmatpush1.msra.mxu0 %v2868
        %3121 = vmatprep.subr.mxu0 0.0
        %3122 = vmatpush1.msra.mxu0 0.0
        %3123 = vmatprep.subr.mxu0 0.0
        %3124 = vmatpush1.msra.mxu0 0.0
        %3125 = vmatprep.subr.mxu0 0.0
        %3126 = vmatpush1.msra.mxu0 0.0
        %3127 = vmatprep.subr.mxu0 0.0
        %3128 = vmatpush1.msra.mxu0 0.0
        %3129 = vmatprep.subr.mxu0 0.0
        %3130 = vmatpush1.msra.mxu0 0.0
        %3131 = vmatprep.subr.mxu0 0.0
        %3132 = vmatpush1.msra.mxu0 0.0
        %3133 = vmatprep.subr.mxu0 0.0
        %3134 = vmatpush1.msra.mxu0 0.0
        %3135 = vmatprep.subr.mxu0 0.0
        %3136 = vmatpush1.msra.mxu0 0.0
        %3137 = vmatprep.subr.mxu0 0.0
        %3138 = vmatpush1.msra.mxu0 0.0
        %3139 = vmatprep.subr.mxu0 0.0
        %3140 = vmatpush1.msra.mxu0 0.0
        %3141 = vmatprep.subr.mxu0 0.0
        %3142 = vmatpush1.msra.mxu0 0.0
        %3143 = vmatprep.subr.mxu0 0.0
        %3144 = vmatpush1.msra.mxu0 0.0
        %3145 = vmatprep.subr.mxu0 0.0
        %3146 = vmatpush1.msra.mxu0 0.0
        %3147 = vmatprep.subr.mxu0 0.0
        %3148 = vmatpush1.msra.mxu0 0.0
        %3149 = vmatprep.subr.mxu0 0.0
        %3150 = vmatpush1.msra.mxu0 0.0
        %3151 = vmatprep.subr.mxu0 0.0
        %3152 = vmatpush1.msra.mxu0 0.0
        %3153 = vmatprep.subr.mxu0 0.0
        %3154 = vmatpush1.msra.mxu0 0.0
        %3155 = vmatprep.subr.mxu0 0.0
        %3156 = vmatpush1.msra.mxu0 0.0
        %3157 = vmatprep.subr.mxu0 0.0
        %3158 = vmatpush1.msra.mxu0 0.0
        %3159 = vmatprep.subr.mxu0 0.0
        %3160 = vmatpush1.msra.mxu0 0.0
        %3161 = vmatprep.subr.mxu0 0.0
        %3162 = vmatpush1.msra.mxu0 0.0
        %3163 = vmatprep.subr.mxu0 0.0
        %3164 = vmatpush1.msra.mxu0 0.0
        %3165 = vmatprep.subr.mxu0 0.0
        %3166 = vmatpush1.msra.mxu0 0.0
        %3167 = vmatprep.subr.mxu0 0.0
        %3168 = vmatpush1.msra.mxu0 0.0
        %3169 = vmatprep.subr.mxu0 0.0
        %3170 = vmatpush1.msra.mxu0 0.0
        %3171 = vmatprep.subr.mxu0 0.0
        %3172 = vmatpush1.msra.mxu0 0.0
        %3173 = vmatprep.subr.mxu0 0.0
        %3174 = vmatpush1.msra.mxu0 0.0
        %3175 = vmatprep.subr.mxu0 0.0
        %3176 = vmatpush1.msra.mxu0 0.0
        %3177 = vmatprep.subr.mxu0 0.0
        %3178 = vmatpush1.msra.mxu0 0.0
        %3179 = vmatprep.subr.mxu0 0.0
        %3180 = vmatpush1.msra.mxu0 0.0
        %3181 = vmatprep.subr.mxu0 0.0
        %3182 = vmatpush1.msra.mxu0 0.0
        %3183 = vmatprep.mubr.f32.mxu0 0.0
        %3184 = vmatmul.mubr.f32.gmra.mrb[0].mxu0 %v3117
        %v3185 = vpop.f32.mrb[0].mxu0
        %v3186 = vadd.f32 0.0, %v3185
        %v3187 = vpop.f32.mrb[0].mxu0
        %3188 = vdwg.mxu0
        %v3189 = vrcp.pop %v3039
        %v3190 = vrcp.pop %v3042
        %v3191 = vmul.f32 %v3113, %v3189
        %v3192 = vmul.f32 %v3186, %v3190
        %s3193 = scalar_lea.vmem %s9, 24
        %v3194 = vld [vmem:[%s3193] sm:$0xff]
        %v3196 = vsel %vm864, %v3191, 0
        %v3199 = vsel %vm864, %v3192, 0
        %3201 = vmatprep.subr.mxu0 0.0
        %3202 = vmatpush1.msra.mxu0 %v3194
        %3203 = vmatprep.subr.mxu0 0.0
        %3204 = vmatpush1.msra.mxu0 0.0
        %3205 = vmatprep.subr.mxu0 0.0
        %3206 = vmatpush1.msra.mxu0 0.0
        %3207 = vmatprep.subr.mxu0 0.0
        %3208 = vmatpush1.msra.mxu0 0.0
        %3209 = vmatprep.subr.mxu0 0.0
        %3210 = vmatpush1.msra.mxu0 0.0
        %3211 = vmatprep.subr.mxu0 0.0
        %3212 = vmatpush1.msra.mxu0 0.0
        %3213 = vmatprep.subr.mxu0 0.0
        %3214 = vmatpush1.msra.mxu0 0.0
        %3215 = vmatprep.subr.mxu0 0.0
        %3216 = vmatpush1.msra.mxu0 0.0
        %3217 = vmatprep.subr.mxu0 0.0
        %3218 = vmatpush1.msra.mxu0 0.0
        %3219 = vmatprep.subr.mxu0 0.0
        %3220 = vmatpush1.msra.mxu0 0.0
        %3221 = vmatprep.subr.mxu0 0.0
        %3222 = vmatpush1.msra.mxu0 0.0
        %3223 = vmatprep.subr.mxu0 0.0
        %3224 = vmatpush1.msra.mxu0 0.0
        %3225 = vmatprep.subr.mxu0 0.0
        %3226 = vmatpush1.msra.mxu0 0.0
        %3227 = vmatprep.subr.mxu0 0.0
        %3228 = vmatpush1.msra.mxu0 0.0
        %3229 = vmatprep.subr.mxu0 0.0
        %3230 = vmatpush1.msra.mxu0 0.0
        %3231 = vmatprep.subr.mxu0 0.0
        %3232 = vmatpush1.msra.mxu0 0.0
        %3233 = vmatprep.subr.mxu0 0.0
        %3234 = vmatpush1.msra.mxu0 0.0
        %3235 = vmatprep.subr.mxu0 0.0
        %3236 = vmatpush1.msra.mxu0 0.0
        %3237 = vmatprep.subr.mxu0 0.0
        %3238 = vmatpush1.msra.mxu0 0.0
        %3239 = vmatprep.subr.mxu0 0.0
        %3240 = vmatpush1.msra.mxu0 0.0
        %3241 = vmatprep.subr.mxu0 0.0
        %3242 = vmatpush1.msra.mxu0 0.0
        %3243 = vmatprep.subr.mxu0 0.0
        %3244 = vmatpush1.msra.mxu0 0.0
        %3245 = vmatprep.subr.mxu0 0.0
        %3246 = vmatpush1.msra.mxu0 0.0
        %3247 = vmatprep.subr.mxu0 0.0
        %3248 = vmatpush1.msra.mxu0 0.0
        %3249 = vmatprep.subr.mxu0 0.0
        %3250 = vmatpush1.msra.mxu0 0.0
        %3251 = vmatprep.subr.mxu0 0.0
        %3252 = vmatpush1.msra.mxu0 0.0
        %3253 = vmatprep.subr.mxu0 0.0
        %3254 = vmatpush1.msra.mxu0 0.0
        %3255 = vmatprep.subr.mxu0 0.0
        %3256 = vmatpush1.msra.mxu0 0.0
        %3257 = vmatprep.subr.mxu0 0.0
        %3258 = vmatpush1.msra.mxu0 0.0
        %3259 = vmatprep.subr.mxu0 0.0
        %3260 = vmatpush1.msra.mxu0 0.0
        %3261 = vmatprep.subr.mxu0 0.0
        %3262 = vmatpush1.msra.mxu0 0.0
        %3263 = vmatprep.subr.mxu0 0.0
        %3264 = vmatpush1.msra.mxu0 0.0
        %3265 = vmatprep.mubr.f32.mxu0 0.0
        %3266 = vmatmul.mubr.f32.gmra.mrb[0].mxu0 %v3196
        %v3267 = vpop.f32.mrb[0].mxu0
        %v3268 = vadd.f32 0.0, %v3267
        %v3269 = vpop.f32.mrb[0].mxu0
        %3270 = vmatprep.mubr.f32.mxu0 0.0
        %3271 = vmatmul.mubr.f32.gmra.mrb[0].mxu0 %v3199
        %v3272 = vpop.f32.mrb[0].mxu0
        %v3273 = vadd.f32 0.0, %v3272
        %v3274 = vpop.f32.mrb[0].mxu0
        %3275 = vdwg.mxu0
        %v3276 = vadd.f32 %v2605, %v3268
        %v3277 = vadd.f32 %v2606, %v3273
        %v3278 = vadd.f32 %v550, %v3276
        %v3279 = vadd.f32 %v551, %v3277
        %v3280 = vld [vmem:[%s10] sm:$0x1]
        %v3282 = vlaneseq
        %v3283 = vshrl.u32 %v3282, 7
        %v3284 = vsub.s32 0, %v3283
        %v3285 = vrot.slane %v3280, %v3284
        %v3287 = vadd.f32 %v3278, %v3285
        %v3288 = vadd.f32 %v3279, %v3285
        %v3289 = vld [vmem:[%s11] sm:$0x1]
        %v3290 = vld [vmem:[%s12] sm:$0x1]
        %v3291 = vsel %vm554, %v3287, 0.0
        %3292 = vadd.xlane.f32.xlu0 %v3291
        %v3293 = vpop.xlane.xlu0 %3292
        %v3294 = vsel %vm554, %v3288, 0.0
        %3295 = vadd.xlane.f32.xlu0 %v3294
        %v3296 = vpop.xlane.xlu0 %3295
        %v3297 = vmul.f32 %v3293, %v561
        %v3298 = vmul.f32 %v3296, %v561
        %v3299 = vsub.f32 %v3287, %v3297
        %v3300 = vsub.f32 %v3288, %v3298
        %v3301 = vmul.f32 %v3299, %v3299
        %v3302 = vmul.f32 %v3300, %v3300
        %v3303 = vsel %vm554, %v3301, 0.0
        %3304 = vadd.xlane.f32.xlu0 %v3303
        %v3305 = vpop.xlane.xlu0 %3304
        %v3306 = vsel %vm554, %v3302, 0.0
        %3307 = vadd.xlane.f32.xlu0 %v3306
        %v3308 = vpop.xlane.xlu0 %3307
        %v3309 = vmul.f32 %v3305, %v561
        %v3310 = vmul.f32 %v3308, %v561
        %v3311 = vadd.f32 %v3309, 1e-05
        %v3312 = vadd.f32 %v3310, 1e-05
        %v3313 = vrsqrt.pop %v3311
        %v3314 = vrsqrt.pop %v3312
        %v3315 = vmul.f32 %v3299, %v3313
        %v3316 = vmul.f32 %v3300, %v3314
        %v3318 = vlaneseq
        %v3319 = vshrl.u32 %v3318, 7
        %v3320 = vsub.s32 0, %v3319
        %v3321 = vrot.slane %v3289, %v3320
        %v3323 = vmul.f32 %v3315, %v3321
        %v3324 = vmul.f32 %v3316, %v3321
        %v3326 = vlaneseq
        %v3327 = vshrl.u32 %v3326, 7
        %v3328 = vsub.s32 0, %v3327
        %v3329 = vrot.slane %v3290, %v3328
        %v3331 = vadd.f32 %v3323, %v3329
        %v3332 = vadd.f32 %v3324, %v3329
        %v3333 = vld [vmem:[%s13] sm:$0xff]
        %v3334 = vld [vmem:[%s13 + $0x8] sm:$0xff]
        %v3335 = vld [vmem:[%s13 + $0x10] sm:$0xff]
        %v3336 = vld [vmem:[%s13 + $0x18] sm:$0xff]
        %v3337 = vld [vmem:[%s14] sm:$0x1]
        %v3339 = vlaneseq
        %v3340 = vshrl.u32 %v3339, 7
        %v3341 = vsub.s32 0, %v3340
        %v3342 = vrot.slane %v3337, %v3341
        %v3345 = vsel %vm554, %v3331, 0
        %v3348 = vsel %vm554, %v3332, 0
        %3350 = vmatprep.subr.mxu0 0.0
        %3351 = vmatpush1.msra.mxu0 %v3333
        %3352 = vmatprep.subr.mxu0 0.0
        %3353 = vmatpush1.msra.mxu0 %v3334
        %3354 = vmatprep.subr.mxu0 0.0
        %3355 = vmatpush1.msra.mxu0 %v3335
        %3356 = vmatprep.subr.mxu0 0.0
        %3357 = vmatpush1.msra.mxu0 %v3336
        %3358 = vmatprep.subr.mxu0 0.0
        %3359 = vmatpush1.msra.mxu0 0.0
        %3360 = vmatprep.subr.mxu0 0.0
        %3361 = vmatpush1.msra.mxu0 0.0
        %3362 = vmatprep.subr.mxu0 0.0
        %3363 = vmatpush1.msra.mxu0 0.0
        %3364 = vmatprep.subr.mxu0 0.0
        %3365 = vmatpush1.msra.mxu0 0.0
        %3366 = vmatprep.subr.mxu0 0.0
        %3367 = vmatpush1.msra.mxu0 0.0
        %3368 = vmatprep.subr.mxu0 0.0
        %3369 = vmatpush1.msra.mxu0 0.0
        %3370 = vmatprep.subr.mxu0 0.0
        %3371 = vmatpush1.msra.mxu0 0.0
        %3372 = vmatprep.subr.mxu0 0.0
        %3373 = vmatpush1.msra.mxu0 0.0
        %3374 = vmatprep.subr.mxu0 0.0
        %3375 = vmatpush1.msra.mxu0 0.0
        %3376 = vmatprep.subr.mxu0 0.0
        %3377 = vmatpush1.msra.mxu0 0.0
        %3378 = vmatprep.subr.mxu0 0.0
        %3379 = vmatpush1.msra.mxu0 0.0
        %3380 = vmatprep.subr.mxu0 0.0
        %3381 = vmatpush1.msra.mxu0 0.0
        %3382 = vmatprep.subr.mxu0 0.0
        %3383 = vmatpush1.msra.mxu0 0.0
        %3384 = vmatprep.subr.mxu0 0.0
        %3385 = vmatpush1.msra.mxu0 0.0
        %3386 = vmatprep.subr.mxu0 0.0
        %3387 = vmatpush1.msra.mxu0 0.0
        %3388 = vmatprep.subr.mxu0 0.0
        %3389 = vmatpush1.msra.mxu0 0.0
        %3390 = vmatprep.subr.mxu0 0.0
        %3391 = vmatpush1.msra.mxu0 0.0
        %3392 = vmatprep.subr.mxu0 0.0
        %3393 = vmatpush1.msra.mxu0 0.0
        %3394 = vmatprep.subr.mxu0 0.0
        %3395 = vmatpush1.msra.mxu0 0.0
        %3396 = vmatprep.subr.mxu0 0.0
        %3397 = vmatpush1.msra.mxu0 0.0
        %3398 = vmatprep.subr.mxu0 0.0
        %3399 = vmatpush1.msra.mxu0 0.0
        %3400 = vmatprep.subr.mxu0 0.0
        %3401 = vmatpush1.msra.mxu0 0.0
        %3402 = vmatprep.subr.mxu0 0.0
        %3403 = vmatpush1.msra.mxu0 0.0
        %3404 = vmatprep.subr.mxu0 0.0
        %3405 = vmatpush1.msra.mxu0 0.0
        %3406 = vmatprep.subr.mxu0 0.0
        %3407 = vmatpush1.msra.mxu0 0.0
        %3408 = vmatprep.subr.mxu0 0.0
        %3409 = vmatpush1.msra.mxu0 0.0
        %3410 = vmatprep.subr.mxu0 0.0
        %3411 = vmatpush1.msra.mxu0 0.0
        %3412 = vmatprep.subr.mxu0 0.0
        %3413 = vmatpush1.msra.mxu0 0.0
        %3414 = vmatprep.mubr.f32.mxu0 0.0
        %3415 = vmatmul.mubr.f32.gmra.mrb[0].mxu0 %v3345
        %v3416 = vpop.f32.mrb[0].mxu0
        %v3417 = vadd.f32 %v3342, %v3416
        %v3418 = vpop.f32.mrb[0].mxu0
        %3419 = vmatprep.mubr.f32.mxu0 0.0
        %3420 = vmatmul.mubr.f32.gmra.mrb[0].mxu0 %v3348
        %v3421 = vpop.f32.mrb[0].mxu0
        %v3422 = vadd.f32 %v3342, %v3421
        %v3423 = vpop.f32.mrb[0].mxu0
        %3424 = vdwg.mxu0
        %v3425 = vmul.f32 %v3417, 0.044715
        %v3426 = vmul.f32 %v3422, 0.044715
        %v3427 = vmul.f32 %v3425, %v3417
        %v3428 = vmul.f32 %v3426, %v3422
        %v3429 = vmul.f32 %v3427, %v3417
        %v3430 = vmul.f32 %v3428, %v3422
        %v3431 = vadd.f32 %v3417, %v3429
        %v3432 = vadd.f32 %v3422, %v3430
        %v3433 = vmul.f32 %v3431, 0.7978846
        %v3434 = vmul.f32 %v3432, 0.7978846
        %v3435 = vtanh.pop %v3433
        %v3436 = vtanh.pop %v3434
        %v3437 = vadd.f32 %v3435, 1.0
        %v3438 = vadd.f32 %v3436, 1.0
        %v3439 = vmul.f32 %v3437, 0.5
        %v3440 = vmul.f32 %v3438, 0.5
        %v3441 = vmul.f32 %v3417, %v3439
        %v3442 = vmul.f32 %v3422, %v3440
        %v3443 = vld [vmem:[%s15] sm:$0xff]
        %v3444 = vld [vmem:[%s15 + $0x8] sm:$0xff]
        %v3445 = vld [vmem:[%s15 + $0x10] sm:$0xff]
        %v3446 = vld [vmem:[%s15 + $0x18] sm:$0xff]
        %v3447 = vld [vmem:[%s15 + $0x20] sm:$0xff]
        %v3448 = vld [vmem:[%s15 + $0x28] sm:$0xff]
        %v3449 = vld [vmem:[%s15 + $0x30] sm:$0xff]
        %v3450 = vld [vmem:[%s15 + $0x38] sm:$0xff]
        %v3451 = vld [vmem:[%s16] sm:$0x1]
        %v3453 = vlaneseq
        %v3454 = vshrl.u32 %v3453, 7
        %v3455 = vsub.s32 0, %v3454
        %v3456 = vrot.slane %v3451, %v3455
        %vm3458 = vcmask 523264
        %v3460 = vsel %vm3458, %v3441, 0
        %v3463 = vsel %vm3458, %v3442, 0
        %3465 = vmatprep.subr.mxu0 0.0
        %3466 = vmatpush1.msra.mxu0 %v3443
        %3467 = vmatprep.subr.mxu0 0.0
        %3468 = vmatpush1.msra.mxu0 %v3444
        %3469 = vmatprep.subr.mxu0 0.0
        %3470 = vmatpush1.msra.mxu0 %v3445
        %3471 = vmatprep.subr.mxu0 0.0
        %3472 = vmatpush1.msra.mxu0 %v3446
        %3473 = vmatprep.subr.mxu0 0.0
        %3474 = vmatpush1.msra.mxu0 %v3447
        %3475 = vmatprep.subr.mxu0 0.0
        %3476 = vmatpush1.msra.mxu0 %v3448
        %3477 = vmatprep.subr.mxu0 0.0
        %3478 = vmatpush1.msra.mxu0 %v3449
        %3479 = vmatprep.subr.mxu0 0.0
        %3480 = vmatpush1.msra.mxu0 %v3450
        %3481 = vmatprep.subr.mxu0 0.0
        %3482 = vmatpush1.msra.mxu0 0.0
        %3483 = vmatprep.subr.mxu0 0.0
        %3484 = vmatpush1.msra.mxu0 0.0
        %3485 = vmatprep.subr.mxu0 0.0
        %3486 = vmatpush1.msra.mxu0 0.0
        %3487 = vmatprep.subr.mxu0 0.0
        %3488 = vmatpush1.msra.mxu0 0.0
        %3489 = vmatprep.subr.mxu0 0.0
        %3490 = vmatpush1.msra.mxu0 0.0
        %3491 = vmatprep.subr.mxu0 0.0
        %3492 = vmatpush1.msra.mxu0 0.0
        %3493 = vmatprep.subr.mxu0 0.0
        %3494 = vmatpush1.msra.mxu0 0.0
        %3495 = vmatprep.subr.mxu0 0.0
        %3496 = vmatpush1.msra.mxu0 0.0
        %3497 = vmatprep.subr.mxu0 0.0
        %3498 = vmatpush1.msra.mxu0 0.0
        %3499 = vmatprep.subr.mxu0 0.0
        %3500 = vmatpush1.msra.mxu0 0.0
        %3501 = vmatprep.subr.mxu0 0.0
        %3502 = vmatpush1.msra.mxu0 0.0
        %3503 = vmatprep.subr.mxu0 0.0
        %3504 = vmatpush1.msra.mxu0 0.0
        %3505 = vmatprep.subr.mxu0 0.0
        %3506 = vmatpush1.msra.mxu0 0.0
        %3507 = vmatprep.subr.mxu0 0.0
        %3508 = vmatpush1.msra.mxu0 0.0
        %3509 = vmatprep.subr.mxu0 0.0
        %3510 = vmatpush1.msra.mxu0 0.0
        %3511 = vmatprep.subr.mxu0 0.0
        %3512 = vmatpush1.msra.mxu0 0.0
        %3513 = vmatprep.subr.mxu0 0.0
        %3514 = vmatpush1.msra.mxu0 0.0
        %3515 = vmatprep.subr.mxu0 0.0
        %3516 = vmatpush1.msra.mxu0 0.0
        %3517 = vmatprep.subr.mxu0 0.0
        %3518 = vmatpush1.msra.mxu0 0.0
        %3519 = vmatprep.subr.mxu0 0.0
        %3520 = vmatpush1.msra.mxu0 0.0
        %3521 = vmatprep.subr.mxu0 0.0
        %3522 = vmatpush1.msra.mxu0 0.0
        %3523 = vmatprep.subr.mxu0 0.0
        %3524 = vmatpush1.msra.mxu0 0.0
        %3525 = vmatprep.subr.mxu0 0.0
        %3526 = vmatpush1.msra.mxu0 0.0
        %3527 = vmatprep.subr.mxu0 0.0
        %3528 = vmatpush1.msra.mxu0 0.0
        %3529 = vmatprep.mubr.f32.mxu0 0.0
        %3530 = vmatmul.mubr.f32.gmra.mrb[0].mxu0 %v3460
        %v3531 = vpop.f32.mrb[0].mxu0
        %v3532 = vadd.f32 %v3456, %v3531
        %v3533 = vpop.f32.mrb[0].mxu0
        %3534 = vmatprep.mubr.f32.mxu0 0.0
        %3535 = vmatmul.mubr.f32.gmra.mrb[0].mxu0 %v3463
        %v3536 = vpop.f32.mrb[0].mxu0
        %v3537 = vadd.f32 %v3456, %v3536
        %v3538 = vpop.f32.mrb[0].mxu0
        %3539 = vdwg.mxu0
        %v3540 = vadd.f32 %v3287, %v3532
        %v3541 = vadd.f32 %v3288, %v3537
        %3542 = vst.msk [vmem:[%s542] sm:$0xff] %vm554, %v3540
        %3543 = vst.msk [vmem:[%s542 + $0x8] sm:$0xff] %vm554, %v3541
        %s3544 = sand.u32 %s401, 1
        %s3545 = scalar_lea.sflag [#allocation3], %s3544
        %s3546 = sand.u32 %s401, 1
        %s3547 = smul.addr %s3546, 16
        %s3548 = scalar_lea.vmem [#allocation2], %s3547
        // Predicated region
        $region89: #{tpu_custom_call.1} parent=87 // pred_check
          %p3549 = pneg %p411
        $region90: #{tpu_custom_call.1} parent=87 // pred_check_branch
          %3551 = sbr.rel (%p3549) target = $region92
        $region91: #{tpu_custom_call.1} parent=87 // pred_region
          %s3552 = smul.u32 2, %s31
          %s3554 = ssub.s32 256, 256
          %3555 = vsyncadd %s3545, %s3554
          %s3556 = smul.addr %s3552, 128
          %s3557 = scalar_lea.hbm %s17, %s3556
          %s3558 = sshll.u32 %s3548, 4
          %s3559 = int_to_ptr.vmem [resolvable:$true] %s3558
          %3564 = dma.vmem_to_hbm [thread:$0]  %s3559, 256, %s3557, %s3545, 128, 128, 8
        $region92: #{tpu_custom_call.1} parent=87 // pred_fallthru
          _
      $region88: #{tpu_custom_call.1} parent=5 // pred_fallthru
        _
      %p3565 = scmp.le.s32.totalorder 2, %s26
      // Predicated region
      $region93: #{tpu_custom_call.1} parent=5 // pred_check
        %p3566 = pneg %p3565
      $region94: #{tpu_custom_call.1} parent=5 // pred_check_branch
        %3568 = sbr.rel (%p3566) target = $region96
      $region95: #{tpu_custom_call.1} parent=5 // pred_region
        %s3569 = ssub.s32 %s26, 2
        // Predicated region
        $region97: #{tpu_custom_call.1} parent=95 // pred_check
          %p3570 = pneg %p417
        $region98: #{tpu_custom_call.1} parent=95 // pred_check_branch
          %3572 = sbr.rel (%p3570) target = $region100
        $region99: #{tpu_custom_call.1} parent=95 // pred_region
          %s3573 = sand.u32 %s402, 1
          %s3574 = scalar_lea.sflag [#allocation3], %s3573
          %s3575 = sand.u32 %s402, 1
          %s3576 = smul.addr %s3575, 16
          %s3577 = scalar_lea.vmem [#allocation2], %s3576
          %3578 = dma.done %s3574, 256
        $region100: #{tpu_custom_call.1} parent=95 // pred_fallthru
          _
      $region96: #{tpu_custom_call.1} parent=5 // pred_fallthru
        _
    $region6: #{tpu_custom_call.1} parent=1 // loop_footer
      %s30 = sadd.s32 1, %s26
    $region7: #{tpu_custom_call.1} parent=1 // loop_footer_branch
      %25 = sbr.rel target = $region3
    $region8: #{tpu_custom_call.1} parent=1 // loop_exit
      _
    %3579 = vsyncpa [#allocation3], 1
    %s3580 = scalar_lea.sflag [#allocation3], 1
    %3581 = vsyncpa %s3580, 1

</llo_original>
